<compile_context>
chip_gen: v7x
topology: tpu7x:2x2x1
jax: 0.10.0
libtpu: 0.0.40
codegen_flags: <defaults>
</compile_context>

<pallas_src>
import math

import numpy as np

import jax
import jax.numpy as jnp
from jax.experimental import pallas as pl
from jax.experimental.pallas import tpu as pltpu


# ---------------------------------------------------------------------------
# Host-precomputed, parameter-independent constants (tap validity masks for the
# "shift a flat (H*W) row" im2col trick, and the 2x2-pool even-row/col selectors).
# ---------------------------------------------------------------------------
def _conv_tap_masks(h, w):
    """(9, h*w) 0/1 masks: tap (dh,dw) of a 3x3 / pad-1 conv is valid at (y,x)."""
    m = np.zeros((9, h * w), np.float32)
    hh, ww = np.meshgrid(np.arange(h), np.arange(w), indexing="ij")
    for dh in range(3):
        for dw in range(3):
            ok = ((hh + dh - 1 >= 0) & (hh + dh - 1 < h) &
                  (ww + dw - 1 >= 0) & (ww + dw - 1 < w))
            m[dh * 3 + dw] = ok.astype(np.float32).reshape(-1)
    return m


def _pool_select(h, w):
    """(h*w, (h//2)*(w//2)) 0/1 matrix selecting the even-row/even-col positions."""
    s = np.zeros((h * w, (h // 2) * (w // 2)), np.float32)
    for ph in range(h // 2):
        for pw in range(w // 2):
            s[2 * ph * w + 2 * pw, ph * (w // 2) + pw] = 1.0
    return s


_MASK1 = _conv_tap_masks(28, 28)      # (9, 784)
_MASK2 = _conv_tap_masks(14, 14)      # (9, 196)
_POOLSEL1 = _pool_select(28, 28)      # (784, 196)
_POOLSEL2 = _pool_select(14, 14)      # (196, 49)


# ---------------------------------------------------------------------------
# In-kernel helpers (all values are lane-dense (rows, H*W) slabs).
# ---------------------------------------------------------------------------
def _build_patches(src_ref, base, h, w, mask_ref, dst_ref, rows):
    """im2col: 9 lane-shifted, mask-zeroed tap slabs -> (9*rows, h*w) patch scratch."""
    hw = h * w
    for dh in range(3):
        for dw in range(3):
            k = dh * 3 + dw
            s = (dh - 1) * w + (dw - 1)
            dst_ref[k * rows:(k + 1) * rows, :] = (
                src_ref[:, base + s: base + s + hw] * mask_ref[k:k + 1, :])


def _bn_relu(y, gavg_ref, gamma_ref, beta_ref):
    """Training-mode BN (stable two-pass batch stats over (N, H*W)) + ReLU.

    y:        (C*N, H*W) conv output (rows are channel-major, then sample).
    gavg_ref: (C*N, C*N) = kron(I_C, 1/(N*H*W)); one matmul + lane-reduce gives the
              per-channel mean broadcast to every row of the channel's group.
    """
    f32 = jnp.float32
    mean = jnp.sum(jnp.dot(gavg_ref[...], y, preferred_element_type=f32),
                   axis=1, keepdims=True)                      # (C*N, 1)
    cen = y - mean
    var = jnp.sum(jnp.dot(gavg_ref[...], cen * cen, preferred_element_type=f32),
                  axis=1, keepdims=True)                       # biased variance
    scale = jax.lax.rsqrt(var + 1e-5) * gamma_ref[...]
    return jnp.maximum(cen * scale + beta_ref[...], 0.0)


# ---------------------------------------------------------------------------
# The fused kernel (single invocation, grid=(1,)).
# ---------------------------------------------------------------------------
def _fused_kernel(x_ref, a1_ref, b1_ref, g1_ref, be1_ref, gavg1_ref,
                  a2_ref, b2_ref, g2_ref, be2_ref, gavg2_ref,
                  fw1_ref, fb1_ref, fw2_ref, fb2_ref,
                  m1_ref, m2_ref, s1_ref, s2_ref,
                  out_ref,
                  xpad_ref, p1cat_ref, y1pad_ref, p1pad_ref,
                  p2cat_ref, y2pad_ref, pool2_ref, fcin_ref):
    n = x_ref.shape[0]
    f32 = jnp.float32

    # ---- stage 0: flat input into a zero-BORDERED scratch (only borders cleared) ----
    xpad_ref[:, 0:32] = jnp.zeros((n, 32), f32)
    xpad_ref[:, 32:816] = x_ref[...]
    xpad_ref[:, 816:848] = jnp.zeros((n, 32), f32)

    # ============ block 1: Conv(1->8) + BN + ReLU + MaxPool(2,2) ============
    _build_patches(xpad_ref, 32, 28, 28, m1_ref, p1cat_ref, n)          # (9n, 784)
    y1 = jnp.dot(a1_ref[...], p1cat_ref[...],
                 preferred_element_type=f32) + b1_ref[...]               # (8n, 784)
    r1 = _bn_relu(y1, gavg1_ref, g1_ref, be1_ref)

    # 2x2/2 max pool: 4-way lane-shifted max, then ONE batched even-select matmul.
    y1pad_ref[:, 0:784] = r1
    y1pad_ref[:, 784:816] = jnp.zeros((8 * n, 32), f32)
    mx1 = jnp.maximum(jnp.maximum(y1pad_ref[:, 0:784], y1pad_ref[:, 1:785]),
                      jnp.maximum(y1pad_ref[:, 28:812], y1pad_ref[:, 29:813]))
    pool1 = jnp.dot(mx1, s1_ref[...], preferred_element_type=f32)        # (8n, 196)

    p1pad_ref[:, 0:16] = jnp.zeros((8 * n, 16), f32)
    p1pad_ref[:, 16:212] = pool1
    p1pad_ref[:, 212:228] = jnp.zeros((8 * n, 16), f32)

    # ============ block 2: Conv(8->16) + BN + ReLU + MaxPool(2,2) ============
    _build_patches(p1pad_ref, 16, 14, 14, m2_ref, p2cat_ref, 8 * n)      # (72n, 196)
    y2 = jnp.dot(a2_ref[...], p2cat_ref[...],
                 preferred_element_type=f32) + b2_ref[...]               # (16n, 196)
    r2 = _bn_relu(y2, gavg2_ref, g2_ref, be2_ref)

    y2pad_ref[:, 0:196] = r2
    y2pad_ref[:, 196:212] = jnp.zeros((16 * n, 16), f32)
    mx2 = jnp.maximum(jnp.maximum(y2pad_ref[:, 0:196], y2pad_ref[:, 1:197]),
                      jnp.maximum(y2pad_ref[:, 14:210], y2pad_ref[:, 15:211]))
    pool2_ref[...] = jnp.dot(mx2, s2_ref[...], preferred_element_type=f32)  # (16n, 49)

    # ============ classifier: lane-contiguous PyTorch (C,H,W) flatten + batched fc ====
    for c in range(16):
        fcin_ref[:, c * 49:(c + 1) * 49] = pool2_ref[c * n:(c + 1) * n, :]
    h1 = jnp.maximum(jnp.dot(fcin_ref[...], fw1_ref[...],
                             preferred_element_type=f32) + fb1_ref[...], 0.0)
    out_ref[...] = jnp.dot(h1, fw2_ref[...],
                           preferred_element_type=f32) + fb2_ref[...]


# ---------------------------------------------------------------------------
# Wrapper: host-side weight re-layout (free) + one pallas_call.
# ---------------------------------------------------------------------------
def _forward(x_nchw, params):
    n = x_nchw.shape[0]
    nc = params["fc2_w"].shape[1]
    f32 = jnp.float32
    x2d = x_nchw.astype(f32).reshape(n, 28 * 28)

    # Conv weights as (Cout, 9*Cin) and kron'd with I_N so the whole batch is one
    # MXU matmul against the (9*Cin*N, H*W) im2col patch matrix.
    eye_n = jnp.eye(n, dtype=f32)
    w1m = params["conv1_w"].reshape(9, 8).T.astype(f32)        # (8, 9)    [co, k]
    w2m = params["conv2_w"].reshape(72, 16).T.astype(f32)      # (16, 72)  [co, k*8+ci]
    a1 = jnp.kron(w1m, eye_n)                                  # (8n, 9n)
    a2 = jnp.kron(w2m, eye_n)                                  # (16n, 72n)

    def col(v):                                                # per-row (C*N, 1) params
        return jnp.repeat(v.astype(f32), n).reshape(-1, 1)

    gavg1 = jnp.kron(jnp.eye(8, dtype=f32), jnp.full((n, n), 1.0 / (n * 784), f32))
    gavg2 = jnp.kron(jnp.eye(16, dtype=f32), jnp.full((n, n), 1.0 / (n * 196), f32))

    operands = [
        x2d,
        a1, col(params["conv1_b"]), col(params["bn1_gamma"]), col(params["bn1_beta"]), gavg1,
        a2, col(params["conv2_b"]), col(params["bn2_gamma"]), col(params["bn2_beta"]), gavg2,
        params["fc1_w"].astype(f32), params["fc1_b"].astype(f32),
        params["fc2_w"].astype(f32), params["fc2_b"].astype(f32),
        jnp.asarray(_MASK1), jnp.asarray(_MASK2),
        jnp.asarray(_POOLSEL1), jnp.asarray(_POOLSEL2),
    ]
    in_specs = [pl.BlockSpec(op.shape, lambda i: (0, 0)) for op in operands]

    return pl.pallas_call(
        _fused_kernel,
        out_shape=jax.ShapeDtypeStruct((n, nc), f32),
        grid=(1,),
        in_specs=in_specs,
        out_specs=pl.BlockSpec((n, nc), lambda i: (0, 0)),
        scratch_shapes=[
            pltpu.VMEM((n, 848), f32),        # zero-bordered flat input (conv-1 taps)
            pltpu.VMEM((9 * n, 784), f32),    # conv-1 im2col patch matrix
            pltpu.VMEM((8 * n, 816), f32),    # relu-1 + zero tail       (pool-1 shifts)
            pltpu.VMEM((8 * n, 228), f32),    # zero-bordered pool-1 out (conv-2 taps)
            pltpu.VMEM((72 * n, 196), f32),   # conv-2 im2col patch matrix
            pltpu.VMEM((16 * n, 212), f32),   # relu-2 + zero tail       (pool-2 shifts)
            pltpu.VMEM((16 * n, 49), f32),    # pooled block-2 output
            pltpu.VMEM((n, 784), f32),        # lane-contiguous fc input (PyTorch order)
        ],
        compiler_params=pltpu.CompilerParams(
            dimension_semantics=("arbitrary",)),
    )(*operands)


simple_cnn_forward = jax.jit(_forward)


# ---------------------------------------------------------------------------
# Parameter init (deterministic, mirrors SimpleCNN._initialize_weights)
# ---------------------------------------------------------------------------
def init_params(key, num_classes=10):
    k = jax.random.split(key, 4)
    std1 = math.sqrt(2.0 / (3 * 3 * 8))      # conv: normal(0, sqrt(2 / (k*k*out_ch)))
    std2 = math.sqrt(2.0 / (3 * 3 * 16))
    return dict(
        conv1_w=jax.random.normal(k[0], (3, 3, 8), jnp.float32) * std1,       # [dh, dw, co]
        conv1_b=jnp.zeros((8,), jnp.float32),
        bn1_gamma=jnp.ones((8,), jnp.float32),
        bn1_beta=jnp.zeros((8,), jnp.float32),
        conv2_w=jax.random.normal(k[1], (3, 3, 8, 16), jnp.float32) * std2,   # [dh, dw, ci, co]
        conv2_b=jnp.zeros((16,), jnp.float32),
        bn2_gamma=jnp.ones((16,), jnp.float32),
        bn2_beta=jnp.zeros((16,), jnp.float32),
        fc1_w=jax.random.normal(k[2], (7 * 7 * 16, 64), jnp.float32) * 0.01,  # Linear: normal(0, 0.01)
        fc1_b=jnp.zeros((1, 64), jnp.float32),
        fc2_w=jax.random.normal(k[3], (64, num_classes), jnp.float32) * 0.01,
        fc2_b=jnp.zeros((1, num_classes), jnp.float32),
    )


# ---------------------------------------------------------------------------
# Pure-JAX reference of the same forward (for a correctness check in __main__)
# ---------------------------------------------------------------------------
def _reference_forward(x_nchw, params, eps=1e-5):
    def conv_bn_relu_pool(x, w_oihw, b, gamma, beta):
        y = jax.lax.conv_general_dilated(
            x, w_oihw, window_strides=(1, 1), padding=((1, 1), (1, 1)),
            dimension_numbers=("NCHW", "OIHW", "NCHW"))
        y = y + b.reshape(1, -1, 1, 1)
        mu = jnp.mean(y, axis=(0, 2, 3), keepdims=True)
        var = jnp.var(y, axis=(0, 2, 3), keepdims=True)
        y = (y - mu) * jax.lax.rsqrt(var + eps)
        y = y * gamma.reshape(1, -1, 1, 1) + beta.reshape(1, -1, 1, 1)
        y = jnp.maximum(y, 0.0)
        n, c, h, w = y.shape
        return y.reshape(n, c, h // 2, 2, w // 2, 2).max(axis=(3, 5))

    w1 = jnp.transpose(params["conv1_w"], (2, 0, 1))[:, None, :, :]           # (8, 1, 3, 3)
    w2 = jnp.transpose(params["conv2_w"], (3, 2, 0, 1))                       # (16, 8, 3, 3)
    y = conv_bn_relu_pool(x_nchw.astype(jnp.float32), w1, params["conv1_b"],
                          params["bn1_gamma"], params["bn1_beta"])
    y = conv_bn_relu_pool(y, w2, params["conv2_b"],
                          params["bn2_gamma"], params["bn2_beta"])
    flat = y.reshape(y.shape[0], -1)                                          # (N, 784), (C,H,W) order
    h = jnp.maximum(flat @ params["fc1_w"] + params["fc1_b"], 0.0)
    return h @ params["fc2_w"] + params["fc2_b"]


if __name__ == "__main__":
    key = jax.random.PRNGKey(0)
    pkey, xkey = jax.random.split(key)
    params = init_params(pkey, num_classes=10)
    # 28x28 single-channel input is implied by Linear(7*7*16, 64) after two /2 pools.
    x = jax.random.normal(xkey, (2, 1, 28, 28), jnp.float32)

    out = jax.block_until_ready(simple_cnn_forward(x, params))
    assert out.shape == (2, 10)
    assert bool(jnp.all(jnp.isfinite(out)))

    ref = jax.block_until_ready(jax.jit(_reference_forward)(x, params))
    np.testing.assert_allclose(np.asarray(out), np.asarray(ref), rtol=2e-2, atol=1e-3)

    print("KERNEL_OK")
</pallas_src>

<mosaic_0001>
module attributes {stable_mosaic.version = 11 : i64} {
  func.func @_fused_kernel(%arg0: i32, %arg1: memref<2x784xf32, #tpu.memory_space<vmem>>, %arg2: memref<16x18xf32, #tpu.memory_space<vmem>>, %arg3: memref<16x1xf32, #tpu.memory_space<vmem>>, %arg4: memref<16x1xf32, #tpu.memory_space<vmem>>, %arg5: memref<16x1xf32, #tpu.memory_space<vmem>>, %arg6: memref<16x16xf32, #tpu.memory_space<vmem>>, %arg7: memref<32x144xf32, #tpu.memory_space<vmem>>, %arg8: memref<32x1xf32, #tpu.memory_space<vmem>>, %arg9: memref<32x1xf32, #tpu.memory_space<vmem>>, %arg10: memref<32x1xf32, #tpu.memory_space<vmem>>, %arg11: memref<32x32xf32, #tpu.memory_space<vmem>>, %arg12: memref<784x64xf32, #tpu.memory_space<vmem>>, %arg13: memref<1x64xf32, #tpu.memory_space<vmem>>, %arg14: memref<64x10xf32, #tpu.memory_space<vmem>>, %arg15: memref<1x10xf32, #tpu.memory_space<vmem>>, %arg16: memref<9x784xf32, #tpu.memory_space<vmem>>, %arg17: memref<9x196xf32, #tpu.memory_space<vmem>>, %arg18: memref<784x196xf32, #tpu.memory_space<vmem>>, %arg19: memref<196x49xf32, #tpu.memory_space<vmem>>, %arg20: memref<2x10xf32, #tpu.memory_space<vmem>>, %arg21: memref<2x848xf32, #tpu.memory_space<vmem>>, %arg22: memref<18x784xf32, #tpu.memory_space<vmem>>, %arg23: memref<16x816xf32, #tpu.memory_space<vmem>>, %arg24: memref<16x228xf32, #tpu.memory_space<vmem>>, %arg25: memref<144x196xf32, #tpu.memory_space<vmem>>, %arg26: memref<32x212xf32, #tpu.memory_space<vmem>>, %arg27: memref<32x49xf32, #tpu.memory_space<vmem>>, %arg28: memref<2x784xf32, #tpu.memory_space<vmem>>) attributes {dimension_semantics = [#tpu.dimension_semantics<arbitrary>], iteration_bounds = array<i64: 1>, scalar_prefetch = 0 : i64, scratch_operands = 8 : i64, tpu.core_type = #tpu.core_type<tc>, window_params = [{pipeline_mode = #tpu.pipeline_mode<synchronous>, transform_indices = @transform_0, window_bounds = array<i64: 2, 784>}, {pipeline_mode = #tpu.pipeline_mode<synchronous>, transform_indices = @transform_1, window_bounds = array<i64: 16, 18>}, {pipeline_mode = #tpu.pipeline_mode<synchronous>, transform_indices = @transform_2, window_bounds = array<i64: 16, 1>}, {pipeline_mode = #tpu.pipeline_mode<synchronous>, transform_indices = @transform_3, window_bounds = array<i64: 16, 1>}, {pipeline_mode = #tpu.pipeline_mode<synchronous>, transform_indices = @transform_4, window_bounds = array<i64: 16, 1>}, {pipeline_mode = #tpu.pipeline_mode<synchronous>, transform_indices = @transform_5, window_bounds = array<i64: 16, 16>}, {pipeline_mode = #tpu.pipeline_mode<synchronous>, transform_indices = @transform_6, window_bounds = array<i64: 32, 144>}, {pipeline_mode = #tpu.pipeline_mode<synchronous>, transform_indices = @transform_7, window_bounds = array<i64: 32, 1>}, {pipeline_mode = #tpu.pipeline_mode<synchronous>, transform_indices = @transform_8, window_bounds = array<i64: 32, 1>}, {pipeline_mode = #tpu.pipeline_mode<synchronous>, transform_indices = @transform_9, window_bounds = array<i64: 32, 1>}, {pipeline_mode = #tpu.pipeline_mode<synchronous>, transform_indices = @transform_10, window_bounds = array<i64: 32, 32>}, {pipeline_mode = #tpu.pipeline_mode<synchronous>, transform_indices = @transform_11, window_bounds = array<i64: 784, 64>}, {pipeline_mode = #tpu.pipeline_mode<synchronous>, transform_indices = @transform_12, window_bounds = array<i64: 1, 64>}, {pipeline_mode = #tpu.pipeline_mode<synchronous>, transform_indices = @transform_13, window_bounds = array<i64: 64, 10>}, {pipeline_mode = #tpu.pipeline_mode<synchronous>, transform_indices = @transform_14, window_bounds = array<i64: 1, 10>}, {pipeline_mode = #tpu.pipeline_mode<synchronous>, transform_indices = @transform_15, window_bounds = array<i64: 9, 784>}, {pipeline_mode = #tpu.pipeline_mode<synchronous>, transform_indices = @transform_16, window_bounds = array<i64: 9, 196>}, {pipeline_mode = #tpu.pipeline_mode<synchronous>, transform_indices = @transform_17, window_bounds = array<i64: 784, 196>}, {pipeline_mode = #tpu.pipeline_mode<synchronous>, transform_indices = @transform_18, window_bounds = array<i64: 196, 49>}, {pipeline_mode = #tpu.pipeline_mode<synchronous>, transform_indices = @transform_19, window_bounds = array<i64: 2, 10>}]} {
    %cst = arith.constant 0.000000e+00 : f32
    %0 = vector.broadcast %cst : f32 to vector<2x32xf32>
    %c0 = arith.constant 0 : index
    %c0_0 = arith.constant 0 : index
    %1 = vector.load %arg21[%c0, %c0_0] : memref<2x848xf32, #tpu.memory_space<vmem>>, vector<2x32xf32>
    tpu.vector_store %arg21[%c0, %c0_0], %0 {strides = array<i32>} : memref<2x848xf32, #tpu.memory_space<vmem>>, vector<2x32xf32>,
    %c0_1 = arith.constant 0 : index
    %c0_2 = arith.constant 0 : index
    %2 = vector.load %arg1[%c0_1, %c0_2] : memref<2x784xf32, #tpu.memory_space<vmem>>, vector<2x784xf32>
    %c0_3 = arith.constant 0 : index
    %c32 = arith.constant 32 : index
    %3 = vector.load %arg21[%c0_3, %c32] : memref<2x848xf32, #tpu.memory_space<vmem>>, vector<2x784xf32>
    tpu.vector_store %arg21[%c0_3, %c32], %2 {strides = array<i32>} : memref<2x848xf32, #tpu.memory_space<vmem>>, vector<2x784xf32>,
    %cst_4 = arith.constant 0.000000e+00 : f32
    %4 = vector.broadcast %cst_4 : f32 to vector<2x32xf32>
    %c0_5 = arith.constant 0 : index
    %c816 = arith.constant 816 : index
    %5 = vector.load %arg21[%c0_5, %c816] : memref<2x848xf32, #tpu.memory_space<vmem>>, vector<2x32xf32>
    tpu.vector_store %arg21[%c0_5, %c816], %4 {strides = array<i32>} : memref<2x848xf32, #tpu.memory_space<vmem>>, vector<2x32xf32>,
    %c0_6 = arith.constant 0 : index
    %c3 = arith.constant 3 : index
    %6 = vector.load %arg21[%c0_6, %c3] : memref<2x848xf32, #tpu.memory_space<vmem>>, vector<2x784xf32>
    %c0_7 = arith.constant 0 : index
    %c0_8 = arith.constant 0 : index
    %7 = vector.load %arg16[%c0_7, %c0_8] : memref<9x784xf32, #tpu.memory_space<vmem>>, vector<1x784xf32>
    %8 = vector.broadcast %7 : vector<1x784xf32> to vector<2x784xf32>
    %9 = arith.mulf %6, %8 : vector<2x784xf32>
    %c0_9 = arith.constant 0 : index
    %c0_10 = arith.constant 0 : index
    %10 = vector.load %arg22[%c0_9, %c0_10] : memref<18x784xf32, #tpu.memory_space<vmem>>, vector<2x784xf32>
    tpu.vector_store %arg22[%c0_9, %c0_10], %9 {strides = array<i32>} : memref<18x784xf32, #tpu.memory_space<vmem>>, vector<2x784xf32>,
    %c0_11 = arith.constant 0 : index
    %c4 = arith.constant 4 : index
    %11 = vector.load %arg21[%c0_11, %c4] : memref<2x848xf32, #tpu.memory_space<vmem>>, vector<2x784xf32>
    %c1 = arith.constant 1 : index
    %c0_12 = arith.constant 0 : index
    %12 = vector.load %arg16[%c1, %c0_12] : memref<9x784xf32, #tpu.memory_space<vmem>>, vector<1x784xf32>
    %13 = vector.broadcast %12 : vector<1x784xf32> to vector<2x784xf32>
    %14 = arith.mulf %11, %13 : vector<2x784xf32>
    %c2 = arith.constant 2 : index
    %c0_13 = arith.constant 0 : index
    %15 = vector.load %arg22[%c2, %c0_13] : memref<18x784xf32, #tpu.memory_space<vmem>>, vector<2x784xf32>
    tpu.vector_store %arg22[%c2, %c0_13], %14 {strides = array<i32>} : memref<18x784xf32, #tpu.memory_space<vmem>>, vector<2x784xf32>,
    %c0_14 = arith.constant 0 : index
    %c5 = arith.constant 5 : index
    %16 = vector.load %arg21[%c0_14, %c5] : memref<2x848xf32, #tpu.memory_space<vmem>>, vector<2x784xf32>
    %c2_15 = arith.constant 2 : index
    %c0_16 = arith.constant 0 : index
    %17 = vector.load %arg16[%c2_15, %c0_16] : memref<9x784xf32, #tpu.memory_space<vmem>>, vector<1x784xf32>
    %18 = vector.broadcast %17 : vector<1x784xf32> to vector<2x784xf32>
    %19 = arith.mulf %16, %18 : vector<2x784xf32>
    %c4_17 = arith.constant 4 : index
    %c0_18 = arith.constant 0 : index
    %20 = vector.load %arg22[%c4_17, %c0_18] : memref<18x784xf32, #tpu.memory_space<vmem>>, vector<2x784xf32>
    tpu.vector_store %arg22[%c4_17, %c0_18], %19 {strides = array<i32>} : memref<18x784xf32, #tpu.memory_space<vmem>>, vector<2x784xf32>,
    %c0_19 = arith.constant 0 : index
    %c31 = arith.constant 31 : index
    %21 = vector.load %arg21[%c0_19, %c31] : memref<2x848xf32, #tpu.memory_space<vmem>>, vector<2x784xf32>
    %c3_20 = arith.constant 3 : index
    %c0_21 = arith.constant 0 : index
    %22 = vector.load %arg16[%c3_20, %c0_21] : memref<9x784xf32, #tpu.memory_space<vmem>>, vector<1x784xf32>
    %23 = vector.broadcast %22 : vector<1x784xf32> to vector<2x784xf32>
    %24 = arith.mulf %21, %23 : vector<2x784xf32>
    %c6 = arith.constant 6 : index
    %c0_22 = arith.constant 0 : index
    %25 = vector.load %arg22[%c6, %c0_22] : memref<18x784xf32, #tpu.memory_space<vmem>>, vector<2x784xf32>
    tpu.vector_store %arg22[%c6, %c0_22], %24 {strides = array<i32>} : memref<18x784xf32, #tpu.memory_space<vmem>>, vector<2x784xf32>,
    %c0_23 = arith.constant 0 : index
    %c32_24 = arith.constant 32 : index
    %26 = vector.load %arg21[%c0_23, %c32_24] : memref<2x848xf32, #tpu.memory_space<vmem>>, vector<2x784xf32>
    %c4_25 = arith.constant 4 : index
    %c0_26 = arith.constant 0 : index
    %27 = vector.load %arg16[%c4_25, %c0_26] : memref<9x784xf32, #tpu.memory_space<vmem>>, vector<1x784xf32>
    %28 = vector.broadcast %27 : vector<1x784xf32> to vector<2x784xf32>
    %29 = arith.mulf %26, %28 : vector<2x784xf32>
    %c8 = arith.constant 8 : index
    %c0_27 = arith.constant 0 : index
    %30 = vector.load %arg22[%c8, %c0_27] : memref<18x784xf32, #tpu.memory_space<vmem>>, vector<2x784xf32>
    tpu.vector_store %arg22[%c8, %c0_27], %29 {strides = array<i32>} : memref<18x784xf32, #tpu.memory_space<vmem>>, vector<2x784xf32>,
    %c0_28 = arith.constant 0 : index
    %c33 = arith.constant 33 : index
    %31 = vector.load %arg21[%c0_28, %c33] : memref<2x848xf32, #tpu.memory_space<vmem>>, vector<2x784xf32>
    %c5_29 = arith.constant 5 : index
    %c0_30 = arith.constant 0 : index
    %32 = vector.load %arg16[%c5_29, %c0_30] : memref<9x784xf32, #tpu.memory_space<vmem>>, vector<1x784xf32>
    %33 = vector.broadcast %32 : vector<1x784xf32> to vector<2x784xf32>
    %34 = arith.mulf %31, %33 : vector<2x784xf32>
    %c10 = arith.constant 10 : index
    %c0_31 = arith.constant 0 : index
    %35 = vector.load %arg22[%c10, %c0_31] : memref<18x784xf32, #tpu.memory_space<vmem>>, vector<2x784xf32>
    tpu.vector_store %arg22[%c10, %c0_31], %34 {strides = array<i32>} : memref<18x784xf32, #tpu.memory_space<vmem>>, vector<2x784xf32>,
    %c0_32 = arith.constant 0 : index
    %c59 = arith.constant 59 : index
    %36 = vector.load %arg21[%c0_32, %c59] : memref<2x848xf32, #tpu.memory_space<vmem>>, vector<2x784xf32>
    %c6_33 = arith.constant 6 : index
    %c0_34 = arith.constant 0 : index
    %37 = vector.load %arg16[%c6_33, %c0_34] : memref<9x784xf32, #tpu.memory_space<vmem>>, vector<1x784xf32>
    %38 = vector.broadcast %37 : vector<1x784xf32> to vector<2x784xf32>
    %39 = arith.mulf %36, %38 : vector<2x784xf32>
    %c12 = arith.constant 12 : index
    %c0_35 = arith.constant 0 : index
    %40 = vector.load %arg22[%c12, %c0_35] : memref<18x784xf32, #tpu.memory_space<vmem>>, vector<2x784xf32>
    tpu.vector_store %arg22[%c12, %c0_35], %39 {strides = array<i32>} : memref<18x784xf32, #tpu.memory_space<vmem>>, vector<2x784xf32>,
    %c0_36 = arith.constant 0 : index
    %c60 = arith.constant 60 : index
    %41 = vector.load %arg21[%c0_36, %c60] : memref<2x848xf32, #tpu.memory_space<vmem>>, vector<2x784xf32>
    %c7 = arith.constant 7 : index
    %c0_37 = arith.constant 0 : index
    %42 = vector.load %arg16[%c7, %c0_37] : memref<9x784xf32, #tpu.memory_space<vmem>>, vector<1x784xf32>
    %43 = vector.broadcast %42 : vector<1x784xf32> to vector<2x784xf32>
    %44 = arith.mulf %41, %43 : vector<2x784xf32>
    %c14 = arith.constant 14 : index
    %c0_38 = arith.constant 0 : index
    %45 = vector.load %arg22[%c14, %c0_38] : memref<18x784xf32, #tpu.memory_space<vmem>>, vector<2x784xf32>
    tpu.vector_store %arg22[%c14, %c0_38], %44 {strides = array<i32>} : memref<18x784xf32, #tpu.memory_space<vmem>>, vector<2x784xf32>,
    %c0_39 = arith.constant 0 : index
    %c61 = arith.constant 61 : index
    %46 = vector.load %arg21[%c0_39, %c61] : memref<2x848xf32, #tpu.memory_space<vmem>>, vector<2x784xf32>
    %c8_40 = arith.constant 8 : index
    %c0_41 = arith.constant 0 : index
    %47 = vector.load %arg16[%c8_40, %c0_41] : memref<9x784xf32, #tpu.memory_space<vmem>>, vector<1x784xf32>
    %48 = vector.broadcast %47 : vector<1x784xf32> to vector<2x784xf32>
    %49 = arith.mulf %46, %48 : vector<2x784xf32>
    %c16 = arith.constant 16 : index
    %c0_42 = arith.constant 0 : index
    %50 = vector.load %arg22[%c16, %c0_42] : memref<18x784xf32, #tpu.memory_space<vmem>>, vector<2x784xf32>
    tpu.vector_store %arg22[%c16, %c0_42], %49 {strides = array<i32>} : memref<18x784xf32, #tpu.memory_space<vmem>>, vector<2x784xf32>,
    %c0_43 = arith.constant 0 : index
    %c0_44 = arith.constant 0 : index
    %51 = vector.load %arg2[%c0_43, %c0_44] : memref<16x18xf32, #tpu.memory_space<vmem>>, vector<16x18xf32>
    %c0_45 = arith.constant 0 : index
    %c0_46 = arith.constant 0 : index
    %52 = vector.load %arg22[%c0_45, %c0_46] : memref<18x784xf32, #tpu.memory_space<vmem>>, vector<18x784xf32>
    %cst_47 = arith.constant dense<0.000000e+00> : vector<16x784xf32>
    %53 = tpu.matmul %51, %52, %cst_47 {dimension_numbers = #tpu.dot_dimension_numbers<[1], [0], [0], [1], [0, 0, 1, 1], [], []>} : vector<16x18xf32>, vector<18x784xf32>, vector<16x784xf32> -> vector<16x784xf32>
    %c0_48 = arith.constant 0 : index
    %c0_49 = arith.constant 0 : index
    %54 = vector.load %arg3[%c0_48, %c0_49] : memref<16x1xf32, #tpu.memory_space<vmem>>, vector<16x1xf32>
    %55 = vector.broadcast %54 : vector<16x1xf32> to vector<16x784xf32>
    %56 = arith.addf %53, %55 : vector<16x784xf32>
    %c0_50 = arith.constant 0 : index
    %c0_51 = arith.constant 0 : index
    %57 = vector.load %arg6[%c0_50, %c0_51] : memref<16x16xf32, #tpu.memory_space<vmem>>, vector<16x16xf32>
    %cst_52 = arith.constant dense<0.000000e+00> : vector<16x784xf32>
    %58 = tpu.matmul %57, %56, %cst_52 {dimension_numbers = #tpu.dot_dimension_numbers<[1], [0], [0], [1], [0, 0, 1, 1], [], []>} : vector<16x16xf32>, vector<16x784xf32>, vector<16x784xf32> -> vector<16x784xf32>
    %cst_53 = arith.constant dense<0.000000e+00> : vector<16xf32>
    %59 = vector.multi_reduction <add>, %58, %cst_53 [1] : vector<16x784xf32> to vector<16xf32>
    %60 = vector.shape_cast %59 : vector<16xf32> to vector<16x1xf32>
    %61 = vector.broadcast %60 : vector<16x1xf32> to vector<16x784xf32>
    %62 = arith.subf %56, %61 : vector<16x784xf32>
    %c0_54 = arith.constant 0 : index
    %c0_55 = arith.constant 0 : index
    %63 = vector.load %arg6[%c0_54, %c0_55] : memref<16x16xf32, #tpu.memory_space<vmem>>, vector<16x16xf32>
    %64 = arith.mulf %62, %62 : vector<16x784xf32>
    %cst_56 = arith.constant dense<0.000000e+00> : vector<16x784xf32>
    %65 = tpu.matmul %63, %64, %cst_56 {dimension_numbers = #tpu.dot_dimension_numbers<[1], [0], [0], [1], [0, 0, 1, 1], [], []>} : vector<16x16xf32>, vector<16x784xf32>, vector<16x784xf32> -> vector<16x784xf32>
    %cst_57 = arith.constant dense<0.000000e+00> : vector<16xf32>
    %66 = vector.multi_reduction <add>, %65, %cst_57 [1] : vector<16x784xf32> to vector<16xf32>
    %67 = vector.shape_cast %66 : vector<16xf32> to vector<16x1xf32>
    %cst_58 = arith.constant 9.99999974E-6 : f32
    %68 = vector.broadcast %cst_58 : f32 to vector<16x1xf32>
    %69 = arith.addf %67, %68 : vector<16x1xf32>
    %70 = math.rsqrt %69 : vector<16x1xf32>
    %c0_59 = arith.constant 0 : index
    %c0_60 = arith.constant 0 : index
    %71 = vector.load %arg4[%c0_59, %c0_60] : memref<16x1xf32, #tpu.memory_space<vmem>>, vector<16x1xf32>
    %72 = arith.mulf %70, %71 : vector<16x1xf32>
    %73 = vector.broadcast %72 : vector<16x1xf32> to vector<16x784xf32>
    %74 = arith.mulf %62, %73 : vector<16x784xf32>
    %c0_61 = arith.constant 0 : index
    %c0_62 = arith.constant 0 : index
    %75 = vector.load %arg5[%c0_61, %c0_62] : memref<16x1xf32, #tpu.memory_space<vmem>>, vector<16x1xf32>
    %76 = vector.broadcast %75 : vector<16x1xf32> to vector<16x784xf32>
    %77 = arith.addf %74, %76 : vector<16x784xf32>
    %cst_63 = arith.constant 0.000000e+00 : f32
    %78 = vector.broadcast %cst_63 : f32 to vector<16x784xf32>
    %79 = arith.maximumf %77, %78 : vector<16x784xf32>
    %c0_64 = arith.constant 0 : index
    %c0_65 = arith.constant 0 : index
    %80 = vector.load %arg23[%c0_64, %c0_65] : memref<16x816xf32, #tpu.memory_space<vmem>>, vector<16x784xf32>
    tpu.vector_store %arg23[%c0_64, %c0_65], %79 {strides = array<i32>} : memref<16x816xf32, #tpu.memory_space<vmem>>, vector<16x784xf32>,
    %cst_66 = arith.constant 0.000000e+00 : f32
    %81 = vector.broadcast %cst_66 : f32 to vector<16x32xf32>
    %c0_67 = arith.constant 0 : index
    %c784 = arith.constant 784 : index
    %82 = vector.load %arg23[%c0_67, %c784] : memref<16x816xf32, #tpu.memory_space<vmem>>, vector<16x32xf32>
    tpu.vector_store %arg23[%c0_67, %c784], %81 {strides = array<i32>} : memref<16x816xf32, #tpu.memory_space<vmem>>, vector<16x32xf32>,
    %c0_68 = arith.constant 0 : index
    %c0_69 = arith.constant 0 : index
    %83 = vector.load %arg23[%c0_68, %c0_69] : memref<16x816xf32, #tpu.memory_space<vmem>>, vector<16x784xf32>
    %c0_70 = arith.constant 0 : index
    %c1_71 = arith.constant 1 : index
    %84 = vector.load %arg23[%c0_70, %c1_71] : memref<16x816xf32, #tpu.memory_space<vmem>>, vector<16x784xf32>
    %85 = arith.maximumf %83, %84 : vector<16x784xf32>
    %c0_72 = arith.constant 0 : index
    %c28 = arith.constant 28 : index
    %86 = vector.load %arg23[%c0_72, %c28] : memref<16x816xf32, #tpu.memory_space<vmem>>, vector<16x784xf32>
    %c0_73 = arith.constant 0 : index
    %c29 = arith.constant 29 : index
    %87 = vector.load %arg23[%c0_73, %c29] : memref<16x816xf32, #tpu.memory_space<vmem>>, vector<16x784xf32>
    %88 = arith.maximumf %86, %87 : vector<16x784xf32>
    %89 = arith.maximumf %85, %88 : vector<16x784xf32>
    %c0_74 = arith.constant 0 : index
    %c0_75 = arith.constant 0 : index
    %90 = vector.load %arg18[%c0_74, %c0_75] : memref<784x196xf32, #tpu.memory_space<vmem>>, vector<784x196xf32>
    %cst_76 = arith.constant dense<0.000000e+00> : vector<16x196xf32>
    %91 = tpu.matmul %89, %90, %cst_76 {dimension_numbers = #tpu.dot_dimension_numbers<[1], [0], [0], [1], [0, 0, 1, 1], [], []>} : vector<16x784xf32>, vector<784x196xf32>, vector<16x196xf32> -> vector<16x196xf32>
    %cst_77 = arith.constant 0.000000e+00 : f32
    %92 = vector.broadcast %cst_77 : f32 to vector<16x16xf32>
    %c0_78 = arith.constant 0 : index
    %c0_79 = arith.constant 0 : index
    %93 = vector.load %arg24[%c0_78, %c0_79] : memref<16x228xf32, #tpu.memory_space<vmem>>, vector<16x16xf32>
    tpu.vector_store %arg24[%c0_78, %c0_79], %92 {strides = array<i32>} : memref<16x228xf32, #tpu.memory_space<vmem>>, vector<16x16xf32>,
    %c0_80 = arith.constant 0 : index
    %c16_81 = arith.constant 16 : index
    %94 = vector.load %arg24[%c0_80, %c16_81] : memref<16x228xf32, #tpu.memory_space<vmem>>, vector<16x196xf32>
    tpu.vector_store %arg24[%c0_80, %c16_81], %91 {strides = array<i32>} : memref<16x228xf32, #tpu.memory_space<vmem>>, vector<16x196xf32>,
    %cst_82 = arith.constant 0.000000e+00 : f32
    %95 = vector.broadcast %cst_82 : f32 to vector<16x16xf32>
    %c0_83 = arith.constant 0 : index
    %c212 = arith.constant 212 : index
    %96 = vector.load %arg24[%c0_83, %c212] : memref<16x228xf32, #tpu.memory_space<vmem>>, vector<16x16xf32>
    tpu.vector_store %arg24[%c0_83, %c212], %95 {strides = array<i32>} : memref<16x228xf32, #tpu.memory_space<vmem>>, vector<16x16xf32>,
    %c0_84 = arith.constant 0 : index
    %c1_85 = arith.constant 1 : index
    %97 = vector.load %arg24[%c0_84, %c1_85] : memref<16x228xf32, #tpu.memory_space<vmem>>, vector<16x196xf32>
    %c0_86 = arith.constant 0 : index
    %c0_87 = arith.constant 0 : index
    %98 = vector.load %arg17[%c0_86, %c0_87] : memref<9x196xf32, #tpu.memory_space<vmem>>, vector<1x196xf32>
    %99 = vector.broadcast %98 : vector<1x196xf32> to vector<16x196xf32>
    %100 = arith.mulf %97, %99 : vector<16x196xf32>
    %c0_88 = arith.constant 0 : index
    %c0_89 = arith.constant 0 : index
    %101 = vector.load %arg25[%c0_88, %c0_89] : memref<144x196xf32, #tpu.memory_space<vmem>>, vector<16x196xf32>
    tpu.vector_store %arg25[%c0_88, %c0_89], %100 {strides = array<i32>} : memref<144x196xf32, #tpu.memory_space<vmem>>, vector<16x196xf32>,
    %c0_90 = arith.constant 0 : index
    %c2_91 = arith.constant 2 : index
    %102 = vector.load %arg24[%c0_90, %c2_91] : memref<16x228xf32, #tpu.memory_space<vmem>>, vector<16x196xf32>
    %c1_92 = arith.constant 1 : index
    %c0_93 = arith.constant 0 : index
    %103 = vector.load %arg17[%c1_92, %c0_93] : memref<9x196xf32, #tpu.memory_space<vmem>>, vector<1x196xf32>
    %104 = vector.broadcast %103 : vector<1x196xf32> to vector<16x196xf32>
    %105 = arith.mulf %102, %104 : vector<16x196xf32>
    %c16_94 = arith.constant 16 : index
    %c0_95 = arith.constant 0 : index
    %106 = vector.load %arg25[%c16_94, %c0_95] : memref<144x196xf32, #tpu.memory_space<vmem>>, vector<16x196xf32>
    tpu.vector_store %arg25[%c16_94, %c0_95], %105 {strides = array<i32>} : memref<144x196xf32, #tpu.memory_space<vmem>>, vector<16x196xf32>,
    %c0_96 = arith.constant 0 : index
    %c3_97 = arith.constant 3 : index
    %107 = vector.load %arg24[%c0_96, %c3_97] : memref<16x228xf32, #tpu.memory_space<vmem>>, vector<16x196xf32>
    %c2_98 = arith.constant 2 : index
    %c0_99 = arith.constant 0 : index
    %108 = vector.load %arg17[%c2_98, %c0_99] : memref<9x196xf32, #tpu.memory_space<vmem>>, vector<1x196xf32>
    %109 = vector.broadcast %108 : vector<1x196xf32> to vector<16x196xf32>
    %110 = arith.mulf %107, %109 : vector<16x196xf32>
    %c32_100 = arith.constant 32 : index
    %c0_101 = arith.constant 0 : index
    %111 = vector.load %arg25[%c32_100, %c0_101] : memref<144x196xf32, #tpu.memory_space<vmem>>, vector<16x196xf32>
    tpu.vector_store %arg25[%c32_100, %c0_101], %110 {strides = array<i32>} : memref<144x196xf32, #tpu.memory_space<vmem>>, vector<16x196xf32>,
    %c0_102 = arith.constant 0 : index
    %c15 = arith.constant 15 : index
    %112 = vector.load %arg24[%c0_102, %c15] : memref<16x228xf32, #tpu.memory_space<vmem>>, vector<16x196xf32>
    %c3_103 = arith.constant 3 : index
    %c0_104 = arith.constant 0 : index
    %113 = vector.load %arg17[%c3_103, %c0_104] : memref<9x196xf32, #tpu.memory_space<vmem>>, vector<1x196xf32>
    %114 = vector.broadcast %113 : vector<1x196xf32> to vector<16x196xf32>
    %115 = arith.mulf %112, %114 : vector<16x196xf32>
    %c48 = arith.constant 48 : index
    %c0_105 = arith.constant 0 : index
    %116 = vector.load %arg25[%c48, %c0_105] : memref<144x196xf32, #tpu.memory_space<vmem>>, vector<16x196xf32>
    tpu.vector_store %arg25[%c48, %c0_105], %115 {strides = array<i32>} : memref<144x196xf32, #tpu.memory_space<vmem>>, vector<16x196xf32>,
    %c0_106 = arith.constant 0 : index
    %c16_107 = arith.constant 16 : index
    %117 = vector.load %arg24[%c0_106, %c16_107] : memref<16x228xf32, #tpu.memory_space<vmem>>, vector<16x196xf32>
    %c4_108 = arith.constant 4 : index
    %c0_109 = arith.constant 0 : index
    %118 = vector.load %arg17[%c4_108, %c0_109] : memref<9x196xf32, #tpu.memory_space<vmem>>, vector<1x196xf32>
    %119 = vector.broadcast %118 : vector<1x196xf32> to vector<16x196xf32>
    %120 = arith.mulf %117, %119 : vector<16x196xf32>
    %c64 = arith.constant 64 : index
    %c0_110 = arith.constant 0 : index
    %121 = vector.load %arg25[%c64, %c0_110] : memref<144x196xf32, #tpu.memory_space<vmem>>, vector<16x196xf32>
    tpu.vector_store %arg25[%c64, %c0_110], %120 {strides = array<i32>} : memref<144x196xf32, #tpu.memory_space<vmem>>, vector<16x196xf32>,
    %c0_111 = arith.constant 0 : index
    %c17 = arith.constant 17 : index
    %122 = vector.load %arg24[%c0_111, %c17] : memref<16x228xf32, #tpu.memory_space<vmem>>, vector<16x196xf32>
    %c5_112 = arith.constant 5 : index
    %c0_113 = arith.constant 0 : index
    %123 = vector.load %arg17[%c5_112, %c0_113] : memref<9x196xf32, #tpu.memory_space<vmem>>, vector<1x196xf32>
    %124 = vector.broadcast %123 : vector<1x196xf32> to vector<16x196xf32>
    %125 = arith.mulf %122, %124 : vector<16x196xf32>
    %c80 = arith.constant 80 : index
    %c0_114 = arith.constant 0 : index
    %126 = vector.load %arg25[%c80, %c0_114] : memref<144x196xf32, #tpu.memory_space<vmem>>, vector<16x196xf32>
    tpu.vector_store %arg25[%c80, %c0_114], %125 {strides = array<i32>} : memref<144x196xf32, #tpu.memory_space<vmem>>, vector<16x196xf32>,
    %c0_115 = arith.constant 0 : index
    %c29_116 = arith.constant 29 : index
    %127 = vector.load %arg24[%c0_115, %c29_116] : memref<16x228xf32, #tpu.memory_space<vmem>>, vector<16x196xf32>
    %c6_117 = arith.constant 6 : index
    %c0_118 = arith.constant 0 : index
    %128 = vector.load %arg17[%c6_117, %c0_118] : memref<9x196xf32, #tpu.memory_space<vmem>>, vector<1x196xf32>
    %129 = vector.broadcast %128 : vector<1x196xf32> to vector<16x196xf32>
    %130 = arith.mulf %127, %129 : vector<16x196xf32>
    %c96 = arith.constant 96 : index
    %c0_119 = arith.constant 0 : index
    %131 = vector.load %arg25[%c96, %c0_119] : memref<144x196xf32, #tpu.memory_space<vmem>>, vector<16x196xf32>
    tpu.vector_store %arg25[%c96, %c0_119], %130 {strides = array<i32>} : memref<144x196xf32, #tpu.memory_space<vmem>>, vector<16x196xf32>,
    %c0_120 = arith.constant 0 : index
    %c30 = arith.constant 30 : index
    %132 = vector.load %arg24[%c0_120, %c30] : memref<16x228xf32, #tpu.memory_space<vmem>>, vector<16x196xf32>
    %c7_121 = arith.constant 7 : index
    %c0_122 = arith.constant 0 : index
    %133 = vector.load %arg17[%c7_121, %c0_122] : memref<9x196xf32, #tpu.memory_space<vmem>>, vector<1x196xf32>
    %134 = vector.broadcast %133 : vector<1x196xf32> to vector<16x196xf32>
    %135 = arith.mulf %132, %134 : vector<16x196xf32>
    %c112 = arith.constant 112 : index
    %c0_123 = arith.constant 0 : index
    %136 = vector.load %arg25[%c112, %c0_123] : memref<144x196xf32, #tpu.memory_space<vmem>>, vector<16x196xf32>
    tpu.vector_store %arg25[%c112, %c0_123], %135 {strides = array<i32>} : memref<144x196xf32, #tpu.memory_space<vmem>>, vector<16x196xf32>,
    %c0_124 = arith.constant 0 : index
    %c31_125 = arith.constant 31 : index
    %137 = vector.load %arg24[%c0_124, %c31_125] : memref<16x228xf32, #tpu.memory_space<vmem>>, vector<16x196xf32>
    %c8_126 = arith.constant 8 : index
    %c0_127 = arith.constant 0 : index
    %138 = vector.load %arg17[%c8_126, %c0_127] : memref<9x196xf32, #tpu.memory_space<vmem>>, vector<1x196xf32>
    %139 = vector.broadcast %138 : vector<1x196xf32> to vector<16x196xf32>
    %140 = arith.mulf %137, %139 : vector<16x196xf32>
    %c128 = arith.constant 128 : index
    %c0_128 = arith.constant 0 : index
    %141 = vector.load %arg25[%c128, %c0_128] : memref<144x196xf32, #tpu.memory_space<vmem>>, vector<16x196xf32>
    tpu.vector_store %arg25[%c128, %c0_128], %140 {strides = array<i32>} : memref<144x196xf32, #tpu.memory_space<vmem>>, vector<16x196xf32>,
    %c0_129 = arith.constant 0 : index
    %c0_130 = arith.constant 0 : index
    %142 = vector.load %arg7[%c0_129, %c0_130] : memref<32x144xf32, #tpu.memory_space<vmem>>, vector<32x144xf32>
    %c0_131 = arith.constant 0 : index
    %c0_132 = arith.constant 0 : index
    %143 = vector.load %arg25[%c0_131, %c0_132] : memref<144x196xf32, #tpu.memory_space<vmem>>, vector<144x196xf32>
    %cst_133 = arith.constant dense<0.000000e+00> : vector<32x196xf32>
    %144 = tpu.matmul %142, %143, %cst_133 {dimension_numbers = #tpu.dot_dimension_numbers<[1], [0], [0], [1], [0, 0, 1, 1], [], []>} : vector<32x144xf32>, vector<144x196xf32>, vector<32x196xf32> -> vector<32x196xf32>
    %c0_134 = arith.constant 0 : index
    %c0_135 = arith.constant 0 : index
    %145 = vector.load %arg8[%c0_134, %c0_135] : memref<32x1xf32, #tpu.memory_space<vmem>>, vector<32x1xf32>
    %146 = vector.broadcast %145 : vector<32x1xf32> to vector<32x196xf32>
    %147 = arith.addf %144, %146 : vector<32x196xf32>
    %c0_136 = arith.constant 0 : index
    %c0_137 = arith.constant 0 : index
    %148 = vector.load %arg11[%c0_136, %c0_137] : memref<32x32xf32, #tpu.memory_space<vmem>>, vector<32x32xf32>
    %cst_138 = arith.constant dense<0.000000e+00> : vector<32x196xf32>
    %149 = tpu.matmul %148, %147, %cst_138 {dimension_numbers = #tpu.dot_dimension_numbers<[1], [0], [0], [1], [0, 0, 1, 1], [], []>} : vector<32x32xf32>, vector<32x196xf32>, vector<32x196xf32> -> vector<32x196xf32>
    %cst_139 = arith.constant dense<0.000000e+00> : vector<32xf32>
    %150 = vector.multi_reduction <add>, %149, %cst_139 [1] : vector<32x196xf32> to vector<32xf32>
    %151 = vector.shape_cast %150 : vector<32xf32> to vector<32x1xf32>
    %152 = vector.broadcast %151 : vector<32x1xf32> to vector<32x196xf32>
    %153 = arith.subf %147, %152 : vector<32x196xf32>
    %c0_140 = arith.constant 0 : index
    %c0_141 = arith.constant 0 : index
    %154 = vector.load %arg11[%c0_140, %c0_141] : memref<32x32xf32, #tpu.memory_space<vmem>>, vector<32x32xf32>
    %155 = arith.mulf %153, %153 : vector<32x196xf32>
    %cst_142 = arith.constant dense<0.000000e+00> : vector<32x196xf32>
    %156 = tpu.matmul %154, %155, %cst_142 {dimension_numbers = #tpu.dot_dimension_numbers<[1], [0], [0], [1], [0, 0, 1, 1], [], []>} : vector<32x32xf32>, vector<32x196xf32>, vector<32x196xf32> -> vector<32x196xf32>
    %cst_143 = arith.constant dense<0.000000e+00> : vector<32xf32>
    %157 = vector.multi_reduction <add>, %156, %cst_143 [1] : vector<32x196xf32> to vector<32xf32>
    %158 = vector.shape_cast %157 : vector<32xf32> to vector<32x1xf32>
    %cst_144 = arith.constant 9.99999974E-6 : f32
    %159 = vector.broadcast %cst_144 : f32 to vector<32x1xf32>
    %160 = arith.addf %158, %159 : vector<32x1xf32>
    %161 = math.rsqrt %160 : vector<32x1xf32>
    %c0_145 = arith.constant 0 : index
    %c0_146 = arith.constant 0 : index
    %162 = vector.load %arg9[%c0_145, %c0_146] : memref<32x1xf32, #tpu.memory_space<vmem>>, vector<32x1xf32>
    %163 = arith.mulf %161, %162 : vector<32x1xf32>
    %164 = vector.broadcast %163 : vector<32x1xf32> to vector<32x196xf32>
    %165 = arith.mulf %153, %164 : vector<32x196xf32>
    %c0_147 = arith.constant 0 : index
    %c0_148 = arith.constant 0 : index
    %166 = vector.load %arg10[%c0_147, %c0_148] : memref<32x1xf32, #tpu.memory_space<vmem>>, vector<32x1xf32>
    %167 = vector.broadcast %166 : vector<32x1xf32> to vector<32x196xf32>
    %168 = arith.addf %165, %167 : vector<32x196xf32>
    %cst_149 = arith.constant 0.000000e+00 : f32
    %169 = vector.broadcast %cst_149 : f32 to vector<32x196xf32>
    %170 = arith.maximumf %168, %169 : vector<32x196xf32>
    %c0_150 = arith.constant 0 : index
    %c0_151 = arith.constant 0 : index
    %171 = vector.load %arg26[%c0_150, %c0_151] : memref<32x212xf32, #tpu.memory_space<vmem>>, vector<32x196xf32>
    tpu.vector_store %arg26[%c0_150, %c0_151], %170 {strides = array<i32>} : memref<32x212xf32, #tpu.memory_space<vmem>>, vector<32x196xf32>,
    %cst_152 = arith.constant 0.000000e+00 : f32
    %172 = vector.broadcast %cst_152 : f32 to vector<32x16xf32>
    %c0_153 = arith.constant 0 : index
    %c196 = arith.constant 196 : index
    %173 = vector.load %arg26[%c0_153, %c196] : memref<32x212xf32, #tpu.memory_space<vmem>>, vector<32x16xf32>
    tpu.vector_store %arg26[%c0_153, %c196], %172 {strides = array<i32>} : memref<32x212xf32, #tpu.memory_space<vmem>>, vector<32x16xf32>,
    %c0_154 = arith.constant 0 : index
    %c0_155 = arith.constant 0 : index
    %174 = vector.load %arg26[%c0_154, %c0_155] : memref<32x212xf32, #tpu.memory_space<vmem>>, vector<32x196xf32>
    %c0_156 = arith.constant 0 : index
    %c1_157 = arith.constant 1 : index
    %175 = vector.load %arg26[%c0_156, %c1_157] : memref<32x212xf32, #tpu.memory_space<vmem>>, vector<32x196xf32>
    %176 = arith.maximumf %174, %175 : vector<32x196xf32>
    %c0_158 = arith.constant 0 : index
    %c14_159 = arith.constant 14 : index
    %177 = vector.load %arg26[%c0_158, %c14_159] : memref<32x212xf32, #tpu.memory_space<vmem>>, vector<32x196xf32>
    %c0_160 = arith.constant 0 : index
    %c15_161 = arith.constant 15 : index
    %178 = vector.load %arg26[%c0_160, %c15_161] : memref<32x212xf32, #tpu.memory_space<vmem>>, vector<32x196xf32>
    %179 = arith.maximumf %177, %178 : vector<32x196xf32>
    %180 = arith.maximumf %176, %179 : vector<32x196xf32>
    %c0_162 = arith.constant 0 : index
    %c0_163 = arith.constant 0 : index
    %181 = vector.load %arg19[%c0_162, %c0_163] : memref<196x49xf32, #tpu.memory_space<vmem>>, vector<196x49xf32>
    %cst_164 = arith.constant dense<0.000000e+00> : vector<32x49xf32>
    %182 = tpu.matmul %180, %181, %cst_164 {dimension_numbers = #tpu.dot_dimension_numbers<[1], [0], [0], [1], [0, 0, 1, 1], [], []>} : vector<32x196xf32>, vector<196x49xf32>, vector<32x49xf32> -> vector<32x49xf32>
    %c0_165 = arith.constant 0 : index
    %c0_166 = arith.constant 0 : index
    %183 = vector.load %arg27[%c0_165, %c0_166] : memref<32x49xf32, #tpu.memory_space<vmem>>, vector<32x49xf32>
    tpu.vector_store %arg27[%c0_165, %c0_166], %182 {strides = array<i32>} : memref<32x49xf32, #tpu.memory_space<vmem>>, vector<32x49xf32>,
    %c0_167 = arith.constant 0 : index
    %c0_168 = arith.constant 0 : index
    %184 = vector.load %arg27[%c0_167, %c0_168] : memref<32x49xf32, #tpu.memory_space<vmem>>, vector<2x49xf32>
    %c0_169 = arith.constant 0 : index
    %c0_170 = arith.constant 0 : index
    %185 = vector.load %arg28[%c0_169, %c0_170] : memref<2x784xf32, #tpu.memory_space<vmem>>, vector<2x49xf32>
    tpu.vector_store %arg28[%c0_169, %c0_170], %184 {strides = array<i32>} : memref<2x784xf32, #tpu.memory_space<vmem>>, vector<2x49xf32>,
    %c2_171 = arith.constant 2 : index
    %c0_172 = arith.constant 0 : index
    %186 = vector.load %arg27[%c2_171, %c0_172] : memref<32x49xf32, #tpu.memory_space<vmem>>, vector<2x49xf32>
    %c0_173 = arith.constant 0 : index
    %c49 = arith.constant 49 : index
    %187 = vector.load %arg28[%c0_173, %c49] : memref<2x784xf32, #tpu.memory_space<vmem>>, vector<2x49xf32>
    tpu.vector_store %arg28[%c0_173, %c49], %186 {strides = array<i32>} : memref<2x784xf32, #tpu.memory_space<vmem>>, vector<2x49xf32>,
    %c4_174 = arith.constant 4 : index
    %c0_175 = arith.constant 0 : index
    %188 = vector.load %arg27[%c4_174, %c0_175] : memref<32x49xf32, #tpu.memory_space<vmem>>, vector<2x49xf32>
    %c0_176 = arith.constant 0 : index
    %c98 = arith.constant 98 : index
    %189 = vector.load %arg28[%c0_176, %c98] : memref<2x784xf32, #tpu.memory_space<vmem>>, vector<2x49xf32>
    tpu.vector_store %arg28[%c0_176, %c98], %188 {strides = array<i32>} : memref<2x784xf32, #tpu.memory_space<vmem>>, vector<2x49xf32>,
    %c6_177 = arith.constant 6 : index
    %c0_178 = arith.constant 0 : index
    %190 = vector.load %arg27[%c6_177, %c0_178] : memref<32x49xf32, #tpu.memory_space<vmem>>, vector<2x49xf32>
    %c0_179 = arith.constant 0 : index
    %c147 = arith.constant 147 : index
    %191 = vector.load %arg28[%c0_179, %c147] : memref<2x784xf32, #tpu.memory_space<vmem>>, vector<2x49xf32>
    tpu.vector_store %arg28[%c0_179, %c147], %190 {strides = array<i32>} : memref<2x784xf32, #tpu.memory_space<vmem>>, vector<2x49xf32>,
    %c8_180 = arith.constant 8 : index
    %c0_181 = arith.constant 0 : index
    %192 = vector.load %arg27[%c8_180, %c0_181] : memref<32x49xf32, #tpu.memory_space<vmem>>, vector<2x49xf32>
    %c0_182 = arith.constant 0 : index
    %c196_183 = arith.constant 196 : index
    %193 = vector.load %arg28[%c0_182, %c196_183] : memref<2x784xf32, #tpu.memory_space<vmem>>, vector<2x49xf32>
    tpu.vector_store %arg28[%c0_182, %c196_183], %192 {strides = array<i32>} : memref<2x784xf32, #tpu.memory_space<vmem>>, vector<2x49xf32>,
    %c10_184 = arith.constant 10 : index
    %c0_185 = arith.constant 0 : index
    %194 = vector.load %arg27[%c10_184, %c0_185] : memref<32x49xf32, #tpu.memory_space<vmem>>, vector<2x49xf32>
    %c0_186 = arith.constant 0 : index
    %c245 = arith.constant 245 : index
    %195 = vector.load %arg28[%c0_186, %c245] : memref<2x784xf32, #tpu.memory_space<vmem>>, vector<2x49xf32>
    tpu.vector_store %arg28[%c0_186, %c245], %194 {strides = array<i32>} : memref<2x784xf32, #tpu.memory_space<vmem>>, vector<2x49xf32>,
    %c12_187 = arith.constant 12 : index
    %c0_188 = arith.constant 0 : index
    %196 = vector.load %arg27[%c12_187, %c0_188] : memref<32x49xf32, #tpu.memory_space<vmem>>, vector<2x49xf32>
    %c0_189 = arith.constant 0 : index
    %c294 = arith.constant 294 : index
    %197 = vector.load %arg28[%c0_189, %c294] : memref<2x784xf32, #tpu.memory_space<vmem>>, vector<2x49xf32>
    tpu.vector_store %arg28[%c0_189, %c294], %196 {strides = array<i32>} : memref<2x784xf32, #tpu.memory_space<vmem>>, vector<2x49xf32>,
    %c14_190 = arith.constant 14 : index
    %c0_191 = arith.constant 0 : index
    %198 = vector.load %arg27[%c14_190, %c0_191] : memref<32x49xf32, #tpu.memory_space<vmem>>, vector<2x49xf32>
    %c0_192 = arith.constant 0 : index
    %c343 = arith.constant 343 : index
    %199 = vector.load %arg28[%c0_192, %c343] : memref<2x784xf32, #tpu.memory_space<vmem>>, vector<2x49xf32>
    tpu.vector_store %arg28[%c0_192, %c343], %198 {strides = array<i32>} : memref<2x784xf32, #tpu.memory_space<vmem>>, vector<2x49xf32>,
    %c16_193 = arith.constant 16 : index
    %c0_194 = arith.constant 0 : index
    %200 = vector.load %arg27[%c16_193, %c0_194] : memref<32x49xf32, #tpu.memory_space<vmem>>, vector<2x49xf32>
    %c0_195 = arith.constant 0 : index
    %c392 = arith.constant 392 : index
    %201 = vector.load %arg28[%c0_195, %c392] : memref<2x784xf32, #tpu.memory_space<vmem>>, vector<2x49xf32>
    tpu.vector_store %arg28[%c0_195, %c392], %200 {strides = array<i32>} : memref<2x784xf32, #tpu.memory_space<vmem>>, vector<2x49xf32>,
    %c18 = arith.constant 18 : index
    %c0_196 = arith.constant 0 : index
    %202 = vector.load %arg27[%c18, %c0_196] : memref<32x49xf32, #tpu.memory_space<vmem>>, vector<2x49xf32>
    %c0_197 = arith.constant 0 : index
    %c441 = arith.constant 441 : index
    %203 = vector.load %arg28[%c0_197, %c441] : memref<2x784xf32, #tpu.memory_space<vmem>>, vector<2x49xf32>
    tpu.vector_store %arg28[%c0_197, %c441], %202 {strides = array<i32>} : memref<2x784xf32, #tpu.memory_space<vmem>>, vector<2x49xf32>,
    %c20 = arith.constant 20 : index
    %c0_198 = arith.constant 0 : index
    %204 = vector.load %arg27[%c20, %c0_198] : memref<32x49xf32, #tpu.memory_space<vmem>>, vector<2x49xf32>
    %c0_199 = arith.constant 0 : index
    %c490 = arith.constant 490 : index
    %205 = vector.load %arg28[%c0_199, %c490] : memref<2x784xf32, #tpu.memory_space<vmem>>, vector<2x49xf32>
    tpu.vector_store %arg28[%c0_199, %c490], %204 {strides = array<i32>} : memref<2x784xf32, #tpu.memory_space<vmem>>, vector<2x49xf32>,
    %c22 = arith.constant 22 : index
    %c0_200 = arith.constant 0 : index
    %206 = vector.load %arg27[%c22, %c0_200] : memref<32x49xf32, #tpu.memory_space<vmem>>, vector<2x49xf32>
    %c0_201 = arith.constant 0 : index
    %c539 = arith.constant 539 : index
    %207 = vector.load %arg28[%c0_201, %c539] : memref<2x784xf32, #tpu.memory_space<vmem>>, vector<2x49xf32>
    tpu.vector_store %arg28[%c0_201, %c539], %206 {strides = array<i32>} : memref<2x784xf32, #tpu.memory_space<vmem>>, vector<2x49xf32>,
    %c24 = arith.constant 24 : index
    %c0_202 = arith.constant 0 : index
    %208 = vector.load %arg27[%c24, %c0_202] : memref<32x49xf32, #tpu.memory_space<vmem>>, vector<2x49xf32>
    %c0_203 = arith.constant 0 : index
    %c588 = arith.constant 588 : index
    %209 = vector.load %arg28[%c0_203, %c588] : memref<2x784xf32, #tpu.memory_space<vmem>>, vector<2x49xf32>
    tpu.vector_store %arg28[%c0_203, %c588], %208 {strides = array<i32>} : memref<2x784xf32, #tpu.memory_space<vmem>>, vector<2x49xf32>,
    %c26 = arith.constant 26 : index
    %c0_204 = arith.constant 0 : index
    %210 = vector.load %arg27[%c26, %c0_204] : memref<32x49xf32, #tpu.memory_space<vmem>>, vector<2x49xf32>
    %c0_205 = arith.constant 0 : index
    %c637 = arith.constant 637 : index
    %211 = vector.load %arg28[%c0_205, %c637] : memref<2x784xf32, #tpu.memory_space<vmem>>, vector<2x49xf32>
    tpu.vector_store %arg28[%c0_205, %c637], %210 {strides = array<i32>} : memref<2x784xf32, #tpu.memory_space<vmem>>, vector<2x49xf32>,
    %c28_206 = arith.constant 28 : index
    %c0_207 = arith.constant 0 : index
    %212 = vector.load %arg27[%c28_206, %c0_207] : memref<32x49xf32, #tpu.memory_space<vmem>>, vector<2x49xf32>
    %c0_208 = arith.constant 0 : index
    %c686 = arith.constant 686 : index
    %213 = vector.load %arg28[%c0_208, %c686] : memref<2x784xf32, #tpu.memory_space<vmem>>, vector<2x49xf32>
    tpu.vector_store %arg28[%c0_208, %c686], %212 {strides = array<i32>} : memref<2x784xf32, #tpu.memory_space<vmem>>, vector<2x49xf32>,
    %c30_209 = arith.constant 30 : index
    %c0_210 = arith.constant 0 : index
    %214 = vector.load %arg27[%c30_209, %c0_210] : memref<32x49xf32, #tpu.memory_space<vmem>>, vector<2x49xf32>
    %c0_211 = arith.constant 0 : index
    %c735 = arith.constant 735 : index
    %215 = vector.load %arg28[%c0_211, %c735] : memref<2x784xf32, #tpu.memory_space<vmem>>, vector<2x49xf32>
    tpu.vector_store %arg28[%c0_211, %c735], %214 {strides = array<i32>} : memref<2x784xf32, #tpu.memory_space<vmem>>, vector<2x49xf32>,
    %c0_212 = arith.constant 0 : index
    %c0_213 = arith.constant 0 : index
    %216 = vector.load %arg28[%c0_212, %c0_213] : memref<2x784xf32, #tpu.memory_space<vmem>>, vector<2x784xf32>
    %c0_214 = arith.constant 0 : index
    %c0_215 = arith.constant 0 : index
    %217 = vector.load %arg12[%c0_214, %c0_215] : memref<784x64xf32, #tpu.memory_space<vmem>>, vector<784x64xf32>
    %cst_216 = arith.constant dense<0.000000e+00> : vector<2x64xf32>
    %218 = tpu.matmul %216, %217, %cst_216 {dimension_numbers = #tpu.dot_dimension_numbers<[1], [0], [0], [1], [0, 0, 1, 1], [], []>} : vector<2x784xf32>, vector<784x64xf32>, vector<2x64xf32> -> vector<2x64xf32>
    %c0_217 = arith.constant 0 : index
    %c0_218 = arith.constant 0 : index
    %219 = vector.load %arg13[%c0_217, %c0_218] : memref<1x64xf32, #tpu.memory_space<vmem>>, vector<1x64xf32>
    %220 = vector.broadcast %219 : vector<1x64xf32> to vector<2x64xf32>
    %221 = arith.addf %218, %220 : vector<2x64xf32>
    %cst_219 = arith.constant 0.000000e+00 : f32
    %222 = vector.broadcast %cst_219 : f32 to vector<2x64xf32>
    %223 = arith.maximumf %221, %222 : vector<2x64xf32>
    %c0_220 = arith.constant 0 : index
    %c0_221 = arith.constant 0 : index
    %224 = vector.load %arg14[%c0_220, %c0_221] : memref<64x10xf32, #tpu.memory_space<vmem>>, vector<64x10xf32>
    %cst_222 = arith.constant dense<0.000000e+00> : vector<2x10xf32>
    %225 = tpu.matmul %223, %224, %cst_222 {dimension_numbers = #tpu.dot_dimension_numbers<[1], [0], [0], [1], [0, 0, 1, 1], [], []>} : vector<2x64xf32>, vector<64x10xf32>, vector<2x10xf32> -> vector<2x10xf32>
    %c0_223 = arith.constant 0 : index
    %c0_224 = arith.constant 0 : index
    %226 = vector.load %arg15[%c0_223, %c0_224] : memref<1x10xf32, #tpu.memory_space<vmem>>, vector<1x10xf32>
    %227 = vector.broadcast %226 : vector<1x10xf32> to vector<2x10xf32>
    %228 = arith.addf %225, %227 : vector<2x10xf32>
    %c0_225 = arith.constant 0 : index
    %c0_226 = arith.constant 0 : index
    %229 = vector.load %arg20[%c0_225, %c0_226] : memref<2x10xf32, #tpu.memory_space<vmem>>, vector<2x10xf32>
    tpu.vector_store %arg20[%c0_225, %c0_226], %228 {strides = array<i32>} : memref<2x10xf32, #tpu.memory_space<vmem>>, vector<2x10xf32>,
    return
  }
  func.func @transform_0(%arg0: i32) -> (i32, i32) {
    %c0_i32 = arith.constant 0 : i32
    %c0_i32_0 = arith.constant 0 : i32
    %c0_i32_1 = arith.constant 0 : i32
    return %c0_i32, %c0_i32_0 : i32, i32
  }
  func.func @transform_1(%arg0: i32) -> (i32, i32) {
    %c0_i32 = arith.constant 0 : i32
    %c0_i32_0 = arith.constant 0 : i32
    %c0_i32_1 = arith.constant 0 : i32
    return %c0_i32, %c0_i32_0 : i32, i32
  }
  func.func @transform_2(%arg0: i32) -> (i32, i32) {
    %c0_i32 = arith.constant 0 : i32
    %c0_i32_0 = arith.constant 0 : i32
    %c0_i32_1 = arith.constant 0 : i32
    return %c0_i32, %c0_i32_0 : i32, i32
  }
  func.func @transform_3(%arg0: i32) -> (i32, i32) {
    %c0_i32 = arith.constant 0 : i32
    %c0_i32_0 = arith.constant 0 : i32
    %c0_i32_1 = arith.constant 0 : i32
    return %c0_i32, %c0_i32_0 : i32, i32
  }
  func.func @transform_4(%arg0: i32) -> (i32, i32) {
    %c0_i32 = arith.constant 0 : i32
    %c0_i32_0 = arith.constant 0 : i32
    %c0_i32_1 = arith.constant 0 : i32
    return %c0_i32, %c0_i32_0 : i32, i32
  }
  func.func @transform_5(%arg0: i32) -> (i32, i32) {
    %c0_i32 = arith.constant 0 : i32
    %c0_i32_0 = arith.constant 0 : i32
    %c0_i32_1 = arith.constant 0 : i32
    return %c0_i32, %c0_i32_0 : i32, i32
  }
  func.func @transform_6(%arg0: i32) -> (i32, i32) {
    %c0_i32 = arith.constant 0 : i32
    %c0_i32_0 = arith.constant 0 : i32
    %c0_i32_1 = arith.constant 0 : i32
    return %c0_i32, %c0_i32_0 : i32, i32
  }
  func.func @transform_7(%arg0: i32) -> (i32, i32) {
    %c0_i32 = arith.constant 0 : i32
    %c0_i32_0 = arith.constant 0 : i32
    %c0_i32_1 = arith.constant 0 : i32
    return %c0_i32, %c0_i32_0 : i32, i32
  }
  func.func @transform_8(%arg0: i32) -> (i32, i32) {
    %c0_i32 = arith.constant 0 : i32
    %c0_i32_0 = arith.constant 0 : i32
    %c0_i32_1 = arith.constant 0 : i32
    return %c0_i32, %c0_i32_0 : i32, i32
  }
  func.func @transform_9(%arg0: i32) -> (i32, i32) {
    %c0_i32 = arith.constant 0 : i32
    %c0_i32_0 = arith.constant 0 : i32
    %c0_i32_1 = arith.constant 0 : i32
    return %c0_i32, %c0_i32_0 : i32, i32
  }
  func.func @transform_10(%arg0: i32) -> (i32, i32) {
    %c0_i32 = arith.constant 0 : i32
    %c0_i32_0 = arith.constant 0 : i32
    %c0_i32_1 = arith.constant 0 : i32
    return %c0_i32, %c0_i32_0 : i32, i32
  }
  func.func @transform_11(%arg0: i32) -> (i32, i32) {
    %c0_i32 = arith.constant 0 : i32
    %c0_i32_0 = arith.constant 0 : i32
    %c0_i32_1 = arith.constant 0 : i32
    return %c0_i32, %c0_i32_0 : i32, i32
  }
  func.func @transform_12(%arg0: i32) -> (i32, i32) {
    %c0_i32 = arith.constant 0 : i32
    %c0_i32_0 = arith.constant 0 : i32
    %c0_i32_1 = arith.constant 0 : i32
    return %c0_i32, %c0_i32_0 : i32, i32
  }
  func.func @transform_13(%arg0: i32) -> (i32, i32) {
    %c0_i32 = arith.constant 0 : i32
    %c0_i32_0 = arith.constant 0 : i32
    %c0_i32_1 = arith.constant 0 : i32
    return %c0_i32, %c0_i32_0 : i32, i32
  }
  func.func @transform_14(%arg0: i32) -> (i32, i32) {
    %c0_i32 = arith.constant 0 : i32
    %c0_i32_0 = arith.constant 0 : i32
    %c0_i32_1 = arith.constant 0 : i32
    return %c0_i32, %c0_i32_0 : i32, i32
  }
  func.func @transform_15(%arg0: i32) -> (i32, i32) {
    %c0_i32 = arith.constant 0 : i32
    %c0_i32_0 = arith.constant 0 : i32
    %c0_i32_1 = arith.constant 0 : i32
    return %c0_i32, %c0_i32_0 : i32, i32
  }
  func.func @transform_16(%arg0: i32) -> (i32, i32) {
    %c0_i32 = arith.constant 0 : i32
    %c0_i32_0 = arith.constant 0 : i32
    %c0_i32_1 = arith.constant 0 : i32
    return %c0_i32, %c0_i32_0 : i32, i32
  }
  func.func @transform_17(%arg0: i32) -> (i32, i32) {
    %c0_i32 = arith.constant 0 : i32
    %c0_i32_0 = arith.constant 0 : i32
    %c0_i32_1 = arith.constant 0 : i32
    return %c0_i32, %c0_i32_0 : i32, i32
  }
  func.func @transform_18(%arg0: i32) -> (i32, i32) {
    %c0_i32 = arith.constant 0 : i32
    %c0_i32_0 = arith.constant 0 : i32
    %c0_i32_1 = arith.constant 0 : i32
    return %c0_i32, %c0_i32_0 : i32, i32
  }
  func.func @transform_19(%arg0: i32) -> (i32, i32) {
    %c0_i32 = arith.constant 0 : i32
    %c0_i32_0 = arith.constant 0 : i32
    %c0_i32_1 = arith.constant 0 : i32
    return %c0_i32, %c0_i32_0 : i32, i32
  }
}

</mosaic_0001>

<llo_original>
// kernel: _forward.1
$region0: #{_forward.1}
  #allocation0 [shape = 'u32[]', space=smem, size = 0x4, offset = 0x4, fixed_abs, tag = 'smem constant byte address 0x4 - core index']
  #allocation1 [shape = 'u32[144,128]{1,0:T(1,128)}', space=vmem, size = 0x12000, scoped, tag = 'internal scratch']
  #allocation2 [shape = 'f32[2,848]{1,0:T(2,128)}', space=vmem, size = 0x1c00, scoped, tag = 'scratch operand']
  #allocation3 [shape = 'f32[18,784]{1,0:T(8,128)}', space=vmem, size = 0x15000, scoped, tag = 'scratch operand']
  #allocation4 [shape = 'f32[16,816]{1,0:T(8,128)}', space=vmem, size = 0xe000, scoped, tag = 'scratch operand']
  #allocation5 [shape = 'f32[16,228]{1,0:T(8,128)}', space=vmem, size = 0x4000, scoped, tag = 'scratch operand']
  #allocation6 [shape = 'f32[144,196]{1,0:T(8,128)}', space=vmem, size = 0x24000, scoped, tag = 'scratch operand']
  #allocation7 [shape = 'f32[32,212]{1,0:T(8,128)}', space=vmem, size = 0x8000, scoped, tag = 'scratch operand']
  #allocation8 [shape = 'f32[32,49]{1,0:T(8,128)}', space=vmem, size = 0x4000, scoped, tag = 'scratch operand']
  #allocation9 [shape = 'f32[2,784]{1,0:T(2,128)}', space=vmem, size = 0x1c00, scoped, tag = 'scratch operand']
  %s0 = inlined_call_operand.vmem [shape: f32[2,784], index: 0, kind: input, shape index: {}]
  %s1 = inlined_call_operand.vmem [shape: f32[16,18], index: 1, kind: input, shape index: {}]
  %s2 = inlined_call_operand.vmem [shape: f32[16,1], index: 2, kind: input, shape index: {}]
  %s3 = inlined_call_operand.vmem [shape: f32[16,1], index: 3, kind: input, shape index: {}]
  %s4 = inlined_call_operand.vmem [shape: f32[16,1], index: 4, kind: input, shape index: {}]
  %s5 = inlined_call_operand.vmem [shape: f32[16,16], index: 5, kind: input, shape index: {}]
  %s6 = inlined_call_operand.vmem [shape: f32[32,144], index: 6, kind: input, shape index: {}]
  %s7 = inlined_call_operand.vmem [shape: f32[32,1], index: 7, kind: input, shape index: {}]
  %s8 = inlined_call_operand.vmem [shape: f32[32,1], index: 8, kind: input, shape index: {}]
  %s9 = inlined_call_operand.vmem [shape: f32[32,1], index: 9, kind: input, shape index: {}]
  %s10 = inlined_call_operand.vmem [shape: f32[32,32], index: 10, kind: input, shape index: {}]
  %s11 = inlined_call_operand.vmem [shape: f32[784,64], index: 11, kind: input, shape index: {}]
  %s12 = inlined_call_operand.vmem [shape: f32[1,64], index: 12, kind: input, shape index: {}]
  %s13 = inlined_call_operand.vmem [shape: f32[64,10], index: 13, kind: input, shape index: {}]
  %s14 = inlined_call_operand.vmem [shape: f32[1,10], index: 14, kind: input, shape index: {}]
  %s15 = inlined_call_operand.vmem [shape: f32[9,784], index: 15, kind: input, shape index: {}]
  %s16 = inlined_call_operand.vmem [shape: f32[9,196], index: 16, kind: input, shape index: {}]
  %s17 = inlined_call_operand.vmem [shape: f32[784,196], index: 17, kind: input, shape index: {}]
  %s18 = inlined_call_operand.vmem [shape: f32[196,49], index: 18, kind: input, shape index: {}]
  %s19 = inlined_call_operand.hbm [shape: f32[2,10], index: 19, kind: output, shape index: {}]
  %s20 = sld [smem:[#allocation0]]
  $region86: #{_forward.1} parent=0
    _
  %s22 = ssub.s32 1, %s20
  %s23 = scalar_select 0, %s22, %s20
  $region1: #{_forward.1} parent=0
    #allocation10 [shape = 'u8[1024]{0}', space=vmem, size = 0x400, scoped, tag = 'output window, operand 0, single buffered']
    #allocation11 [shape = 's32[1]{0}', space=sflag, size = 0x4, scoped, tag = 'scoped memory for _forward.1']
    %24 = vsyncpa [#allocation11], 0
    // Predicated region
    $region2: #{_forward.1} parent=1 // pred_check
      _
    $region3: #{_forward.1} parent=1 // pred_check_branch
      %26 = sbr.rel (0) target = $region5
    $region4: #{_forward.1} parent=1 // pred_region
      _
    $region5: #{_forward.1} parent=1 // pred_fallthru
      _
    // Predicated region
    $region6: #{_forward.1} parent=1 // pred_check
      _
    $region7: #{_forward.1} parent=1 // pred_check_branch
      %28 = sbr.rel (0) target = $region9
    $region8: #{_forward.1} parent=1 // pred_region
      _
    $region9: #{_forward.1} parent=1 // pred_fallthru
      _
    // Predicated region
    $region10: #{_forward.1} parent=1 // pred_check
      _
    $region11: #{_forward.1} parent=1 // pred_check_branch
      %30 = sbr.rel (0) target = $region13
    $region12: #{_forward.1} parent=1 // pred_region
      _
    $region13: #{_forward.1} parent=1 // pred_fallthru
      _
    // Predicated region
    $region14: #{_forward.1} parent=1 // pred_check
      _
    $region15: #{_forward.1} parent=1 // pred_check_branch
      %32 = sbr.rel (0) target = $region17
    $region16: #{_forward.1} parent=1 // pred_region
      _
    $region17: #{_forward.1} parent=1 // pred_fallthru
      _
    // Predicated region
    $region18: #{_forward.1} parent=1 // pred_check
      _
    $region19: #{_forward.1} parent=1 // pred_check_branch
      %34 = sbr.rel (0) target = $region21
    $region20: #{_forward.1} parent=1 // pred_region
      _
    $region21: #{_forward.1} parent=1 // pred_fallthru
      _
    // Predicated region
    $region22: #{_forward.1} parent=1 // pred_check
      _
    $region23: #{_forward.1} parent=1 // pred_check_branch
      %36 = sbr.rel (0) target = $region25
    $region24: #{_forward.1} parent=1 // pred_region
      _
    $region25: #{_forward.1} parent=1 // pred_fallthru
      _
    // Predicated region
    $region26: #{_forward.1} parent=1 // pred_check
      _
    $region27: #{_forward.1} parent=1 // pred_check_branch
      %38 = sbr.rel (0) target = $region29
    $region28: #{_forward.1} parent=1 // pred_region
      _
    $region29: #{_forward.1} parent=1 // pred_fallthru
      _
    // Predicated region
    $region30: #{_forward.1} parent=1 // pred_check
      _
    $region31: #{_forward.1} parent=1 // pred_check_branch
      %40 = sbr.rel (0) target = $region33
    $region32: #{_forward.1} parent=1 // pred_region
      _
    $region33: #{_forward.1} parent=1 // pred_fallthru
      _
    // Predicated region
    $region34: #{_forward.1} parent=1 // pred_check
      _
    $region35: #{_forward.1} parent=1 // pred_check_branch
      %42 = sbr.rel (0) target = $region37
    $region36: #{_forward.1} parent=1 // pred_region
      _
    $region37: #{_forward.1} parent=1 // pred_fallthru
      _
    // Predicated region
    $region38: #{_forward.1} parent=1 // pred_check
      _
    $region39: #{_forward.1} parent=1 // pred_check_branch
      %44 = sbr.rel (0) target = $region41
    $region40: #{_forward.1} parent=1 // pred_region
      _
    $region41: #{_forward.1} parent=1 // pred_fallthru
      _
    // Predicated region
    $region42: #{_forward.1} parent=1 // pred_check
      _
    $region43: #{_forward.1} parent=1 // pred_check_branch
      %46 = sbr.rel (0) target = $region45
    $region44: #{_forward.1} parent=1 // pred_region
      _
    $region45: #{_forward.1} parent=1 // pred_fallthru
      _
    // Predicated region
    $region46: #{_forward.1} parent=1 // pred_check
      _
    $region47: #{_forward.1} parent=1 // pred_check_branch
      %48 = sbr.rel (0) target = $region49
    $region48: #{_forward.1} parent=1 // pred_region
      _
    $region49: #{_forward.1} parent=1 // pred_fallthru
      _
    // Predicated region
    $region50: #{_forward.1} parent=1 // pred_check
      _
    $region51: #{_forward.1} parent=1 // pred_check_branch
      %50 = sbr.rel (0) target = $region53
    $region52: #{_forward.1} parent=1 // pred_region
      _
    $region53: #{_forward.1} parent=1 // pred_fallthru
      _
    // Predicated region
    $region54: #{_forward.1} parent=1 // pred_check
      _
    $region55: #{_forward.1} parent=1 // pred_check_branch
      %52 = sbr.rel (0) target = $region57
    $region56: #{_forward.1} parent=1 // pred_region
      _
    $region57: #{_forward.1} parent=1 // pred_fallthru
      _
    // Predicated region
    $region58: #{_forward.1} parent=1 // pred_check
      _
    $region59: #{_forward.1} parent=1 // pred_check_branch
      %54 = sbr.rel (0) target = $region61
    $region60: #{_forward.1} parent=1 // pred_region
      _
    $region61: #{_forward.1} parent=1 // pred_fallthru
      _
    // Predicated region
    $region62: #{_forward.1} parent=1 // pred_check
      _
    $region63: #{_forward.1} parent=1 // pred_check_branch
      %56 = sbr.rel (0) target = $region65
    $region64: #{_forward.1} parent=1 // pred_region
      _
    $region65: #{_forward.1} parent=1 // pred_fallthru
      _
    // Predicated region
    $region66: #{_forward.1} parent=1 // pred_check
      _
    $region67: #{_forward.1} parent=1 // pred_check_branch
      %58 = sbr.rel (0) target = $region69
    $region68: #{_forward.1} parent=1 // pred_region
      _
    $region69: #{_forward.1} parent=1 // pred_fallthru
      _
    // Predicated region
    $region70: #{_forward.1} parent=1 // pred_check
      _
    $region71: #{_forward.1} parent=1 // pred_check_branch
      %60 = sbr.rel (0) target = $region73
    $region72: #{_forward.1} parent=1 // pred_region
      _
    $region73: #{_forward.1} parent=1 // pred_fallthru
      _
    // Predicated region
    $region74: #{_forward.1} parent=1 // pred_check
      _
    $region75: #{_forward.1} parent=1 // pred_check_branch
      %62 = sbr.rel (0) target = $region77
    $region76: #{_forward.1} parent=1 // pred_region
      _
    $region77: #{_forward.1} parent=1 // pred_fallthru
      _
    %vm63 = vcmask 254976
    %64 = vst.msk [vmem:[#allocation2] sm:$0x3] %vm63, 0.0
    %v65 = vld [vmem:[%s0] sm:$0xff]
    %v66 = vld [vmem:[%s0 + $0x8] sm:$0x3f]
    %69 = vrot.lane.b32.xlu0 %v65, 32
    %v70 = vpop.permute.xlu0 %69
    %71 = vrot.lane.b32.xlu0 %v66, 32
    %v72 = vpop.permute.xlu0 %71
    %v73 = vrot.slane %v70, 6
    %v74 = vrot.slane %v72, 6
    %vm75 = vcmask 261120
    %v76 = vsel %vm75, %v73, %v70
    %vm77 = vcmask 1041408
    %v78 = vsel %vm77, %v73, %v74
    %v79 = vsel %vm75, %v78, %v72
    %vm82 = vcmask 1041664
    %vm83 = vcmask 1043458
    %vm84 = vmor %vm83, %vm82
    %vm85 = vcmask 1045508
    %vm86 = vmor %vm85, %vm84
    %vm87 = vcmask 1047558
    %vm88 = vmor %vm87, %vm86
    %89 = vst.msk [vmem:[#allocation2] sm:$0xff] %vm88, %v76
    %vm90 = vmor %vm83, %vm77
    %vm91 = vcmask 390148
    %vm92 = vmor %vm91, %vm90
    %93 = vst.msk [vmem:[#allocation2 + $0x8] sm:$0x3f] %vm92, %v79
    %vm94 = vcmask 648576
    %95 = vst.msk [vmem:[#allocation2 + $0xc] sm:$0x3] %vm94, 0.0
    %v96 = vld [vmem:[#allocation2] sm:$0xff]
    %v97 = vld [vmem:[#allocation2 + $0x8] sm:$0x3f]
    %v98 = vld [vmem:[%s15] ss:$8 sm:$0xf]
    %v99 = vld [vmem:[%s15] ss:$8 sm:$0x70]
    %v100 = vor.u32 %v98, %v99
    %v102 = vlaneseq
    %v103 = vshrl.u32 %v102, 7
    %v104 = vsub.s32 0, %v103
    %v105 = vrot.slane %v100, %v104
    %v106 = vlaneseq
    %v107 = vshrl.u32 %v106, 7
    %v108 = vsub.s32 1, %v107
    %v109 = vrot.slane %v100, %v108
    %v110 = vlaneseq
    %v111 = vshrl.u32 %v110, 7
    %v112 = vsub.s32 2, %v111
    %v113 = vrot.slane %v100, %v112
    %v114 = vlaneseq
    %v115 = vshrl.u32 %v114, 7
    %v116 = vsub.s32 3, %v115
    %v117 = vrot.slane %v100, %v116
    %v118 = vlaneseq
    %v119 = vshrl.u32 %v118, 7
    %v120 = vsub.s32 4, %v119
    %v121 = vrot.slane %v100, %v120
    %v122 = vlaneseq
    %v123 = vshrl.u32 %v122, 7
    %v124 = vsub.s32 5, %v123
    %v125 = vrot.slane %v100, %v124
    %v126 = vlaneseq
    %v127 = vshrl.u32 %v126, 7
    %v128 = vsub.s32 6, %v127
    %v129 = vrot.slane %v100, %v128
    %v130 = vcombine.low %v105, %v109
    %v131 = vcombine.low %v113, %v117
    %v133 = vunpack.c.l.s4 1983009808
    %v134 = vunpack.c.0.s8 %v133
    %v135 = vlaneseq
    %v136 = vshrl.u32 %v135, 7
    %v137 = vsub.s32 %v134, %v136
    %v138 = vrot.slane %v130, %v137
    %v140 = vunpack.c.l.s4 1983009808
    %v141 = vunpack.c.0.s8 %v140
    %v142 = vlaneseq
    %v143 = vshrl.u32 %v142, 7
    %v144 = vsub.s32 %v141, %v143
    %v145 = vrot.slane %v131, %v144
    %v146 = vcombine.low %v138, %v145
    %v147 = vcombine.low %v121, %v125
    %v149 = vunpack.c.l.s4 1983009808
    %v150 = vunpack.c.0.s8 %v149
    %v151 = vlaneseq
    %v152 = vshrl.u32 %v151, 7
    %v153 = vsub.s32 %v150, %v152
    %v154 = vrot.slane %v147, %v153
    %v156 = vunpack.c.l.s4 1983009808
    %v157 = vunpack.c.0.s8 %v156
    %v158 = vlaneseq
    %v159 = vshrl.u32 %v158, 7
    %v160 = vsub.s32 %v157, %v159
    %v161 = vrot.slane %v129, %v160
    %v162 = vcombine.low %v154, %v161
    %163 = vrot.lane.b32.xlu0 %v146, 3
    %v164 = vpop.permute.xlu0 %163
    %165 = vrot.lane.b32.xlu0 %v162, 3
    %v166 = vpop.permute.xlu0 %165
    %v167 = vrot.slane %v164, 6
    %v168 = vrot.slane %v166, 6
    %vm169 = vcmask 23552
    %v170 = vsel %vm169, %v167, %v164
    %v171 = vsel %vm77, %v167, %v168
    %v172 = vsel %vm169, %v171, %v166
    %v175 = vmul.f32 %v96, %v170
    %v176 = vmul.f32 %v97, %v172
    %v179 = vcombine.high %v175, %v175
    %v181 = vunpack.c.l.s4 1983009808
    %v182 = vunpack.c.0.s8 %v181
    %v183 = vlaneseq
    %v184 = vshrl.u32 %v183, 7
    %v185 = vsub.s32 %v182, %v184
    %v186 = vrot.slane %v175, %v185
    %v188 = vunpack.c.l.s4 1983009808
    %v189 = vunpack.c.0.s8 %v188
    %v190 = vlaneseq
    %v191 = vshrl.u32 %v190, 7
    %v192 = vsub.s32 %v189, %v191
    %v193 = vrot.slane %v179, %v192
    %v194 = vcombine.high %v186, %v186
    %v195 = vcombine.high %v193, %v193
    %v196 = vcombine.high %v176, %v176
    %v198 = vunpack.c.l.s4 1983009808
    %v199 = vunpack.c.0.s8 %v198
    %v200 = vlaneseq
    %v201 = vshrl.u32 %v200, 7
    %v202 = vsub.s32 %v199, %v201
    %v203 = vrot.slane %v176, %v202
    %v205 = vunpack.c.l.s4 1983009808
    %v206 = vunpack.c.0.s8 %v205
    %v207 = vlaneseq
    %v208 = vshrl.u32 %v207, 7
    %v209 = vsub.s32 %v206, %v208
    %v210 = vrot.slane %v196, %v209
    %v211 = vcombine.high %v203, %v203
    %212 = vrot.lane.b32.xlu0 %v186, 125
    %v213 = vpop.permute.xlu0 %212
    %214 = vrot.lane.b32.xlu0 %v194, 125
    %v215 = vpop.permute.xlu0 %214
    %216 = vrot.lane.b32.xlu0 %v193, 125
    %v217 = vpop.permute.xlu0 %216
    %218 = vrot.lane.b32.xlu0 %v195, 125
    %v219 = vpop.permute.xlu0 %218
    %220 = vrot.lane.b32.xlu0 %v203, 125
    %v221 = vpop.permute.xlu0 %220
    %222 = vrot.lane.b32.xlu0 %v211, 125
    %v223 = vpop.permute.xlu0 %222
    %224 = vrot.lane.b32.xlu0 %v210, 125
    %v225 = vpop.permute.xlu0 %224
    %vm226 = vcmask 1022976
    %v227 = vsel %vm226, %v213, %v215
    %v228 = vsel %vm226, %v215, %v217
    %v229 = vsel %vm226, %v217, %v219
    %v230 = vsel %vm226, %v219, %v221
    %v231 = vsel %vm226, %v221, %v223
    %v232 = vsel %vm226, %v223, %v225
    %240 = vst [vmem:[#allocation3] sm:$0x3] %v227
    %241 = vst [vmem:[#allocation3 + $0x8] sm:$0x3] %v228
    %242 = vst [vmem:[#allocation3 + $0x10] sm:$0x3] %v229
    %243 = vst [vmem:[#allocation3 + $0x18] sm:$0x3] %v230
    %244 = vst [vmem:[#allocation3 + $0x20] sm:$0x3] %v231
    %245 = vst [vmem:[#allocation3 + $0x28] sm:$0x3] %v232
    %vm246 = vcmask 123904
    %247 = vst.msk [vmem:[#allocation3 + $0x30] sm:$0x3] %vm246, %v225
    %v248 = vld [vmem:[#allocation2] sm:$0xff]
    %v249 = vld [vmem:[#allocation2 + $0x8] sm:$0x3f]
    %s250 = scalar_lea.vmem %s15, 1
    %v251 = vld [vmem:[%s250] ss:$8 sm:$0xf]
    %v252 = vld [vmem:[%s250] ss:$8 sm:$0x70]
    %v253 = vor.u32 %v251, %v252
    %v255 = vlaneseq
    %v256 = vshrl.u32 %v255, 7
    %v257 = vsub.s32 0, %v256
    %v258 = vrot.slane %v253, %v257
    %v259 = vlaneseq
    %v260 = vshrl.u32 %v259, 7
    %v261 = vsub.s32 1, %v260
    %v262 = vrot.slane %v253, %v261
    %v263 = vlaneseq
    %v264 = vshrl.u32 %v263, 7
    %v265 = vsub.s32 2, %v264
    %v266 = vrot.slane %v253, %v265
    %v267 = vlaneseq
    %v268 = vshrl.u32 %v267, 7
    %v269 = vsub.s32 3, %v268
    %v270 = vrot.slane %v253, %v269
    %v271 = vlaneseq
    %v272 = vshrl.u32 %v271, 7
    %v273 = vsub.s32 4, %v272
    %v274 = vrot.slane %v253, %v273
    %v275 = vlaneseq
    %v276 = vshrl.u32 %v275, 7
    %v277 = vsub.s32 5, %v276
    %v278 = vrot.slane %v253, %v277
    %v279 = vlaneseq
    %v280 = vshrl.u32 %v279, 7
    %v281 = vsub.s32 6, %v280
    %v282 = vrot.slane %v253, %v281
    %v283 = vcombine.low %v258, %v262
    %v284 = vcombine.low %v266, %v270
    %v286 = vunpack.c.l.s4 1983009808
    %v287 = vunpack.c.0.s8 %v286
    %v288 = vlaneseq
    %v289 = vshrl.u32 %v288, 7
    %v290 = vsub.s32 %v287, %v289
    %v291 = vrot.slane %v283, %v290
    %v293 = vunpack.c.l.s4 1983009808
    %v294 = vunpack.c.0.s8 %v293
    %v295 = vlaneseq
    %v296 = vshrl.u32 %v295, 7
    %v297 = vsub.s32 %v294, %v296
    %v298 = vrot.slane %v284, %v297
    %v299 = vcombine.low %v291, %v298
    %v300 = vcombine.low %v274, %v278
    %v302 = vunpack.c.l.s4 1983009808
    %v303 = vunpack.c.0.s8 %v302
    %v304 = vlaneseq
    %v305 = vshrl.u32 %v304, 7
    %v306 = vsub.s32 %v303, %v305
    %v307 = vrot.slane %v300, %v306
    %v309 = vunpack.c.l.s4 1983009808
    %v310 = vunpack.c.0.s8 %v309
    %v311 = vlaneseq
    %v312 = vshrl.u32 %v311, 7
    %v313 = vsub.s32 %v310, %v312
    %v314 = vrot.slane %v282, %v313
    %v315 = vcombine.low %v307, %v314
    %316 = vrot.lane.b32.xlu0 %v299, 4
    %v317 = vpop.permute.xlu0 %316
    %318 = vrot.lane.b32.xlu0 %v315, 4
    %v319 = vpop.permute.xlu0 %318
    %v320 = vrot.slane %v317, 6
    %v321 = vrot.slane %v319, 6
    %vm322 = vcmask 31744
    %v323 = vsel %vm322, %v320, %v317
    %v324 = vsel %vm77, %v320, %v321
    %v325 = vsel %vm322, %v324, %v319
    %v328 = vmul.f32 %v248, %v323
    %v329 = vmul.f32 %v249, %v325
    %v332 = vcombine.low %v328, %v328
    %v334 = vunpack.c.l.s4 1983009808
    %v335 = vunpack.c.0.s8 %v334
    %v336 = vlaneseq
    %v337 = vshrl.u32 %v336, 7
    %v338 = vsub.s32 %v335, %v337
    %v339 = vrot.slane %v332, %v338
    %v341 = vunpack.c.l.s4 1983009808
    %v342 = vunpack.c.0.s8 %v341
    %v343 = vlaneseq
    %v344 = vshrl.u32 %v343, 7
    %v345 = vsub.s32 %v342, %v344
    %v346 = vrot.slane %v328, %v345
    %v347 = vcombine.high %v339, %v339
    %v348 = vcombine.high %v346, %v346
    %v349 = vcombine.low %v329, %v329
    %v351 = vunpack.c.l.s4 1983009808
    %v352 = vunpack.c.0.s8 %v351
    %v353 = vlaneseq
    %v354 = vshrl.u32 %v353, 7
    %v355 = vsub.s32 %v352, %v354
    %v356 = vrot.slane %v349, %v355
    %v358 = vunpack.c.l.s4 1983009808
    %v359 = vunpack.c.0.s8 %v358
    %v360 = vlaneseq
    %v361 = vshrl.u32 %v360, 7
    %v362 = vsub.s32 %v359, %v361
    %v363 = vrot.slane %v329, %v362
    %v364 = vcombine.high %v356, %v356
    %365 = vrot.lane.b32.xlu0 %v339, 124
    %v366 = vpop.permute.xlu0 %365
    %367 = vrot.lane.b32.xlu0 %v347, 124
    %v368 = vpop.permute.xlu0 %367
    %369 = vrot.lane.b32.xlu0 %v346, 124
    %v370 = vpop.permute.xlu0 %369
    %371 = vrot.lane.b32.xlu0 %v348, 124
    %v372 = vpop.permute.xlu0 %371
    %373 = vrot.lane.b32.xlu0 %v356, 124
    %v374 = vpop.permute.xlu0 %373
    %375 = vrot.lane.b32.xlu0 %v364, 124
    %v376 = vpop.permute.xlu0 %375
    %377 = vrot.lane.b32.xlu0 %v363, 124
    %v378 = vpop.permute.xlu0 %377
    %vm379 = vcmask 1014784
    %v380 = vsel %vm379, %v366, %v368
    %v381 = vsel %vm379, %v368, %v370
    %v382 = vsel %vm379, %v370, %v372
    %v383 = vsel %vm379, %v372, %v374
    %v384 = vsel %vm379, %v374, %v376
    %v385 = vsel %vm379, %v376, %v378
    %393 = vst [vmem:[#allocation3] sm:$0xc] %v380
    %394 = vst [vmem:[#allocation3 + $0x8] sm:$0xc] %v381
    %395 = vst [vmem:[#allocation3 + $0x10] sm:$0xc] %v382
    %396 = vst [vmem:[#allocation3 + $0x18] sm:$0xc] %v383
    %397 = vst [vmem:[#allocation3 + $0x20] sm:$0xc] %v384
    %398 = vst [vmem:[#allocation3 + $0x28] sm:$0xc] %v385
    %vm399 = vcmask 125954
    %400 = vst.msk [vmem:[#allocation3 + $0x30] sm:$0xc] %vm399, %v378
    %v401 = vld [vmem:[#allocation2] sm:$0xff]
    %v402 = vld [vmem:[#allocation2 + $0x8] sm:$0x3f]
    %s403 = scalar_lea.vmem %s15, 2
    %v404 = vld [vmem:[%s403] ss:$8 sm:$0xf]
    %v405 = vld [vmem:[%s403] ss:$8 sm:$0x70]
    %v406 = vor.u32 %v404, %v405
    %v408 = vlaneseq
    %v409 = vshrl.u32 %v408, 7
    %v410 = vsub.s32 0, %v409
    %v411 = vrot.slane %v406, %v410
    %v412 = vlaneseq
    %v413 = vshrl.u32 %v412, 7
    %v414 = vsub.s32 1, %v413
    %v415 = vrot.slane %v406, %v414
    %v416 = vlaneseq
    %v417 = vshrl.u32 %v416, 7
    %v418 = vsub.s32 2, %v417
    %v419 = vrot.slane %v406, %v418
    %v420 = vlaneseq
    %v421 = vshrl.u32 %v420, 7
    %v422 = vsub.s32 3, %v421
    %v423 = vrot.slane %v406, %v422
    %v424 = vlaneseq
    %v425 = vshrl.u32 %v424, 7
    %v426 = vsub.s32 4, %v425
    %v427 = vrot.slane %v406, %v426
    %v428 = vlaneseq
    %v429 = vshrl.u32 %v428, 7
    %v430 = vsub.s32 5, %v429
    %v431 = vrot.slane %v406, %v430
    %v432 = vlaneseq
    %v433 = vshrl.u32 %v432, 7
    %v434 = vsub.s32 6, %v433
    %v435 = vrot.slane %v406, %v434
    %v436 = vcombine.low %v411, %v415
    %v437 = vcombine.low %v419, %v423
    %v439 = vunpack.c.l.s4 1983009808
    %v440 = vunpack.c.0.s8 %v439
    %v441 = vlaneseq
    %v442 = vshrl.u32 %v441, 7
    %v443 = vsub.s32 %v440, %v442
    %v444 = vrot.slane %v436, %v443
    %v446 = vunpack.c.l.s4 1983009808
    %v447 = vunpack.c.0.s8 %v446
    %v448 = vlaneseq
    %v449 = vshrl.u32 %v448, 7
    %v450 = vsub.s32 %v447, %v449
    %v451 = vrot.slane %v437, %v450
    %v452 = vcombine.low %v444, %v451
    %v453 = vcombine.low %v427, %v431
    %v455 = vunpack.c.l.s4 1983009808
    %v456 = vunpack.c.0.s8 %v455
    %v457 = vlaneseq
    %v458 = vshrl.u32 %v457, 7
    %v459 = vsub.s32 %v456, %v458
    %v460 = vrot.slane %v453, %v459
    %v462 = vunpack.c.l.s4 1983009808
    %v463 = vunpack.c.0.s8 %v462
    %v464 = vlaneseq
    %v465 = vshrl.u32 %v464, 7
    %v466 = vsub.s32 %v463, %v465
    %v467 = vrot.slane %v435, %v466
    %v468 = vcombine.low %v460, %v467
    %469 = vrot.lane.b32.xlu0 %v452, 5
    %v470 = vpop.permute.xlu0 %469
    %471 = vrot.lane.b32.xlu0 %v468, 5
    %v472 = vpop.permute.xlu0 %471
    %v473 = vrot.slane %v470, 6
    %v474 = vrot.slane %v472, 6
    %vm475 = vcmask 39936
    %v476 = vsel %vm475, %v473, %v470
    %v477 = vsel %vm77, %v473, %v474
    %v478 = vsel %vm475, %v477, %v472
    %v481 = vmul.f32 %v401, %v476
    %v482 = vmul.f32 %v402, %v478
    %v485 = vcombine.high %v481, %v481
    %v487 = vunpack.c.l.s4 1983009808
    %v488 = vunpack.c.0.s8 %v487
    %v489 = vlaneseq
    %v490 = vshrl.u32 %v489, 7
    %v491 = vsub.s32 %v488, %v490
    %v492 = vrot.slane %v481, %v491
    %v494 = vunpack.c.l.s4 1983009808
    %v495 = vunpack.c.0.s8 %v494
    %v496 = vlaneseq
    %v497 = vshrl.u32 %v496, 7
    %v498 = vsub.s32 %v495, %v497
    %v499 = vrot.slane %v485, %v498
    %v500 = vcombine.low %v492, %v492
    %v501 = vcombine.low %v499, %v499
    %v502 = vcombine.high %v482, %v482
    %v504 = vunpack.c.l.s4 1983009808
    %v505 = vunpack.c.0.s8 %v504
    %v506 = vlaneseq
    %v507 = vshrl.u32 %v506, 7
    %v508 = vsub.s32 %v505, %v507
    %v509 = vrot.slane %v482, %v508
    %v511 = vunpack.c.l.s4 1983009808
    %v512 = vunpack.c.0.s8 %v511
    %v513 = vlaneseq
    %v514 = vshrl.u32 %v513, 7
    %v515 = vsub.s32 %v512, %v514
    %v516 = vrot.slane %v502, %v515
    %v517 = vcombine.low %v509, %v509
    %v518 = vcombine.low %v516, %v516
    %519 = vrot.lane.b32.xlu0 %v500, 123
    %v520 = vpop.permute.xlu0 %519
    %521 = vrot.lane.b32.xlu0 %v492, 123
    %v522 = vpop.permute.xlu0 %521
    %523 = vrot.lane.b32.xlu0 %v501, 123
    %v524 = vpop.permute.xlu0 %523
    %525 = vrot.lane.b32.xlu0 %v499, 123
    %v526 = vpop.permute.xlu0 %525
    %527 = vrot.lane.b32.xlu0 %v517, 123
    %v528 = vpop.permute.xlu0 %527
    %529 = vrot.lane.b32.xlu0 %v509, 123
    %v530 = vpop.permute.xlu0 %529
    %531 = vrot.lane.b32.xlu0 %v518, 123
    %v532 = vpop.permute.xlu0 %531
    %vm533 = vcmask 1006592
    %v534 = vsel %vm533, %v520, %v522
    %v535 = vsel %vm533, %v522, %v524
    %v536 = vsel %vm533, %v524, %v526
    %v537 = vsel %vm533, %v526, %v528
    %v538 = vsel %vm533, %v528, %v530
    %v539 = vsel %vm533, %v530, %v532
    %547 = vst [vmem:[#allocation3] sm:$0x30] %v534
    %548 = vst [vmem:[#allocation3 + $0x8] sm:$0x30] %v535
    %549 = vst [vmem:[#allocation3 + $0x10] sm:$0x30] %v536
    %550 = vst [vmem:[#allocation3 + $0x18] sm:$0x30] %v537
    %551 = vst [vmem:[#allocation3 + $0x20] sm:$0x30] %v538
    %552 = vst [vmem:[#allocation3 + $0x28] sm:$0x30] %v539
    %vm553 = vcmask 128004
    %554 = vst.msk [vmem:[#allocation3 + $0x30] sm:$0x30] %vm553, %v532
    %v555 = vld [vmem:[#allocation2] sm:$0xff]
    %v556 = vld [vmem:[#allocation2 + $0x8] sm:$0x3f]
    %s557 = scalar_lea.vmem %s15, 3
    %v558 = vld [vmem:[%s557] ss:$8 sm:$0xf]
    %v559 = vld [vmem:[%s557] ss:$8 sm:$0x70]
    %v560 = vor.u32 %v558, %v559
    %v562 = vlaneseq
    %v563 = vshrl.u32 %v562, 7
    %v564 = vsub.s32 0, %v563
    %v565 = vrot.slane %v560, %v564
    %v566 = vlaneseq
    %v567 = vshrl.u32 %v566, 7
    %v568 = vsub.s32 1, %v567
    %v569 = vrot.slane %v560, %v568
    %v570 = vlaneseq
    %v571 = vshrl.u32 %v570, 7
    %v572 = vsub.s32 2, %v571
    %v573 = vrot.slane %v560, %v572
    %v574 = vlaneseq
    %v575 = vshrl.u32 %v574, 7
    %v576 = vsub.s32 3, %v575
    %v577 = vrot.slane %v560, %v576
    %v578 = vlaneseq
    %v579 = vshrl.u32 %v578, 7
    %v580 = vsub.s32 4, %v579
    %v581 = vrot.slane %v560, %v580
    %v582 = vlaneseq
    %v583 = vshrl.u32 %v582, 7
    %v584 = vsub.s32 5, %v583
    %v585 = vrot.slane %v560, %v584
    %v586 = vlaneseq
    %v587 = vshrl.u32 %v586, 7
    %v588 = vsub.s32 6, %v587
    %v589 = vrot.slane %v560, %v588
    %v590 = vcombine.low %v565, %v569
    %v591 = vcombine.low %v573, %v577
    %v593 = vunpack.c.l.s4 1983009808
    %v594 = vunpack.c.0.s8 %v593
    %v595 = vlaneseq
    %v596 = vshrl.u32 %v595, 7
    %v597 = vsub.s32 %v594, %v596
    %v598 = vrot.slane %v590, %v597
    %v600 = vunpack.c.l.s4 1983009808
    %v601 = vunpack.c.0.s8 %v600
    %v602 = vlaneseq
    %v603 = vshrl.u32 %v602, 7
    %v604 = vsub.s32 %v601, %v603
    %v605 = vrot.slane %v591, %v604
    %v606 = vcombine.low %v598, %v605
    %v607 = vcombine.low %v581, %v585
    %v609 = vunpack.c.l.s4 1983009808
    %v610 = vunpack.c.0.s8 %v609
    %v611 = vlaneseq
    %v612 = vshrl.u32 %v611, 7
    %v613 = vsub.s32 %v610, %v612
    %v614 = vrot.slane %v607, %v613
    %v616 = vunpack.c.l.s4 1983009808
    %v617 = vunpack.c.0.s8 %v616
    %v618 = vlaneseq
    %v619 = vshrl.u32 %v618, 7
    %v620 = vsub.s32 %v617, %v619
    %v621 = vrot.slane %v589, %v620
    %v622 = vcombine.low %v614, %v621
    %623 = vrot.lane.b32.xlu0 %v606, 31
    %v624 = vpop.permute.xlu0 %623
    %625 = vrot.lane.b32.xlu0 %v622, 31
    %v626 = vpop.permute.xlu0 %625
    %v627 = vrot.slane %v624, 6
    %v628 = vrot.slane %v626, 6
    %vm629 = vcmask 252928
    %v630 = vsel %vm629, %v627, %v624
    %v631 = vsel %vm77, %v627, %v628
    %v632 = vsel %vm629, %v631, %v626
    %v635 = vmul.f32 %v555, %v630
    %v636 = vmul.f32 %v556, %v632
    %v639 = vcombine.low %v635, %v635
    %v641 = vunpack.c.l.s4 1983009808
    %v642 = vunpack.c.0.s8 %v641
    %v643 = vlaneseq
    %v644 = vshrl.u32 %v643, 7
    %v645 = vsub.s32 %v642, %v644
    %v646 = vrot.slane %v639, %v645
    %v648 = vunpack.c.l.s4 1983009808
    %v649 = vunpack.c.0.s8 %v648
    %v650 = vlaneseq
    %v651 = vshrl.u32 %v650, 7
    %v652 = vsub.s32 %v649, %v651
    %v653 = vrot.slane %v635, %v652
    %v654 = vcombine.low %v646, %v646
    %v655 = vcombine.low %v653, %v653
    %v656 = vcombine.low %v636, %v636
    %v658 = vunpack.c.l.s4 1983009808
    %v659 = vunpack.c.0.s8 %v658
    %v660 = vlaneseq
    %v661 = vshrl.u32 %v660, 7
    %v662 = vsub.s32 %v659, %v661
    %v663 = vrot.slane %v656, %v662
    %v665 = vunpack.c.l.s4 1983009808
    %v666 = vunpack.c.0.s8 %v665
    %v667 = vlaneseq
    %v668 = vshrl.u32 %v667, 7
    %v669 = vsub.s32 %v666, %v668
    %v670 = vrot.slane %v636, %v669
    %v671 = vcombine.low %v663, %v663
    %v672 = vcombine.low %v670, %v670
    %673 = vrot.lane.b32.xlu0 %v654, 97
    %v674 = vpop.permute.xlu0 %673
    %675 = vrot.lane.b32.xlu0 %v646, 97
    %v676 = vpop.permute.xlu0 %675
    %677 = vrot.lane.b32.xlu0 %v655, 97
    %v678 = vpop.permute.xlu0 %677
    %679 = vrot.lane.b32.xlu0 %v653, 97
    %v680 = vpop.permute.xlu0 %679
    %681 = vrot.lane.b32.xlu0 %v671, 97
    %v682 = vpop.permute.xlu0 %681
    %683 = vrot.lane.b32.xlu0 %v663, 97
    %v684 = vpop.permute.xlu0 %683
    %685 = vrot.lane.b32.xlu0 %v672, 97
    %v686 = vpop.permute.xlu0 %685
    %vm687 = vcmask 793600
    %v688 = vsel %vm687, %v674, %v676
    %v689 = vsel %vm687, %v676, %v678
    %v690 = vsel %vm687, %v678, %v680
    %v691 = vsel %vm687, %v680, %v682
    %v692 = vsel %vm687, %v682, %v684
    %v693 = vsel %vm687, %v684, %v686
    %701 = vst [vmem:[#allocation3] sm:$0xc0] %v688
    %702 = vst [vmem:[#allocation3 + $0x8] sm:$0xc0] %v689
    %703 = vst [vmem:[#allocation3 + $0x10] sm:$0xc0] %v690
    %704 = vst [vmem:[#allocation3 + $0x18] sm:$0xc0] %v691
    %705 = vst [vmem:[#allocation3 + $0x20] sm:$0xc0] %v692
    %706 = vst [vmem:[#allocation3 + $0x28] sm:$0xc0] %v693
    %vm707 = vcmask 130054
    %708 = vst.msk [vmem:[#allocation3 + $0x30] sm:$0xc0] %vm707, %v686
    %v709 = vld [vmem:[#allocation2] sm:$0xff]
    %v710 = vld [vmem:[#allocation2 + $0x8] sm:$0x3f]
    %s711 = scalar_lea.vmem %s15, 4
    %v712 = vld [vmem:[%s711] ss:$8 sm:$0xf]
    %v713 = vld [vmem:[%s711] ss:$8 sm:$0x70]
    %v714 = vor.u32 %v712, %v713
    %v716 = vlaneseq
    %v717 = vshrl.u32 %v716, 7
    %v718 = vsub.s32 0, %v717
    %v719 = vrot.slane %v714, %v718
    %v720 = vlaneseq
    %v721 = vshrl.u32 %v720, 7
    %v722 = vsub.s32 1, %v721
    %v723 = vrot.slane %v714, %v722
    %v724 = vlaneseq
    %v725 = vshrl.u32 %v724, 7
    %v726 = vsub.s32 2, %v725
    %v727 = vrot.slane %v714, %v726
    %v728 = vlaneseq
    %v729 = vshrl.u32 %v728, 7
    %v730 = vsub.s32 3, %v729
    %v731 = vrot.slane %v714, %v730
    %v732 = vlaneseq
    %v733 = vshrl.u32 %v732, 7
    %v734 = vsub.s32 4, %v733
    %v735 = vrot.slane %v714, %v734
    %v736 = vlaneseq
    %v737 = vshrl.u32 %v736, 7
    %v738 = vsub.s32 5, %v737
    %v739 = vrot.slane %v714, %v738
    %v740 = vlaneseq
    %v741 = vshrl.u32 %v740, 7
    %v742 = vsub.s32 6, %v741
    %v743 = vrot.slane %v714, %v742
    %v744 = vcombine.low %v719, %v723
    %v745 = vcombine.low %v727, %v731
    %v747 = vunpack.c.l.s4 1983009808
    %v748 = vunpack.c.0.s8 %v747
    %v749 = vlaneseq
    %v750 = vshrl.u32 %v749, 7
    %v751 = vsub.s32 %v748, %v750
    %v752 = vrot.slane %v744, %v751
    %v754 = vunpack.c.l.s4 1983009808
    %v755 = vunpack.c.0.s8 %v754
    %v756 = vlaneseq
    %v757 = vshrl.u32 %v756, 7
    %v758 = vsub.s32 %v755, %v757
    %v759 = vrot.slane %v745, %v758
    %v760 = vcombine.low %v752, %v759
    %v761 = vcombine.low %v735, %v739
    %v763 = vunpack.c.l.s4 1983009808
    %v764 = vunpack.c.0.s8 %v763
    %v765 = vlaneseq
    %v766 = vshrl.u32 %v765, 7
    %v767 = vsub.s32 %v764, %v766
    %v768 = vrot.slane %v761, %v767
    %v770 = vunpack.c.l.s4 1983009808
    %v771 = vunpack.c.0.s8 %v770
    %v772 = vlaneseq
    %v773 = vshrl.u32 %v772, 7
    %v774 = vsub.s32 %v771, %v773
    %v775 = vrot.slane %v743, %v774
    %v776 = vcombine.low %v768, %v775
    %777 = vrot.lane.b32.xlu0 %v760, 32
    %v778 = vpop.permute.xlu0 %777
    %779 = vrot.lane.b32.xlu0 %v776, 32
    %v780 = vpop.permute.xlu0 %779
    %v781 = vrot.slane %v778, 6
    %v782 = vrot.slane %v780, 6
    %v783 = vsel %vm75, %v781, %v778
    %v784 = vsel %vm77, %v781, %v782
    %v785 = vsel %vm75, %v784, %v780
    %v788 = vmul.f32 %v709, %v783
    %v789 = vmul.f32 %v710, %v785
    %v792 = vcombine.high %v788, %v788
    %v794 = vunpack.c.l.s4 1983009808
    %v795 = vunpack.c.0.s8 %v794
    %v796 = vlaneseq
    %v797 = vshrl.u32 %v796, 7
    %v798 = vsub.s32 %v795, %v797
    %v799 = vrot.slane %v788, %v798
    %v801 = vunpack.c.l.s4 1983009808
    %v802 = vunpack.c.0.s8 %v801
    %v803 = vlaneseq
    %v804 = vshrl.u32 %v803, 7
    %v805 = vsub.s32 %v802, %v804
    %v806 = vrot.slane %v792, %v805
    %v807 = vcombine.high %v799, %v799
    %v808 = vcombine.high %v806, %v806
    %v809 = vcombine.high %v789, %v789
    %v811 = vunpack.c.l.s4 1983009808
    %v812 = vunpack.c.0.s8 %v811
    %v813 = vlaneseq
    %v814 = vshrl.u32 %v813, 7
    %v815 = vsub.s32 %v812, %v814
    %v816 = vrot.slane %v789, %v815
    %v818 = vunpack.c.l.s4 1983009808
    %v819 = vunpack.c.0.s8 %v818
    %v820 = vlaneseq
    %v821 = vshrl.u32 %v820, 7
    %v822 = vsub.s32 %v819, %v821
    %v823 = vrot.slane %v809, %v822
    %v824 = vcombine.high %v816, %v816
    %825 = vrot.lane.b32.xlu0 %v799, 96
    %v826 = vpop.permute.xlu0 %825
    %827 = vrot.lane.b32.xlu0 %v807, 96
    %v828 = vpop.permute.xlu0 %827
    %829 = vrot.lane.b32.xlu0 %v806, 96
    %v830 = vpop.permute.xlu0 %829
    %831 = vrot.lane.b32.xlu0 %v808, 96
    %v832 = vpop.permute.xlu0 %831
    %833 = vrot.lane.b32.xlu0 %v816, 96
    %v834 = vpop.permute.xlu0 %833
    %835 = vrot.lane.b32.xlu0 %v824, 96
    %v836 = vpop.permute.xlu0 %835
    %837 = vrot.lane.b32.xlu0 %v823, 96
    %v838 = vpop.permute.xlu0 %837
    %vm839 = vcmask 785408
    %v840 = vsel %vm839, %v826, %v828
    %v841 = vsel %vm839, %v828, %v830
    %v842 = vsel %vm839, %v830, %v832
    %v843 = vsel %vm839, %v832, %v834
    %v844 = vsel %vm839, %v834, %v836
    %v845 = vsel %vm839, %v836, %v838
    %853 = vst [vmem:[#allocation3 + $0x38] sm:$0x3] %v840
    %854 = vst [vmem:[#allocation3 + $0x40] sm:$0x3] %v841
    %855 = vst [vmem:[#allocation3 + $0x48] sm:$0x3] %v842
    %856 = vst [vmem:[#allocation3 + $0x50] sm:$0x3] %v843
    %857 = vst [vmem:[#allocation3 + $0x58] sm:$0x3] %v844
    %858 = vst [vmem:[#allocation3 + $0x60] sm:$0x3] %v845
    %859 = vst.msk [vmem:[#allocation3 + $0x68] sm:$0x3] %vm246, %v838
    %v860 = vld [vmem:[#allocation2] sm:$0xff]
    %v861 = vld [vmem:[#allocation2 + $0x8] sm:$0x3f]
    %s862 = scalar_lea.vmem %s15, 5
    %v863 = vld [vmem:[%s862] ss:$8 sm:$0xf]
    %v864 = vld [vmem:[%s862] ss:$8 sm:$0x70]
    %v865 = vor.u32 %v863, %v864
    %v867 = vlaneseq
    %v868 = vshrl.u32 %v867, 7
    %v869 = vsub.s32 0, %v868
    %v870 = vrot.slane %v865, %v869
    %v871 = vlaneseq
    %v872 = vshrl.u32 %v871, 7
    %v873 = vsub.s32 1, %v872
    %v874 = vrot.slane %v865, %v873
    %v875 = vlaneseq
    %v876 = vshrl.u32 %v875, 7
    %v877 = vsub.s32 2, %v876
    %v878 = vrot.slane %v865, %v877
    %v879 = vlaneseq
    %v880 = vshrl.u32 %v879, 7
    %v881 = vsub.s32 3, %v880
    %v882 = vrot.slane %v865, %v881
    %v883 = vlaneseq
    %v884 = vshrl.u32 %v883, 7
    %v885 = vsub.s32 4, %v884
    %v886 = vrot.slane %v865, %v885
    %v887 = vlaneseq
    %v888 = vshrl.u32 %v887, 7
    %v889 = vsub.s32 5, %v888
    %v890 = vrot.slane %v865, %v889
    %v891 = vlaneseq
    %v892 = vshrl.u32 %v891, 7
    %v893 = vsub.s32 6, %v892
    %v894 = vrot.slane %v865, %v893
    %v895 = vcombine.low %v870, %v874
    %v896 = vcombine.low %v878, %v882
    %v898 = vunpack.c.l.s4 1983009808
    %v899 = vunpack.c.0.s8 %v898
    %v900 = vlaneseq
    %v901 = vshrl.u32 %v900, 7
    %v902 = vsub.s32 %v899, %v901
    %v903 = vrot.slane %v895, %v902
    %v905 = vunpack.c.l.s4 1983009808
    %v906 = vunpack.c.0.s8 %v905
    %v907 = vlaneseq
    %v908 = vshrl.u32 %v907, 7
    %v909 = vsub.s32 %v906, %v908
    %v910 = vrot.slane %v896, %v909
    %v911 = vcombine.low %v903, %v910
    %v912 = vcombine.low %v886, %v890
    %v914 = vunpack.c.l.s4 1983009808
    %v915 = vunpack.c.0.s8 %v914
    %v916 = vlaneseq
    %v917 = vshrl.u32 %v916, 7
    %v918 = vsub.s32 %v915, %v917
    %v919 = vrot.slane %v912, %v918
    %v921 = vunpack.c.l.s4 1983009808
    %v922 = vunpack.c.0.s8 %v921
    %v923 = vlaneseq
    %v924 = vshrl.u32 %v923, 7
    %v925 = vsub.s32 %v922, %v924
    %v926 = vrot.slane %v894, %v925
    %v927 = vcombine.low %v919, %v926
    %928 = vrot.lane.b32.xlu0 %v911, 33
    %v929 = vpop.permute.xlu0 %928
    %930 = vrot.lane.b32.xlu0 %v927, 33
    %v931 = vpop.permute.xlu0 %930
    %v932 = vrot.slane %v929, 6
    %v933 = vrot.slane %v931, 6
    %vm934 = vcmask 269312
    %v935 = vsel %vm934, %v932, %v929
    %v936 = vsel %vm77, %v932, %v933
    %v937 = vsel %vm934, %v936, %v931
    %v940 = vmul.f32 %v860, %v935
    %v941 = vmul.f32 %v861, %v937
    %v944 = vcombine.low %v940, %v940
    %v946 = vunpack.c.l.s4 1983009808
    %v947 = vunpack.c.0.s8 %v946
    %v948 = vlaneseq
    %v949 = vshrl.u32 %v948, 7
    %v950 = vsub.s32 %v947, %v949
    %v951 = vrot.slane %v944, %v950
    %v953 = vunpack.c.l.s4 1983009808
    %v954 = vunpack.c.0.s8 %v953
    %v955 = vlaneseq
    %v956 = vshrl.u32 %v955, 7
    %v957 = vsub.s32 %v954, %v956
    %v958 = vrot.slane %v940, %v957
    %v959 = vcombine.high %v951, %v951
    %v960 = vcombine.high %v958, %v958
    %v961 = vcombine.low %v941, %v941
    %v963 = vunpack.c.l.s4 1983009808
    %v964 = vunpack.c.0.s8 %v963
    %v965 = vlaneseq
    %v966 = vshrl.u32 %v965, 7
    %v967 = vsub.s32 %v964, %v966
    %v968 = vrot.slane %v961, %v967
    %v970 = vunpack.c.l.s4 1983009808
    %v971 = vunpack.c.0.s8 %v970
    %v972 = vlaneseq
    %v973 = vshrl.u32 %v972, 7
    %v974 = vsub.s32 %v971, %v973
    %v975 = vrot.slane %v941, %v974
    %v976 = vcombine.high %v968, %v968
    %977 = vrot.lane.b32.xlu0 %v951, 95
    %v978 = vpop.permute.xlu0 %977
    %979 = vrot.lane.b32.xlu0 %v959, 95
    %v980 = vpop.permute.xlu0 %979
    %981 = vrot.lane.b32.xlu0 %v958, 95
    %v982 = vpop.permute.xlu0 %981
    %983 = vrot.lane.b32.xlu0 %v960, 95
    %v984 = vpop.permute.xlu0 %983
    %985 = vrot.lane.b32.xlu0 %v968, 95
    %v986 = vpop.permute.xlu0 %985
    %987 = vrot.lane.b32.xlu0 %v976, 95
    %v988 = vpop.permute.xlu0 %987
    %989 = vrot.lane.b32.xlu0 %v975, 95
    %v990 = vpop.permute.xlu0 %989
    %vm991 = vcmask 777216
    %v992 = vsel %vm991, %v978, %v980
    %v993 = vsel %vm991, %v980, %v982
    %v994 = vsel %vm991, %v982, %v984
    %v995 = vsel %vm991, %v984, %v986
    %v996 = vsel %vm991, %v986, %v988
    %v997 = vsel %vm991, %v988, %v990
    %1005 = vst [vmem:[#allocation3 + $0x38] sm:$0xc] %v992
    %1006 = vst [vmem:[#allocation3 + $0x40] sm:$0xc] %v993
    %1007 = vst [vmem:[#allocation3 + $0x48] sm:$0xc] %v994
    %1008 = vst [vmem:[#allocation3 + $0x50] sm:$0xc] %v995
    %1009 = vst [vmem:[#allocation3 + $0x58] sm:$0xc] %v996
    %1010 = vst [vmem:[#allocation3 + $0x60] sm:$0xc] %v997
    %1011 = vst.msk [vmem:[#allocation3 + $0x68] sm:$0xc] %vm399, %v990
    %v1012 = vld [vmem:[#allocation2] sm:$0xff]
    %v1013 = vld [vmem:[#allocation2 + $0x8] sm:$0x3f]
    %s1014 = scalar_lea.vmem %s15, 6
    %v1015 = vld [vmem:[%s1014] ss:$8 sm:$0xf]
    %v1016 = vld [vmem:[%s1014] ss:$8 sm:$0x70]
    %v1017 = vor.u32 %v1015, %v1016
    %v1019 = vlaneseq
    %v1020 = vshrl.u32 %v1019, 7
    %v1021 = vsub.s32 0, %v1020
    %v1022 = vrot.slane %v1017, %v1021
    %v1023 = vlaneseq
    %v1024 = vshrl.u32 %v1023, 7
    %v1025 = vsub.s32 1, %v1024
    %v1026 = vrot.slane %v1017, %v1025
    %v1027 = vlaneseq
    %v1028 = vshrl.u32 %v1027, 7
    %v1029 = vsub.s32 2, %v1028
    %v1030 = vrot.slane %v1017, %v1029
    %v1031 = vlaneseq
    %v1032 = vshrl.u32 %v1031, 7
    %v1033 = vsub.s32 3, %v1032
    %v1034 = vrot.slane %v1017, %v1033
    %v1035 = vlaneseq
    %v1036 = vshrl.u32 %v1035, 7
    %v1037 = vsub.s32 4, %v1036
    %v1038 = vrot.slane %v1017, %v1037
    %v1039 = vlaneseq
    %v1040 = vshrl.u32 %v1039, 7
    %v1041 = vsub.s32 5, %v1040
    %v1042 = vrot.slane %v1017, %v1041
    %v1043 = vlaneseq
    %v1044 = vshrl.u32 %v1043, 7
    %v1045 = vsub.s32 6, %v1044
    %v1046 = vrot.slane %v1017, %v1045
    %v1047 = vcombine.low %v1022, %v1026
    %v1048 = vcombine.low %v1030, %v1034
    %v1050 = vunpack.c.l.s4 1983009808
    %v1051 = vunpack.c.0.s8 %v1050
    %v1052 = vlaneseq
    %v1053 = vshrl.u32 %v1052, 7
    %v1054 = vsub.s32 %v1051, %v1053
    %v1055 = vrot.slane %v1047, %v1054
    %v1057 = vunpack.c.l.s4 1983009808
    %v1058 = vunpack.c.0.s8 %v1057
    %v1059 = vlaneseq
    %v1060 = vshrl.u32 %v1059, 7
    %v1061 = vsub.s32 %v1058, %v1060
    %v1062 = vrot.slane %v1048, %v1061
    %v1063 = vcombine.low %v1055, %v1062
    %v1064 = vcombine.low %v1038, %v1042
    %v1066 = vunpack.c.l.s4 1983009808
    %v1067 = vunpack.c.0.s8 %v1066
    %v1068 = vlaneseq
    %v1069 = vshrl.u32 %v1068, 7
    %v1070 = vsub.s32 %v1067, %v1069
    %v1071 = vrot.slane %v1064, %v1070
    %v1073 = vunpack.c.l.s4 1983009808
    %v1074 = vunpack.c.0.s8 %v1073
    %v1075 = vlaneseq
    %v1076 = vshrl.u32 %v1075, 7
    %v1077 = vsub.s32 %v1074, %v1076
    %v1078 = vrot.slane %v1046, %v1077
    %v1079 = vcombine.low %v1071, %v1078
    %1080 = vrot.lane.b32.xlu0 %v1063, 59
    %v1081 = vpop.permute.xlu0 %1080
    %1082 = vrot.lane.b32.xlu0 %v1079, 59
    %v1083 = vpop.permute.xlu0 %1082
    %v1084 = vrot.slane %v1081, 6
    %v1085 = vrot.slane %v1083, 6
    %vm1086 = vcmask 482304
    %v1087 = vsel %vm1086, %v1084, %v1081
    %v1088 = vsel %vm77, %v1084, %v1085
    %v1089 = vsel %vm1086, %v1088, %v1083
    %v1092 = vmul.f32 %v1012, %v1087
    %v1093 = vmul.f32 %v1013, %v1089
    %v1096 = vcombine.high %v1092, %v1092
    %v1098 = vunpack.c.l.s4 1983009808
    %v1099 = vunpack.c.0.s8 %v1098
    %v1100 = vlaneseq
    %v1101 = vshrl.u32 %v1100, 7
    %v1102 = vsub.s32 %v1099, %v1101
    %v1103 = vrot.slane %v1092, %v1102
    %v1105 = vunpack.c.l.s4 1983009808
    %v1106 = vunpack.c.0.s8 %v1105
    %v1107 = vlaneseq
    %v1108 = vshrl.u32 %v1107, 7
    %v1109 = vsub.s32 %v1106, %v1108
    %v1110 = vrot.slane %v1096, %v1109
    %v1111 = vcombine.low %v1103, %v1103
    %v1112 = vcombine.low %v1110, %v1110
    %v1113 = vcombine.high %v1093, %v1093
    %v1115 = vunpack.c.l.s4 1983009808
    %v1116 = vunpack.c.0.s8 %v1115
    %v1117 = vlaneseq
    %v1118 = vshrl.u32 %v1117, 7
    %v1119 = vsub.s32 %v1116, %v1118
    %v1120 = vrot.slane %v1093, %v1119
    %v1122 = vunpack.c.l.s4 1983009808
    %v1123 = vunpack.c.0.s8 %v1122
    %v1124 = vlaneseq
    %v1125 = vshrl.u32 %v1124, 7
    %v1126 = vsub.s32 %v1123, %v1125
    %v1127 = vrot.slane %v1113, %v1126
    %v1128 = vcombine.low %v1120, %v1120
    %v1129 = vcombine.low %v1127, %v1127
    %1130 = vrot.lane.b32.xlu0 %v1111, 69
    %v1131 = vpop.permute.xlu0 %1130
    %1132 = vrot.lane.b32.xlu0 %v1103, 69
    %v1133 = vpop.permute.xlu0 %1132
    %1134 = vrot.lane.b32.xlu0 %v1112, 69
    %v1135 = vpop.permute.xlu0 %1134
    %1136 = vrot.lane.b32.xlu0 %v1110, 69
    %v1137 = vpop.permute.xlu0 %1136
    %1138 = vrot.lane.b32.xlu0 %v1128, 69
    %v1139 = vpop.permute.xlu0 %1138
    %1140 = vrot.lane.b32.xlu0 %v1120, 69
    %v1141 = vpop.permute.xlu0 %1140
    %1142 = vrot.lane.b32.xlu0 %v1129, 69
    %v1143 = vpop.permute.xlu0 %1142
    %vm1144 = vcmask 564224
    %v1145 = vsel %vm1144, %v1131, %v1133
    %v1146 = vsel %vm1144, %v1133, %v1135
    %v1147 = vsel %vm1144, %v1135, %v1137
    %v1148 = vsel %vm1144, %v1137, %v1139
    %v1149 = vsel %vm1144, %v1139, %v1141
    %v1150 = vsel %vm1144, %v1141, %v1143
    %1158 = vst [vmem:[#allocation3 + $0x38] sm:$0x30] %v1145
    %1159 = vst [vmem:[#allocation3 + $0x40] sm:$0x30] %v1146
    %1160 = vst [vmem:[#allocation3 + $0x48] sm:$0x30] %v1147
    %1161 = vst [vmem:[#allocation3 + $0x50] sm:$0x30] %v1148
    %1162 = vst [vmem:[#allocation3 + $0x58] sm:$0x30] %v1149
    %1163 = vst [vmem:[#allocation3 + $0x60] sm:$0x30] %v1150
    %1164 = vst.msk [vmem:[#allocation3 + $0x68] sm:$0x30] %vm553, %v1143
    %v1165 = vld [vmem:[#allocation2] sm:$0xff]
    %v1166 = vld [vmem:[#allocation2 + $0x8] sm:$0x3f]
    %s1167 = scalar_lea.vmem %s15, 7
    %v1168 = vld [vmem:[%s1167] ss:$8 sm:$0xf]
    %v1169 = vld [vmem:[%s1167] ss:$8 sm:$0x70]
    %v1170 = vor.u32 %v1168, %v1169
    %v1172 = vlaneseq
    %v1173 = vshrl.u32 %v1172, 7
    %v1174 = vsub.s32 0, %v1173
    %v1175 = vrot.slane %v1170, %v1174
    %v1176 = vlaneseq
    %v1177 = vshrl.u32 %v1176, 7
    %v1178 = vsub.s32 1, %v1177
    %v1179 = vrot.slane %v1170, %v1178
    %v1180 = vlaneseq
    %v1181 = vshrl.u32 %v1180, 7
    %v1182 = vsub.s32 2, %v1181
    %v1183 = vrot.slane %v1170, %v1182
    %v1184 = vlaneseq
    %v1185 = vshrl.u32 %v1184, 7
    %v1186 = vsub.s32 3, %v1185
    %v1187 = vrot.slane %v1170, %v1186
    %v1188 = vlaneseq
    %v1189 = vshrl.u32 %v1188, 7
    %v1190 = vsub.s32 4, %v1189
    %v1191 = vrot.slane %v1170, %v1190
    %v1192 = vlaneseq
    %v1193 = vshrl.u32 %v1192, 7
    %v1194 = vsub.s32 5, %v1193
    %v1195 = vrot.slane %v1170, %v1194
    %v1196 = vlaneseq
    %v1197 = vshrl.u32 %v1196, 7
    %v1198 = vsub.s32 6, %v1197
    %v1199 = vrot.slane %v1170, %v1198
    %v1200 = vcombine.low %v1175, %v1179
    %v1201 = vcombine.low %v1183, %v1187
    %v1203 = vunpack.c.l.s4 1983009808
    %v1204 = vunpack.c.0.s8 %v1203
    %v1205 = vlaneseq
    %v1206 = vshrl.u32 %v1205, 7
    %v1207 = vsub.s32 %v1204, %v1206
    %v1208 = vrot.slane %v1200, %v1207
    %v1210 = vunpack.c.l.s4 1983009808
    %v1211 = vunpack.c.0.s8 %v1210
    %v1212 = vlaneseq
    %v1213 = vshrl.u32 %v1212, 7
    %v1214 = vsub.s32 %v1211, %v1213
    %v1215 = vrot.slane %v1201, %v1214
    %v1216 = vcombine.low %v1208, %v1215
    %v1217 = vcombine.low %v1191, %v1195
    %v1219 = vunpack.c.l.s4 1983009808
    %v1220 = vunpack.c.0.s8 %v1219
    %v1221 = vlaneseq
    %v1222 = vshrl.u32 %v1221, 7
    %v1223 = vsub.s32 %v1220, %v1222
    %v1224 = vrot.slane %v1217, %v1223
    %v1226 = vunpack.c.l.s4 1983009808
    %v1227 = vunpack.c.0.s8 %v1226
    %v1228 = vlaneseq
    %v1229 = vshrl.u32 %v1228, 7
    %v1230 = vsub.s32 %v1227, %v1229
    %v1231 = vrot.slane %v1199, %v1230
    %v1232 = vcombine.low %v1224, %v1231
    %1233 = vrot.lane.b32.xlu0 %v1216, 60
    %v1234 = vpop.permute.xlu0 %1233
    %1235 = vrot.lane.b32.xlu0 %v1232, 60
    %v1236 = vpop.permute.xlu0 %1235
    %v1237 = vrot.slane %v1234, 6
    %v1238 = vrot.slane %v1236, 6
    %vm1239 = vcmask 490496
    %v1240 = vsel %vm1239, %v1237, %v1234
    %v1241 = vsel %vm77, %v1237, %v1238
    %v1242 = vsel %vm1239, %v1241, %v1236
    %v1245 = vmul.f32 %v1165, %v1240
    %v1246 = vmul.f32 %v1166, %v1242
    %v1249 = vcombine.low %v1245, %v1245
    %v1251 = vunpack.c.l.s4 1983009808
    %v1252 = vunpack.c.0.s8 %v1251
    %v1253 = vlaneseq
    %v1254 = vshrl.u32 %v1253, 7
    %v1255 = vsub.s32 %v1252, %v1254
    %v1256 = vrot.slane %v1249, %v1255
    %v1258 = vunpack.c.l.s4 1983009808
    %v1259 = vunpack.c.0.s8 %v1258
    %v1260 = vlaneseq
    %v1261 = vshrl.u32 %v1260, 7
    %v1262 = vsub.s32 %v1259, %v1261
    %v1263 = vrot.slane %v1245, %v1262
    %v1264 = vcombine.low %v1256, %v1256
    %v1265 = vcombine.low %v1263, %v1263
    %v1266 = vcombine.low %v1246, %v1246
    %v1268 = vunpack.c.l.s4 1983009808
    %v1269 = vunpack.c.0.s8 %v1268
    %v1270 = vlaneseq
    %v1271 = vshrl.u32 %v1270, 7
    %v1272 = vsub.s32 %v1269, %v1271
    %v1273 = vrot.slane %v1266, %v1272
    %v1275 = vunpack.c.l.s4 1983009808
    %v1276 = vunpack.c.0.s8 %v1275
    %v1277 = vlaneseq
    %v1278 = vshrl.u32 %v1277, 7
    %v1279 = vsub.s32 %v1276, %v1278
    %v1280 = vrot.slane %v1246, %v1279
    %v1281 = vcombine.low %v1273, %v1273
    %v1282 = vcombine.low %v1280, %v1280
    %1283 = vrot.lane.b32.xlu0 %v1264, 68
    %v1284 = vpop.permute.xlu0 %1283
    %1285 = vrot.lane.b32.xlu0 %v1256, 68
    %v1286 = vpop.permute.xlu0 %1285
    %1287 = vrot.lane.b32.xlu0 %v1265, 68
    %v1288 = vpop.permute.xlu0 %1287
    %1289 = vrot.lane.b32.xlu0 %v1263, 68
    %v1290 = vpop.permute.xlu0 %1289
    %1291 = vrot.lane.b32.xlu0 %v1281, 68
    %v1292 = vpop.permute.xlu0 %1291
    %1293 = vrot.lane.b32.xlu0 %v1273, 68
    %v1294 = vpop.permute.xlu0 %1293
    %1295 = vrot.lane.b32.xlu0 %v1282, 68
    %v1296 = vpop.permute.xlu0 %1295
    %vm1297 = vcmask 556032
    %v1298 = vsel %vm1297, %v1284, %v1286
    %v1299 = vsel %vm1297, %v1286, %v1288
    %v1300 = vsel %vm1297, %v1288, %v1290
    %v1301 = vsel %vm1297, %v1290, %v1292
    %v1302 = vsel %vm1297, %v1292, %v1294
    %v1303 = vsel %vm1297, %v1294, %v1296
    %1311 = vst [vmem:[#allocation3 + $0x38] sm:$0xc0] %v1298
    %1312 = vst [vmem:[#allocation3 + $0x40] sm:$0xc0] %v1299
    %1313 = vst [vmem:[#allocation3 + $0x48] sm:$0xc0] %v1300
    %1314 = vst [vmem:[#allocation3 + $0x50] sm:$0xc0] %v1301
    %1315 = vst [vmem:[#allocation3 + $0x58] sm:$0xc0] %v1302
    %1316 = vst [vmem:[#allocation3 + $0x60] sm:$0xc0] %v1303
    %1317 = vst.msk [vmem:[#allocation3 + $0x68] sm:$0xc0] %vm707, %v1296
    %v1318 = vld [vmem:[#allocation2] sm:$0xff]
    %v1319 = vld [vmem:[#allocation2 + $0x8] sm:$0x3f]
    %s1320 = scalar_lea.vmem %s15, 56
    %v1321 = vld [vmem:[%s1320] ss:$8 sm:$0xf]
    %v1322 = vld [vmem:[%s1320] ss:$8 sm:$0x70]
    %v1323 = vor.u32 %v1321, %v1322
    %v1325 = vlaneseq
    %v1326 = vshrl.u32 %v1325, 7
    %v1327 = vsub.s32 0, %v1326
    %v1328 = vrot.slane %v1323, %v1327
    %v1329 = vlaneseq
    %v1330 = vshrl.u32 %v1329, 7
    %v1331 = vsub.s32 1, %v1330
    %v1332 = vrot.slane %v1323, %v1331
    %v1333 = vlaneseq
    %v1334 = vshrl.u32 %v1333, 7
    %v1335 = vsub.s32 2, %v1334
    %v1336 = vrot.slane %v1323, %v1335
    %v1337 = vlaneseq
    %v1338 = vshrl.u32 %v1337, 7
    %v1339 = vsub.s32 3, %v1338
    %v1340 = vrot.slane %v1323, %v1339
    %v1341 = vlaneseq
    %v1342 = vshrl.u32 %v1341, 7
    %v1343 = vsub.s32 4, %v1342
    %v1344 = vrot.slane %v1323, %v1343
    %v1345 = vlaneseq
    %v1346 = vshrl.u32 %v1345, 7
    %v1347 = vsub.s32 5, %v1346
    %v1348 = vrot.slane %v1323, %v1347
    %v1349 = vlaneseq
    %v1350 = vshrl.u32 %v1349, 7
    %v1351 = vsub.s32 6, %v1350
    %v1352 = vrot.slane %v1323, %v1351
    %v1353 = vcombine.low %v1328, %v1332
    %v1354 = vcombine.low %v1336, %v1340
    %v1356 = vunpack.c.l.s4 1983009808
    %v1357 = vunpack.c.0.s8 %v1356
    %v1358 = vlaneseq
    %v1359 = vshrl.u32 %v1358, 7
    %v1360 = vsub.s32 %v1357, %v1359
    %v1361 = vrot.slane %v1353, %v1360
    %v1363 = vunpack.c.l.s4 1983009808
    %v1364 = vunpack.c.0.s8 %v1363
    %v1365 = vlaneseq
    %v1366 = vshrl.u32 %v1365, 7
    %v1367 = vsub.s32 %v1364, %v1366
    %v1368 = vrot.slane %v1354, %v1367
    %v1369 = vcombine.low %v1361, %v1368
    %v1370 = vcombine.low %v1344, %v1348
    %v1372 = vunpack.c.l.s4 1983009808
    %v1373 = vunpack.c.0.s8 %v1372
    %v1374 = vlaneseq
    %v1375 = vshrl.u32 %v1374, 7
    %v1376 = vsub.s32 %v1373, %v1375
    %v1377 = vrot.slane %v1370, %v1376
    %v1379 = vunpack.c.l.s4 1983009808
    %v1380 = vunpack.c.0.s8 %v1379
    %v1381 = vlaneseq
    %v1382 = vshrl.u32 %v1381, 7
    %v1383 = vsub.s32 %v1380, %v1382
    %v1384 = vrot.slane %v1352, %v1383
    %v1385 = vcombine.low %v1377, %v1384
    %1386 = vrot.lane.b32.xlu0 %v1369, 61
    %v1387 = vpop.permute.xlu0 %1386
    %1388 = vrot.lane.b32.xlu0 %v1385, 61
    %v1389 = vpop.permute.xlu0 %1388
    %v1390 = vrot.slane %v1387, 6
    %v1391 = vrot.slane %v1389, 6
    %vm1392 = vcmask 498688
    %v1393 = vsel %vm1392, %v1390, %v1387
    %v1394 = vsel %vm77, %v1390, %v1391
    %v1395 = vsel %vm1392, %v1394, %v1389
    %v1398 = vmul.f32 %v1318, %v1393
    %v1399 = vmul.f32 %v1319, %v1395
    %v1402 = vcombine.high %v1398, %v1398
    %v1404 = vunpack.c.l.s4 1983009808
    %v1405 = vunpack.c.0.s8 %v1404
    %v1406 = vlaneseq
    %v1407 = vshrl.u32 %v1406, 7
    %v1408 = vsub.s32 %v1405, %v1407
    %v1409 = vrot.slane %v1398, %v1408
    %v1411 = vunpack.c.l.s4 1983009808
    %v1412 = vunpack.c.0.s8 %v1411
    %v1413 = vlaneseq
    %v1414 = vshrl.u32 %v1413, 7
    %v1415 = vsub.s32 %v1412, %v1414
    %v1416 = vrot.slane %v1402, %v1415
    %v1417 = vcombine.high %v1409, %v1409
    %v1418 = vcombine.high %v1416, %v1416
    %v1419 = vcombine.high %v1399, %v1399
    %v1421 = vunpack.c.l.s4 1983009808
    %v1422 = vunpack.c.0.s8 %v1421
    %v1423 = vlaneseq
    %v1424 = vshrl.u32 %v1423, 7
    %v1425 = vsub.s32 %v1422, %v1424
    %v1426 = vrot.slane %v1399, %v1425
    %v1428 = vunpack.c.l.s4 1983009808
    %v1429 = vunpack.c.0.s8 %v1428
    %v1430 = vlaneseq
    %v1431 = vshrl.u32 %v1430, 7
    %v1432 = vsub.s32 %v1429, %v1431
    %v1433 = vrot.slane %v1419, %v1432
    %v1434 = vcombine.high %v1426, %v1426
    %1435 = vrot.lane.b32.xlu0 %v1409, 67
    %v1436 = vpop.permute.xlu0 %1435
    %1437 = vrot.lane.b32.xlu0 %v1417, 67
    %v1438 = vpop.permute.xlu0 %1437
    %1439 = vrot.lane.b32.xlu0 %v1416, 67
    %v1440 = vpop.permute.xlu0 %1439
    %1441 = vrot.lane.b32.xlu0 %v1418, 67
    %v1442 = vpop.permute.xlu0 %1441
    %1443 = vrot.lane.b32.xlu0 %v1426, 67
    %v1444 = vpop.permute.xlu0 %1443
    %1445 = vrot.lane.b32.xlu0 %v1434, 67
    %v1446 = vpop.permute.xlu0 %1445
    %1447 = vrot.lane.b32.xlu0 %v1433, 67
    %v1448 = vpop.permute.xlu0 %1447
    %vm1449 = vcmask 547840
    %v1450 = vsel %vm1449, %v1436, %v1438
    %v1451 = vsel %vm1449, %v1438, %v1440
    %v1452 = vsel %vm1449, %v1440, %v1442
    %v1453 = vsel %vm1449, %v1442, %v1444
    %v1454 = vsel %vm1449, %v1444, %v1446
    %v1455 = vsel %vm1449, %v1446, %v1448
    %1463 = vst [vmem:[#allocation3 + $0x70] sm:$0x3] %v1450
    %1464 = vst [vmem:[#allocation3 + $0x78] sm:$0x3] %v1451
    %1465 = vst [vmem:[#allocation3 + $0x80] sm:$0x3] %v1452
    %1466 = vst [vmem:[#allocation3 + $0x88] sm:$0x3] %v1453
    %1467 = vst [vmem:[#allocation3 + $0x90] sm:$0x3] %v1454
    %1468 = vst [vmem:[#allocation3 + $0x98] sm:$0x3] %v1455
    %1469 = vst.msk [vmem:[#allocation3 + $0xa0] sm:$0x3] %vm246, %v1448
    %v1470 = vld [vmem:[%s1] sm:$0xff]
    %v1471 = vld [vmem:[%s1 + $0x8] sm:$0xff]
    %v1472 = vld [vmem:[#allocation3] sm:$0xff]
    %v1473 = vld [vmem:[#allocation3 + $0x8] sm:$0xff]
    %v1474 = vld [vmem:[#allocation3 + $0x10] sm:$0xff]
    %v1475 = vld [vmem:[#allocation3 + $0x18] sm:$0xff]
    %v1476 = vld [vmem:[#allocation3 + $0x20] sm:$0xff]
    %v1477 = vld [vmem:[#allocation3 + $0x28] sm:$0xff]
    %v1478 = vld [vmem:[#allocation3 + $0x30] sm:$0xff]
    %v1479 = vld [vmem:[#allocation3 + $0x38] sm:$0xff]
    %v1480 = vld [vmem:[#allocation3 + $0x40] sm:$0xff]
    %v1481 = vld [vmem:[#allocation3 + $0x48] sm:$0xff]
    %v1482 = vld [vmem:[#allocation3 + $0x50] sm:$0xff]
    %v1483 = vld [vmem:[#allocation3 + $0x58] sm:$0xff]
    %v1484 = vld [vmem:[#allocation3 + $0x60] sm:$0xff]
    %v1485 = vld [vmem:[#allocation3 + $0x68] sm:$0xff]
    %v1486 = vld [vmem:[#allocation3 + $0x70] sm:$0x3]
    %v1487 = vld [vmem:[#allocation3 + $0x78] sm:$0x3]
    %v1488 = vld [vmem:[#allocation3 + $0x80] sm:$0x3]
    %v1489 = vld [vmem:[#allocation3 + $0x88] sm:$0x3]
    %v1490 = vld [vmem:[#allocation3 + $0x90] sm:$0x3]
    %v1491 = vld [vmem:[#allocation3 + $0x98] sm:$0x3]
    %v1492 = vld [vmem:[#allocation3 + $0xa0] sm:$0x3]
    %v1493 = vld [vmem:[%s2] sm:$0xff]
    %v1494 = vld [vmem:[%s2 + $0x8] sm:$0xff]
    %1496 = vset.pattern.permute.xlu0 0
    %1497 = vperm.xlu0 %1496, %v1493
    %v1498 = vpop.permute.xlu0 %1497
    %1501 = vset.pattern.permute.xlu0 0
    %1502 = vperm.xlu0 %1501, %v1494
    %v1503 = vpop.permute.xlu0 %1502
    %vm1505 = vcmask 146432
    %v1507 = vsel %vm1505, %v1470, 0
    %v1510 = vsel %vm1505, %v1471, 0
    %v1513 = vsel %vm77, %v1486, 0
    %v1516 = vsel %vm77, %v1487, 0
    %v1519 = vsel %vm77, %v1488, 0
    %v1522 = vsel %vm77, %v1489, 0
    %v1525 = vsel %vm77, %v1490, 0
    %v1528 = vsel %vm77, %v1491, 0
    %v1531 = vsel %vm77, %v1492, 0
    %1533 = vmatprep.subr.mxu0 %v1473
    %1534 = vmatpush1.msra.mxu0 %v1472
    %1535 = vmatprep.subr.mxu0 %v1480
    %1536 = vmatpush1.msra.mxu0 %v1479
    %1537 = vmatprep.subr.mxu0 %v1516
    %1538 = vmatpush1.msra.mxu0 %v1513
    %1539 = vmatprep.subr.mxu0 0.0
    %1540 = vmatpush1.msra.mxu0 0.0
    %1541 = vmatprep.subr.mxu0 0.0
    %1542 = vmatpush1.msra.mxu0 0.0
    %1543 = vmatprep.subr.mxu0 0.0
    %1544 = vmatpush1.msra.mxu0 0.0
    %1545 = vmatprep.subr.mxu0 0.0
    %1546 = vmatpush1.msra.mxu0 0.0
    %1547 = vmatprep.subr.mxu0 0.0
    %1548 = vmatpush1.msra.mxu0 0.0
    %1549 = vmatprep.subr.mxu0 0.0
    %1550 = vmatpush1.msra.mxu0 0.0
    %1551 = vmatprep.subr.mxu0 0.0
    %1552 = vmatpush1.msra.mxu0 0.0
    %1553 = vmatprep.subr.mxu0 0.0
    %1554 = vmatpush1.msra.mxu0 0.0
    %1555 = vmatprep.subr.mxu0 0.0
    %1556 = vmatpush1.msra.mxu0 0.0
    %1557 = vmatprep.subr.mxu0 0.0
    %1558 = vmatpush1.msra.mxu0 0.0
    %1559 = vmatprep.subr.mxu0 0.0
    %1560 = vmatpush1.msra.mxu0 0.0
    %1561 = vmatprep.subr.mxu0 0.0
    %1562 = vmatpush1.msra.mxu0 0.0
    %1563 = vmatprep.subr.mxu0 0.0
    %1564 = vmatpush1.msra.mxu0 0.0
    %1565 = vmatprep.subr.mxu0 0.0
    %1566 = vmatpush1.msra.mxu0 0.0
    %1567 = vmatprep.subr.mxu0 0.0
    %1568 = vmatpush1.msra.mxu0 0.0
    %1569 = vmatprep.subr.mxu0 0.0
    %1570 = vmatpush1.msra.mxu0 0.0
    %1571 = vmatprep.subr.mxu0 0.0
    %1572 = vmatpush1.msra.mxu0 0.0
    %1573 = vmatprep.subr.mxu0 0.0
    %1574 = vmatpush1.msra.mxu0 0.0
    %1575 = vmatprep.subr.mxu0 0.0
    %1576 = vmatpush1.msra.mxu0 0.0
    %1577 = vmatprep.subr.mxu0 0.0
    %1578 = vmatpush1.msra.mxu0 0.0
    %1579 = vmatprep.subr.mxu0 0.0
    %1580 = vmatpush1.msra.mxu0 0.0
    %1581 = vmatprep.subr.mxu0 0.0
    %1582 = vmatpush1.msra.mxu0 0.0
    %1583 = vmatprep.subr.mxu0 0.0
    %1584 = vmatpush1.msra.mxu0 0.0
    %1585 = vmatprep.subr.mxu0 0.0
    %1586 = vmatpush1.msra.mxu0 0.0
    %1587 = vmatprep.subr.mxu0 0.0
    %1588 = vmatpush1.msra.mxu0 0.0
    %1589 = vmatprep.subr.mxu0 0.0
    %1590 = vmatpush1.msra.mxu0 0.0
    %1591 = vmatprep.subr.mxu0 0.0
    %1592 = vmatpush1.msra.mxu0 0.0
    %1593 = vmatprep.subr.mxu0 0.0
    %1594 = vmatpush1.msra.mxu0 0.0
    %1595 = vmatprep.subr.mxu0 0.0
    %1596 = vmatpush1.msra.mxu0 0.0
    %1597 = vmatprep.mubr.f32.mxu0 0.0
    %1598 = vmatmul.mubr.f32.gmra.mrb[0].mxu0 %v1507
    %v1599 = vpop.f32.mrb[0].mxu0
    %v1600 = vadd.f32 %v1498, %v1599
    %v1601 = vpop.f32.mrb[0].mxu0
    %v1602 = vadd.f32 %v1498, %v1601
    %1603 = vmatprep.mubr.f32.mxu0 0.0
    %1604 = vmatmul.mubr.f32.gmra.mrb[0].mxu0 %v1510
    %v1605 = vpop.f32.mrb[0].mxu0
    %v1606 = vadd.f32 %v1503, %v1605
    %v1607 = vpop.f32.mrb[0].mxu0
    %v1608 = vadd.f32 %v1503, %v1607
    %1609 = vdwg.mxu0
    %1610 = vmatprep.subr.mxu0 %v1475
    %1611 = vmatpush1.msra.mxu0 %v1474
    %1612 = vmatprep.subr.mxu0 %v1482
    %1613 = vmatpush1.msra.mxu0 %v1481
    %1614 = vmatprep.subr.mxu0 %v1522
    %1615 = vmatpush1.msra.mxu0 %v1519
    %1616 = vmatprep.subr.mxu0 0.0
    %1617 = vmatpush1.msra.mxu0 0.0
    %1618 = vmatprep.subr.mxu0 0.0
    %1619 = vmatpush1.msra.mxu0 0.0
    %1620 = vmatprep.subr.mxu0 0.0
    %1621 = vmatpush1.msra.mxu0 0.0
    %1622 = vmatprep.subr.mxu0 0.0
    %1623 = vmatpush1.msra.mxu0 0.0
    %1624 = vmatprep.subr.mxu0 0.0
    %1625 = vmatpush1.msra.mxu0 0.0
    %1626 = vmatprep.subr.mxu0 0.0
    %1627 = vmatpush1.msra.mxu0 0.0
    %1628 = vmatprep.subr.mxu0 0.0
    %1629 = vmatpush1.msra.mxu0 0.0
    %1630 = vmatprep.subr.mxu0 0.0
    %1631 = vmatpush1.msra.mxu0 0.0
    %1632 = vmatprep.subr.mxu0 0.0
    %1633 = vmatpush1.msra.mxu0 0.0
    %1634 = vmatprep.subr.mxu0 0.0
    %1635 = vmatpush1.msra.mxu0 0.0
    %1636 = vmatprep.subr.mxu0 0.0
    %1637 = vmatpush1.msra.mxu0 0.0
    %1638 = vmatprep.subr.mxu0 0.0
    %1639 = vmatpush1.msra.mxu0 0.0
    %1640 = vmatprep.subr.mxu0 0.0
    %1641 = vmatpush1.msra.mxu0 0.0
    %1642 = vmatprep.subr.mxu0 0.0
    %1643 = vmatpush1.msra.mxu0 0.0
    %1644 = vmatprep.subr.mxu0 0.0
    %1645 = vmatpush1.msra.mxu0 0.0
    %1646 = vmatprep.subr.mxu0 0.0
    %1647 = vmatpush1.msra.mxu0 0.0
    %1648 = vmatprep.subr.mxu0 0.0
    %1649 = vmatpush1.msra.mxu0 0.0
    %1650 = vmatprep.subr.mxu0 0.0
    %1651 = vmatpush1.msra.mxu0 0.0
    %1652 = vmatprep.subr.mxu0 0.0
    %1653 = vmatpush1.msra.mxu0 0.0
    %1654 = vmatprep.subr.mxu0 0.0
    %1655 = vmatpush1.msra.mxu0 0.0
    %1656 = vmatprep.subr.mxu0 0.0
    %1657 = vmatpush1.msra.mxu0 0.0
    %1658 = vmatprep.subr.mxu0 0.0
    %1659 = vmatpush1.msra.mxu0 0.0
    %1660 = vmatprep.subr.mxu0 0.0
    %1661 = vmatpush1.msra.mxu0 0.0
    %1662 = vmatprep.subr.mxu0 0.0
    %1663 = vmatpush1.msra.mxu0 0.0
    %1664 = vmatprep.subr.mxu0 0.0
    %1665 = vmatpush1.msra.mxu0 0.0
    %1666 = vmatprep.subr.mxu0 0.0
    %1667 = vmatpush1.msra.mxu0 0.0
    %1668 = vmatprep.subr.mxu0 0.0
    %1669 = vmatpush1.msra.mxu0 0.0
    %1670 = vmatprep.subr.mxu0 0.0
    %1671 = vmatpush1.msra.mxu0 0.0
    %1672 = vmatprep.subr.mxu0 0.0
    %1673 = vmatpush1.msra.mxu0 0.0
    %1674 = vmatprep.mubr.f32.mxu0 0.0
    %1675 = vmatmul.mubr.f32.gmra.mrb[0].mxu0 %v1507
    %v1676 = vpop.f32.mrb[0].mxu0
    %v1677 = vadd.f32 %v1498, %v1676
    %v1678 = vpop.f32.mrb[0].mxu0
    %v1679 = vadd.f32 %v1498, %v1678
    %1680 = vmatprep.mubr.f32.mxu0 0.0
    %1681 = vmatmul.mubr.f32.gmra.mrb[0].mxu0 %v1510
    %v1682 = vpop.f32.mrb[0].mxu0
    %v1683 = vadd.f32 %v1503, %v1682
    %v1684 = vpop.f32.mrb[0].mxu0
    %v1685 = vadd.f32 %v1503, %v1684
    %1686 = vdwg.mxu0
    %1687 = vmatprep.subr.mxu0 %v1477
    %1688 = vmatpush1.msra.mxu0 %v1476
    %1689 = vmatprep.subr.mxu0 %v1484
    %1690 = vmatpush1.msra.mxu0 %v1483
    %1691 = vmatprep.subr.mxu0 %v1528
    %1692 = vmatpush1.msra.mxu0 %v1525
    %1693 = vmatprep.subr.mxu0 0.0
    %1694 = vmatpush1.msra.mxu0 0.0
    %1695 = vmatprep.subr.mxu0 0.0
    %1696 = vmatpush1.msra.mxu0 0.0
    %1697 = vmatprep.subr.mxu0 0.0
    %1698 = vmatpush1.msra.mxu0 0.0
    %1699 = vmatprep.subr.mxu0 0.0
    %1700 = vmatpush1.msra.mxu0 0.0
    %1701 = vmatprep.subr.mxu0 0.0
    %1702 = vmatpush1.msra.mxu0 0.0
    %1703 = vmatprep.subr.mxu0 0.0
    %1704 = vmatpush1.msra.mxu0 0.0
    %1705 = vmatprep.subr.mxu0 0.0
    %1706 = vmatpush1.msra.mxu0 0.0
    %1707 = vmatprep.subr.mxu0 0.0
    %1708 = vmatpush1.msra.mxu0 0.0
    %1709 = vmatprep.subr.mxu0 0.0
    %1710 = vmatpush1.msra.mxu0 0.0
    %1711 = vmatprep.subr.mxu0 0.0
    %1712 = vmatpush1.msra.mxu0 0.0
    %1713 = vmatprep.subr.mxu0 0.0
    %1714 = vmatpush1.msra.mxu0 0.0
    %1715 = vmatprep.subr.mxu0 0.0
    %1716 = vmatpush1.msra.mxu0 0.0
    %1717 = vmatprep.subr.mxu0 0.0
    %1718 = vmatpush1.msra.mxu0 0.0
    %1719 = vmatprep.subr.mxu0 0.0
    %1720 = vmatpush1.msra.mxu0 0.0
    %1721 = vmatprep.subr.mxu0 0.0
    %1722 = vmatpush1.msra.mxu0 0.0
    %1723 = vmatprep.subr.mxu0 0.0
    %1724 = vmatpush1.msra.mxu0 0.0
    %1725 = vmatprep.subr.mxu0 0.0
    %1726 = vmatpush1.msra.mxu0 0.0
    %1727 = vmatprep.subr.mxu0 0.0
    %1728 = vmatpush1.msra.mxu0 0.0
    %1729 = vmatprep.subr.mxu0 0.0
    %1730 = vmatpush1.msra.mxu0 0.0
    %1731 = vmatprep.subr.mxu0 0.0
    %1732 = vmatpush1.msra.mxu0 0.0
    %1733 = vmatprep.subr.mxu0 0.0
    %1734 = vmatpush1.msra.mxu0 0.0
    %1735 = vmatprep.subr.mxu0 0.0
    %1736 = vmatpush1.msra.mxu0 0.0
    %1737 = vmatprep.subr.mxu0 0.0
    %1738 = vmatpush1.msra.mxu0 0.0
    %1739 = vmatprep.subr.mxu0 0.0
    %1740 = vmatpush1.msra.mxu0 0.0
    %1741 = vmatprep.subr.mxu0 0.0
    %1742 = vmatpush1.msra.mxu0 0.0
    %1743 = vmatprep.subr.mxu0 0.0
    %1744 = vmatpush1.msra.mxu0 0.0
    %1745 = vmatprep.subr.mxu0 0.0
    %1746 = vmatpush1.msra.mxu0 0.0
    %1747 = vmatprep.subr.mxu0 0.0
    %1748 = vmatpush1.msra.mxu0 0.0
    %1749 = vmatprep.subr.mxu0 0.0
    %1750 = vmatpush1.msra.mxu0 0.0
    %1751 = vmatprep.mubr.f32.mxu0 0.0
    %1752 = vmatmul.mubr.f32.gmra.mrb[0].mxu0 %v1507
    %v1753 = vpop.f32.mrb[0].mxu0
    %v1754 = vadd.f32 %v1498, %v1753
    %v1755 = vpop.f32.mrb[0].mxu0
    %v1756 = vadd.f32 %v1498, %v1755
    %1757 = vmatprep.mubr.f32.mxu0 0.0
    %1758 = vmatmul.mubr.f32.gmra.mrb[0].mxu0 %v1510
    %v1759 = vpop.f32.mrb[0].mxu0
    %v1760 = vadd.f32 %v1503, %v1759
    %v1761 = vpop.f32.mrb[0].mxu0
    %v1762 = vadd.f32 %v1503, %v1761
    %1763 = vdwg.mxu0
    %1764 = vmatprep.subr.mxu0 0.0
    %1765 = vmatpush1.msra.mxu0 %v1478
    %1766 = vmatprep.subr.mxu0 0.0
    %1767 = vmatpush1.msra.mxu0 %v1485
    %1768 = vmatprep.subr.mxu0 0.0
    %1769 = vmatpush1.msra.mxu0 %v1531
    %1770 = vmatprep.subr.mxu0 0.0
    %1771 = vmatpush1.msra.mxu0 0.0
    %1772 = vmatprep.subr.mxu0 0.0
    %1773 = vmatpush1.msra.mxu0 0.0
    %1774 = vmatprep.subr.mxu0 0.0
    %1775 = vmatpush1.msra.mxu0 0.0
    %1776 = vmatprep.subr.mxu0 0.0
    %1777 = vmatpush1.msra.mxu0 0.0
    %1778 = vmatprep.subr.mxu0 0.0
    %1779 = vmatpush1.msra.mxu0 0.0
    %1780 = vmatprep.subr.mxu0 0.0
    %1781 = vmatpush1.msra.mxu0 0.0
    %1782 = vmatprep.subr.mxu0 0.0
    %1783 = vmatpush1.msra.mxu0 0.0
    %1784 = vmatprep.subr.mxu0 0.0
    %1785 = vmatpush1.msra.mxu0 0.0
    %1786 = vmatprep.subr.mxu0 0.0
    %1787 = vmatpush1.msra.mxu0 0.0
    %1788 = vmatprep.subr.mxu0 0.0
    %1789 = vmatpush1.msra.mxu0 0.0
    %1790 = vmatprep.subr.mxu0 0.0
    %1791 = vmatpush1.msra.mxu0 0.0
    %1792 = vmatprep.subr.mxu0 0.0
    %1793 = vmatpush1.msra.mxu0 0.0
    %1794 = vmatprep.subr.mxu0 0.0
    %1795 = vmatpush1.msra.mxu0 0.0
    %1796 = vmatprep.subr.mxu0 0.0
    %1797 = vmatpush1.msra.mxu0 0.0
    %1798 = vmatprep.subr.mxu0 0.0
    %1799 = vmatpush1.msra.mxu0 0.0
    %1800 = vmatprep.subr.mxu0 0.0
    %1801 = vmatpush1.msra.mxu0 0.0
    %1802 = vmatprep.subr.mxu0 0.0
    %1803 = vmatpush1.msra.mxu0 0.0
    %1804 = vmatprep.subr.mxu0 0.0
    %1805 = vmatpush1.msra.mxu0 0.0
    %1806 = vmatprep.subr.mxu0 0.0
    %1807 = vmatpush1.msra.mxu0 0.0
    %1808 = vmatprep.subr.mxu0 0.0
    %1809 = vmatpush1.msra.mxu0 0.0
    %1810 = vmatprep.subr.mxu0 0.0
    %1811 = vmatpush1.msra.mxu0 0.0
    %1812 = vmatprep.subr.mxu0 0.0
    %1813 = vmatpush1.msra.mxu0 0.0
    %1814 = vmatprep.subr.mxu0 0.0
    %1815 = vmatpush1.msra.mxu0 0.0
    %1816 = vmatprep.subr.mxu0 0.0
    %1817 = vmatpush1.msra.mxu0 0.0
    %1818 = vmatprep.subr.mxu0 0.0
    %1819 = vmatpush1.msra.mxu0 0.0
    %1820 = vmatprep.subr.mxu0 0.0
    %1821 = vmatpush1.msra.mxu0 0.0
    %1822 = vmatprep.subr.mxu0 0.0
    %1823 = vmatpush1.msra.mxu0 0.0
    %1824 = vmatprep.subr.mxu0 0.0
    %1825 = vmatpush1.msra.mxu0 0.0
    %1826 = vmatprep.subr.mxu0 0.0
    %1827 = vmatpush1.msra.mxu0 0.0
    %1828 = vmatprep.mubr.f32.mxu0 0.0
    %1829 = vmatmul.mubr.f32.gmra.mrb[0].mxu0 %v1507
    %v1830 = vpop.f32.mrb[0].mxu0
    %v1831 = vadd.f32 %v1498, %v1830
    %v1832 = vpop.f32.mrb[0].mxu0
    %1833 = vmatprep.mubr.f32.mxu0 0.0
    %1834 = vmatmul.mubr.f32.gmra.mrb[0].mxu0 %v1510
    %v1835 = vpop.f32.mrb[0].mxu0
    %v1836 = vadd.f32 %v1503, %v1835
    %v1837 = vpop.f32.mrb[0].mxu0
    %1838 = vdwg.mxu0
    %v1839 = vld [vmem:[%s5] sm:$0xff]
    %v1840 = vld [vmem:[%s5 + $0x8] sm:$0xff]
    %vm1841 = vcmask 130048
    %v1843 = vsel %vm1841, %v1839, 0
    %v1846 = vsel %vm1841, %v1840, 0
    %1848 = vmatprep.subr.mxu0 %v1602
    %1849 = vmatpush1.msra.mxu0 %v1600
    %1850 = vmatprep.subr.mxu0 %v1608
    %1851 = vmatpush1.msra.mxu0 %v1606
    %1852 = vmatprep.subr.mxu0 0.0
    %1853 = vmatpush1.msra.mxu0 0.0
    %1854 = vmatprep.subr.mxu0 0.0
    %1855 = vmatpush1.msra.mxu0 0.0
    %1856 = vmatprep.subr.mxu0 0.0
    %1857 = vmatpush1.msra.mxu0 0.0
    %1858 = vmatprep.subr.mxu0 0.0
    %1859 = vmatpush1.msra.mxu0 0.0
    %1860 = vmatprep.subr.mxu0 0.0
    %1861 = vmatpush1.msra.mxu0 0.0
    %1862 = vmatprep.subr.mxu0 0.0
    %1863 = vmatpush1.msra.mxu0 0.0
    %1864 = vmatprep.subr.mxu0 0.0
    %1865 = vmatpush1.msra.mxu0 0.0
    %1866 = vmatprep.subr.mxu0 0.0
    %1867 = vmatpush1.msra.mxu0 0.0
    %1868 = vmatprep.subr.mxu0 0.0
    %1869 = vmatpush1.msra.mxu0 0.0
    %1870 = vmatprep.subr.mxu0 0.0
    %1871 = vmatpush1.msra.mxu0 0.0
    %1872 = vmatprep.subr.mxu0 0.0
    %1873 = vmatpush1.msra.mxu0 0.0
    %1874 = vmatprep.subr.mxu0 0.0
    %1875 = vmatpush1.msra.mxu0 0.0
    %1876 = vmatprep.subr.mxu0 0.0
    %1877 = vmatpush1.msra.mxu0 0.0
    %1878 = vmatprep.subr.mxu0 0.0
    %1879 = vmatpush1.msra.mxu0 0.0
    %1880 = vmatprep.subr.mxu0 0.0
    %1881 = vmatpush1.msra.mxu0 0.0
    %1882 = vmatprep.subr.mxu0 0.0
    %1883 = vmatpush1.msra.mxu0 0.0
    %1884 = vmatprep.subr.mxu0 0.0
    %1885 = vmatpush1.msra.mxu0 0.0
    %1886 = vmatprep.subr.mxu0 0.0
    %1887 = vmatpush1.msra.mxu0 0.0
    %1888 = vmatprep.subr.mxu0 0.0
    %1889 = vmatpush1.msra.mxu0 0.0
    %1890 = vmatprep.subr.mxu0 0.0
    %1891 = vmatpush1.msra.mxu0 0.0
    %1892 = vmatprep.subr.mxu0 0.0
    %1893 = vmatpush1.msra.mxu0 0.0
    %1894 = vmatprep.subr.mxu0 0.0
    %1895 = vmatpush1.msra.mxu0 0.0
    %1896 = vmatprep.subr.mxu0 0.0
    %1897 = vmatpush1.msra.mxu0 0.0
    %1898 = vmatprep.subr.mxu0 0.0
    %1899 = vmatpush1.msra.mxu0 0.0
    %1900 = vmatprep.subr.mxu0 0.0
    %1901 = vmatpush1.msra.mxu0 0.0
    %1902 = vmatprep.subr.mxu0 0.0
    %1903 = vmatpush1.msra.mxu0 0.0
    %1904 = vmatprep.subr.mxu0 0.0
    %1905 = vmatpush1.msra.mxu0 0.0
    %1906 = vmatprep.subr.mxu0 0.0
    %1907 = vmatpush1.msra.mxu0 0.0
    %1908 = vmatprep.subr.mxu0 0.0
    %1909 = vmatpush1.msra.mxu0 0.0
    %1910 = vmatprep.subr.mxu0 0.0
    %1911 = vmatpush1.msra.mxu0 0.0
    %1912 = vmatprep.mubr.f32.mxu0 0.0
    %1913 = vmatmul.mubr.f32.gmra.mrb[0].mxu0 %v1843
    %v1914 = vpop.f32.mrb[0].mxu0
    %v1915 = vadd.f32 0.0, %v1914
    %v1916 = vpop.f32.mrb[0].mxu0
    %v1917 = vadd.f32 0.0, %v1916
    %1918 = vmatprep.mubr.f32.mxu0 0.0
    %1919 = vmatmul.mubr.f32.gmra.mrb[0].mxu0 %v1846
    %v1920 = vpop.f32.mrb[0].mxu0
    %v1921 = vadd.f32 0.0, %v1920
    %v1922 = vpop.f32.mrb[0].mxu0
    %v1923 = vadd.f32 0.0, %v1922
    %1924 = vdwg.mxu0
    %1925 = vmatprep.subr.mxu0 %v1679
    %1926 = vmatpush1.msra.mxu0 %v1677
    %1927 = vmatprep.subr.mxu0 %v1685
    %1928 = vmatpush1.msra.mxu0 %v1683
    %1929 = vmatprep.subr.mxu0 0.0
    %1930 = vmatpush1.msra.mxu0 0.0
    %1931 = vmatprep.subr.mxu0 0.0
    %1932 = vmatpush1.msra.mxu0 0.0
    %1933 = vmatprep.subr.mxu0 0.0
    %1934 = vmatpush1.msra.mxu0 0.0
    %1935 = vmatprep.subr.mxu0 0.0
    %1936 = vmatpush1.msra.mxu0 0.0
    %1937 = vmatprep.subr.mxu0 0.0
    %1938 = vmatpush1.msra.mxu0 0.0
    %1939 = vmatprep.subr.mxu0 0.0
    %1940 = vmatpush1.msra.mxu0 0.0
    %1941 = vmatprep.subr.mxu0 0.0
    %1942 = vmatpush1.msra.mxu0 0.0
    %1943 = vmatprep.subr.mxu0 0.0
    %1944 = vmatpush1.msra.mxu0 0.0
    %1945 = vmatprep.subr.mxu0 0.0
    %1946 = vmatpush1.msra.mxu0 0.0
    %1947 = vmatprep.subr.mxu0 0.0
    %1948 = vmatpush1.msra.mxu0 0.0
    %1949 = vmatprep.subr.mxu0 0.0
    %1950 = vmatpush1.msra.mxu0 0.0
    %1951 = vmatprep.subr.mxu0 0.0
    %1952 = vmatpush1.msra.mxu0 0.0
    %1953 = vmatprep.subr.mxu0 0.0
    %1954 = vmatpush1.msra.mxu0 0.0
    %1955 = vmatprep.subr.mxu0 0.0
    %1956 = vmatpush1.msra.mxu0 0.0
    %1957 = vmatprep.subr.mxu0 0.0
    %1958 = vmatpush1.msra.mxu0 0.0
    %1959 = vmatprep.subr.mxu0 0.0
    %1960 = vmatpush1.msra.mxu0 0.0
    %1961 = vmatprep.subr.mxu0 0.0
    %1962 = vmatpush1.msra.mxu0 0.0
    %1963 = vmatprep.subr.mxu0 0.0
    %1964 = vmatpush1.msra.mxu0 0.0
    %1965 = vmatprep.subr.mxu0 0.0
    %1966 = vmatpush1.msra.mxu0 0.0
    %1967 = vmatprep.subr.mxu0 0.0
    %1968 = vmatpush1.msra.mxu0 0.0
    %1969 = vmatprep.subr.mxu0 0.0
    %1970 = vmatpush1.msra.mxu0 0.0
    %1971 = vmatprep.subr.mxu0 0.0
    %1972 = vmatpush1.msra.mxu0 0.0
    %1973 = vmatprep.subr.mxu0 0.0
    %1974 = vmatpush1.msra.mxu0 0.0
    %1975 = vmatprep.subr.mxu0 0.0
    %1976 = vmatpush1.msra.mxu0 0.0
    %1977 = vmatprep.subr.mxu0 0.0
    %1978 = vmatpush1.msra.mxu0 0.0
    %1979 = vmatprep.subr.mxu0 0.0
    %1980 = vmatpush1.msra.mxu0 0.0
    %1981 = vmatprep.subr.mxu0 0.0
    %1982 = vmatpush1.msra.mxu0 0.0
    %1983 = vmatprep.subr.mxu0 0.0
    %1984 = vmatpush1.msra.mxu0 0.0
    %1985 = vmatprep.subr.mxu0 0.0
    %1986 = vmatpush1.msra.mxu0 0.0
    %1987 = vmatprep.subr.mxu0 0.0
    %1988 = vmatpush1.msra.mxu0 0.0
    %1989 = vmatprep.mubr.f32.mxu0 0.0
    %1990 = vmatmul.mubr.f32.gmra.mrb[0].mxu0 %v1843
    %v1991 = vpop.f32.mrb[0].mxu0
    %v1992 = vadd.f32 0.0, %v1991
    %v1993 = vpop.f32.mrb[0].mxu0
    %v1994 = vadd.f32 0.0, %v1993
    %1995 = vmatprep.mubr.f32.mxu0 0.0
    %1996 = vmatmul.mubr.f32.gmra.mrb[0].mxu0 %v1846
    %v1997 = vpop.f32.mrb[0].mxu0
    %v1998 = vadd.f32 0.0, %v1997
    %v1999 = vpop.f32.mrb[0].mxu0
    %v2000 = vadd.f32 0.0, %v1999
    %2001 = vdwg.mxu0
    %2002 = vmatprep.subr.mxu0 %v1756
    %2003 = vmatpush1.msra.mxu0 %v1754
    %2004 = vmatprep.subr.mxu0 %v1762
    %2005 = vmatpush1.msra.mxu0 %v1760
    %2006 = vmatprep.subr.mxu0 0.0
    %2007 = vmatpush1.msra.mxu0 0.0
    %2008 = vmatprep.subr.mxu0 0.0
    %2009 = vmatpush1.msra.mxu0 0.0
    %2010 = vmatprep.subr.mxu0 0.0
    %2011 = vmatpush1.msra.mxu0 0.0
    %2012 = vmatprep.subr.mxu0 0.0
    %2013 = vmatpush1.msra.mxu0 0.0
    %2014 = vmatprep.subr.mxu0 0.0
    %2015 = vmatpush1.msra.mxu0 0.0
    %2016 = vmatprep.subr.mxu0 0.0
    %2017 = vmatpush1.msra.mxu0 0.0
    %2018 = vmatprep.subr.mxu0 0.0
    %2019 = vmatpush1.msra.mxu0 0.0
    %2020 = vmatprep.subr.mxu0 0.0
    %2021 = vmatpush1.msra.mxu0 0.0
    %2022 = vmatprep.subr.mxu0 0.0
    %2023 = vmatpush1.msra.mxu0 0.0
    %2024 = vmatprep.subr.mxu0 0.0
    %2025 = vmatpush1.msra.mxu0 0.0
    %2026 = vmatprep.subr.mxu0 0.0
    %2027 = vmatpush1.msra.mxu0 0.0
    %2028 = vmatprep.subr.mxu0 0.0
    %2029 = vmatpush1.msra.mxu0 0.0
    %2030 = vmatprep.subr.mxu0 0.0
    %2031 = vmatpush1.msra.mxu0 0.0
    %2032 = vmatprep.subr.mxu0 0.0
    %2033 = vmatpush1.msra.mxu0 0.0
    %2034 = vmatprep.subr.mxu0 0.0
    %2035 = vmatpush1.msra.mxu0 0.0
    %2036 = vmatprep.subr.mxu0 0.0
    %2037 = vmatpush1.msra.mxu0 0.0
    %2038 = vmatprep.subr.mxu0 0.0
    %2039 = vmatpush1.msra.mxu0 0.0
    %2040 = vmatprep.subr.mxu0 0.0
    %2041 = vmatpush1.msra.mxu0 0.0
    %2042 = vmatprep.subr.mxu0 0.0
    %2043 = vmatpush1.msra.mxu0 0.0
    %2044 = vmatprep.subr.mxu0 0.0
    %2045 = vmatpush1.msra.mxu0 0.0
    %2046 = vmatprep.subr.mxu0 0.0
    %2047 = vmatpush1.msra.mxu0 0.0
    %2048 = vmatprep.subr.mxu0 0.0
    %2049 = vmatpush1.msra.mxu0 0.0
    %2050 = vmatprep.subr.mxu0 0.0
    %2051 = vmatpush1.msra.mxu0 0.0
    %2052 = vmatprep.subr.mxu0 0.0
    %2053 = vmatpush1.msra.mxu0 0.0
    %2054 = vmatprep.subr.mxu0 0.0
    %2055 = vmatpush1.msra.mxu0 0.0
    %2056 = vmatprep.subr.mxu0 0.0
    %2057 = vmatpush1.msra.mxu0 0.0
    %2058 = vmatprep.subr.mxu0 0.0
    %2059 = vmatpush1.msra.mxu0 0.0
    %2060 = vmatprep.subr.mxu0 0.0
    %2061 = vmatpush1.msra.mxu0 0.0
    %2062 = vmatprep.subr.mxu0 0.0
    %2063 = vmatpush1.msra.mxu0 0.0
    %2064 = vmatprep.subr.mxu0 0.0
    %2065 = vmatpush1.msra.mxu0 0.0
    %2066 = vmatprep.mubr.f32.mxu0 0.0
    %2067 = vmatmul.mubr.f32.gmra.mrb[0].mxu0 %v1843
    %v2068 = vpop.f32.mrb[0].mxu0
    %v2069 = vadd.f32 0.0, %v2068
    %v2070 = vpop.f32.mrb[0].mxu0
    %v2071 = vadd.f32 0.0, %v2070
    %2072 = vmatprep.mubr.f32.mxu0 0.0
    %2073 = vmatmul.mubr.f32.gmra.mrb[0].mxu0 %v1846
    %v2074 = vpop.f32.mrb[0].mxu0
    %v2075 = vadd.f32 0.0, %v2074
    %v2076 = vpop.f32.mrb[0].mxu0
    %v2077 = vadd.f32 0.0, %v2076
    %2078 = vdwg.mxu0
    %2079 = vmatprep.subr.mxu0 0.0
    %2080 = vmatpush1.msra.mxu0 %v1831
    %2081 = vmatprep.subr.mxu0 0.0
    %2082 = vmatpush1.msra.mxu0 %v1836
    %2083 = vmatprep.subr.mxu0 0.0
    %2084 = vmatpush1.msra.mxu0 0.0
    %2085 = vmatprep.subr.mxu0 0.0
    %2086 = vmatpush1.msra.mxu0 0.0
    %2087 = vmatprep.subr.mxu0 0.0
    %2088 = vmatpush1.msra.mxu0 0.0
    %2089 = vmatprep.subr.mxu0 0.0
    %2090 = vmatpush1.msra.mxu0 0.0
    %2091 = vmatprep.subr.mxu0 0.0
    %2092 = vmatpush1.msra.mxu0 0.0
    %2093 = vmatprep.subr.mxu0 0.0
    %2094 = vmatpush1.msra.mxu0 0.0
    %2095 = vmatprep.subr.mxu0 0.0
    %2096 = vmatpush1.msra.mxu0 0.0
    %2097 = vmatprep.subr.mxu0 0.0
    %2098 = vmatpush1.msra.mxu0 0.0
    %2099 = vmatprep.subr.mxu0 0.0
    %2100 = vmatpush1.msra.mxu0 0.0
    %2101 = vmatprep.subr.mxu0 0.0
    %2102 = vmatpush1.msra.mxu0 0.0
    %2103 = vmatprep.subr.mxu0 0.0
    %2104 = vmatpush1.msra.mxu0 0.0
    %2105 = vmatprep.subr.mxu0 0.0
    %2106 = vmatpush1.msra.mxu0 0.0
    %2107 = vmatprep.subr.mxu0 0.0
    %2108 = vmatpush1.msra.mxu0 0.0
    %2109 = vmatprep.subr.mxu0 0.0
    %2110 = vmatpush1.msra.mxu0 0.0
    %2111 = vmatprep.subr.mxu0 0.0
    %2112 = vmatpush1.msra.mxu0 0.0
    %2113 = vmatprep.subr.mxu0 0.0
    %2114 = vmatpush1.msra.mxu0 0.0
    %2115 = vmatprep.subr.mxu0 0.0
    %2116 = vmatpush1.msra.mxu0 0.0
    %2117 = vmatprep.subr.mxu0 0.0
    %2118 = vmatpush1.msra.mxu0 0.0
    %2119 = vmatprep.subr.mxu0 0.0
    %2120 = vmatpush1.msra.mxu0 0.0
    %2121 = vmatprep.subr.mxu0 0.0
    %2122 = vmatpush1.msra.mxu0 0.0
    %2123 = vmatprep.subr.mxu0 0.0
    %2124 = vmatpush1.msra.mxu0 0.0
    %2125 = vmatprep.subr.mxu0 0.0
    %2126 = vmatpush1.msra.mxu0 0.0
    %2127 = vmatprep.subr.mxu0 0.0
    %2128 = vmatpush1.msra.mxu0 0.0
    %2129 = vmatprep.subr.mxu0 0.0
    %2130 = vmatpush1.msra.mxu0 0.0
    %2131 = vmatprep.subr.mxu0 0.0
    %2132 = vmatpush1.msra.mxu0 0.0
    %2133 = vmatprep.subr.mxu0 0.0
    %2134 = vmatpush1.msra.mxu0 0.0
    %2135 = vmatprep.subr.mxu0 0.0
    %2136 = vmatpush1.msra.mxu0 0.0
    %2137 = vmatprep.subr.mxu0 0.0
    %2138 = vmatpush1.msra.mxu0 0.0
    %2139 = vmatprep.subr.mxu0 0.0
    %2140 = vmatpush1.msra.mxu0 0.0
    %2141 = vmatprep.subr.mxu0 0.0
    %2142 = vmatpush1.msra.mxu0 0.0
    %2143 = vmatprep.mubr.f32.mxu0 0.0
    %2144 = vmatmul.mubr.f32.gmra.mrb[0].mxu0 %v1843
    %v2145 = vpop.f32.mrb[0].mxu0
    %v2146 = vadd.f32 0.0, %v2145
    %v2147 = vpop.f32.mrb[0].mxu0
    %2148 = vmatprep.mubr.f32.mxu0 0.0
    %2149 = vmatmul.mubr.f32.gmra.mrb[0].mxu0 %v1846
    %v2150 = vpop.f32.mrb[0].mxu0
    %v2151 = vadd.f32 0.0, %v2150
    %v2152 = vpop.f32.mrb[0].mxu0
    %2153 = vdwg.mxu0
    %v2154 = vadd.f32 %v1915, %v1917
    %v2155 = vadd.f32 %v2154, %v1992
    %v2156 = vadd.f32 %v2155, %v1994
    %v2157 = vadd.f32 %v2156, %v2069
    %v2158 = vadd.f32 %v2157, %v2071
    %v2159 = vsel %vm1841, %v2146, 0.0
    %v2160 = vadd.f32 %v2158, %v2159
    %2161 = vadd.xlane.f32.xlu0 %v2160
    %v2162 = vpop.xlane.xlu0 %2161
    %v2163 = vadd.f32 %v1921, %v1923
    %v2164 = vadd.f32 %v2163, %v1998
    %v2165 = vadd.f32 %v2164, %v2000
    %v2166 = vadd.f32 %v2165, %v2075
    %v2167 = vadd.f32 %v2166, %v2077
    %v2168 = vsel %vm1841, %v2151, 0.0
    %v2169 = vadd.f32 %v2167, %v2168
    %2170 = vadd.xlane.f32.xlu0 %v2169
    %v2171 = vpop.xlane.xlu0 %2170
    %v2172 = vsub.f32 %v1600, %v2162
    %v2173 = vsub.f32 %v1602, %v2162
    %v2174 = vsub.f32 %v1677, %v2162
    %v2175 = vsub.f32 %v1679, %v2162
    %v2176 = vsub.f32 %v1754, %v2162
    %v2177 = vsub.f32 %v1756, %v2162
    %v2178 = vsub.f32 %v1831, %v2162
    %v2179 = vsub.f32 %v1606, %v2171
    %v2180 = vsub.f32 %v1608, %v2171
    %v2181 = vsub.f32 %v1683, %v2171
    %v2182 = vsub.f32 %v1685, %v2171
    %v2183 = vsub.f32 %v1760, %v2171
    %v2184 = vsub.f32 %v1762, %v2171
    %v2185 = vsub.f32 %v1836, %v2171
    %v2186 = vmul.f32 %v2172, %v2172
    %v2187 = vmul.f32 %v2173, %v2173
    %v2188 = vmul.f32 %v2174, %v2174
    %v2189 = vmul.f32 %v2175, %v2175
    %v2190 = vmul.f32 %v2176, %v2176
    %v2191 = vmul.f32 %v2177, %v2177
    %v2192 = vmul.f32 %v2178, %v2178
    %v2193 = vmul.f32 %v2179, %v2179
    %v2194 = vmul.f32 %v2180, %v2180
    %v2195 = vmul.f32 %v2181, %v2181
    %v2196 = vmul.f32 %v2182, %v2182
    %v2197 = vmul.f32 %v2183, %v2183
    %v2198 = vmul.f32 %v2184, %v2184
    %v2199 = vmul.f32 %v2185, %v2185
    %2200 = vmatprep.subr.mxu0 %v2187
    %2201 = vmatpush1.msra.mxu0 %v2186
    %2202 = vmatprep.subr.mxu0 %v2194
    %2203 = vmatpush1.msra.mxu0 %v2193
    %2204 = vmatprep.subr.mxu0 0.0
    %2205 = vmatpush1.msra.mxu0 0.0
    %2206 = vmatprep.subr.mxu0 0.0
    %2207 = vmatpush1.msra.mxu0 0.0
    %2208 = vmatprep.subr.mxu0 0.0
    %2209 = vmatpush1.msra.mxu0 0.0
    %2210 = vmatprep.subr.mxu0 0.0
    %2211 = vmatpush1.msra.mxu0 0.0
    %2212 = vmatprep.subr.mxu0 0.0
    %2213 = vmatpush1.msra.mxu0 0.0
    %2214 = vmatprep.subr.mxu0 0.0
    %2215 = vmatpush1.msra.mxu0 0.0
    %2216 = vmatprep.subr.mxu0 0.0
    %2217 = vmatpush1.msra.mxu0 0.0
    %2218 = vmatprep.subr.mxu0 0.0
    %2219 = vmatpush1.msra.mxu0 0.0
    %2220 = vmatprep.subr.mxu0 0.0
    %2221 = vmatpush1.msra.mxu0 0.0
    %2222 = vmatprep.subr.mxu0 0.0
    %2223 = vmatpush1.msra.mxu0 0.0
    %2224 = vmatprep.subr.mxu0 0.0
    %2225 = vmatpush1.msra.mxu0 0.0
    %2226 = vmatprep.subr.mxu0 0.0
    %2227 = vmatpush1.msra.mxu0 0.0
    %2228 = vmatprep.subr.mxu0 0.0
    %2229 = vmatpush1.msra.mxu0 0.0
    %2230 = vmatprep.subr.mxu0 0.0
    %2231 = vmatpush1.msra.mxu0 0.0
    %2232 = vmatprep.subr.mxu0 0.0
    %2233 = vmatpush1.msra.mxu0 0.0
    %2234 = vmatprep.subr.mxu0 0.0
    %2235 = vmatpush1.msra.mxu0 0.0
    %2236 = vmatprep.subr.mxu0 0.0
    %2237 = vmatpush1.msra.mxu0 0.0
    %2238 = vmatprep.subr.mxu0 0.0
    %2239 = vmatpush1.msra.mxu0 0.0
    %2240 = vmatprep.subr.mxu0 0.0
    %2241 = vmatpush1.msra.mxu0 0.0
    %2242 = vmatprep.subr.mxu0 0.0
    %2243 = vmatpush1.msra.mxu0 0.0
    %2244 = vmatprep.subr.mxu0 0.0
    %2245 = vmatpush1.msra.mxu0 0.0
    %2246 = vmatprep.subr.mxu0 0.0
    %2247 = vmatpush1.msra.mxu0 0.0
    %2248 = vmatprep.subr.mxu0 0.0
    %2249 = vmatpush1.msra.mxu0 0.0
    %2250 = vmatprep.subr.mxu0 0.0
    %2251 = vmatpush1.msra.mxu0 0.0
    %2252 = vmatprep.subr.mxu0 0.0
    %2253 = vmatpush1.msra.mxu0 0.0
    %2254 = vmatprep.subr.mxu0 0.0
    %2255 = vmatpush1.msra.mxu0 0.0
    %2256 = vmatprep.subr.mxu0 0.0
    %2257 = vmatpush1.msra.mxu0 0.0
    %2258 = vmatprep.subr.mxu0 0.0
    %2259 = vmatpush1.msra.mxu0 0.0
    %2260 = vmatprep.subr.mxu0 0.0
    %2261 = vmatpush1.msra.mxu0 0.0
    %2262 = vmatprep.subr.mxu0 0.0
    %2263 = vmatpush1.msra.mxu0 0.0
    %2264 = vmatprep.mubr.f32.mxu0 0.0
    %2265 = vmatmul.mubr.f32.gmra.mrb[0].mxu0 %v1843
    %v2266 = vpop.f32.mrb[0].mxu0
    %v2267 = vadd.f32 0.0, %v2266
    %v2268 = vpop.f32.mrb[0].mxu0
    %v2269 = vadd.f32 0.0, %v2268
    %2270 = vmatprep.mubr.f32.mxu0 0.0
    %2271 = vmatmul.mubr.f32.gmra.mrb[0].mxu0 %v1846
    %v2272 = vpop.f32.mrb[0].mxu0
    %v2273 = vadd.f32 0.0, %v2272
    %v2274 = vpop.f32.mrb[0].mxu0
    %v2275 = vadd.f32 0.0, %v2274
    %2276 = vdwg.mxu0
    %2277 = vmatprep.subr.mxu0 %v2189
    %2278 = vmatpush1.msra.mxu0 %v2188
    %2279 = vmatprep.subr.mxu0 %v2196
    %2280 = vmatpush1.msra.mxu0 %v2195
    %2281 = vmatprep.subr.mxu0 0.0
    %2282 = vmatpush1.msra.mxu0 0.0
    %2283 = vmatprep.subr.mxu0 0.0
    %2284 = vmatpush1.msra.mxu0 0.0
    %2285 = vmatprep.subr.mxu0 0.0
    %2286 = vmatpush1.msra.mxu0 0.0
    %2287 = vmatprep.subr.mxu0 0.0
    %2288 = vmatpush1.msra.mxu0 0.0
    %2289 = vmatprep.subr.mxu0 0.0
    %2290 = vmatpush1.msra.mxu0 0.0
    %2291 = vmatprep.subr.mxu0 0.0
    %2292 = vmatpush1.msra.mxu0 0.0
    %2293 = vmatprep.subr.mxu0 0.0
    %2294 = vmatpush1.msra.mxu0 0.0
    %2295 = vmatprep.subr.mxu0 0.0
    %2296 = vmatpush1.msra.mxu0 0.0
    %2297 = vmatprep.subr.mxu0 0.0
    %2298 = vmatpush1.msra.mxu0 0.0
    %2299 = vmatprep.subr.mxu0 0.0
    %2300 = vmatpush1.msra.mxu0 0.0
    %2301 = vmatprep.subr.mxu0 0.0
    %2302 = vmatpush1.msra.mxu0 0.0
    %2303 = vmatprep.subr.mxu0 0.0
    %2304 = vmatpush1.msra.mxu0 0.0
    %2305 = vmatprep.subr.mxu0 0.0
    %2306 = vmatpush1.msra.mxu0 0.0
    %2307 = vmatprep.subr.mxu0 0.0
    %2308 = vmatpush1.msra.mxu0 0.0
    %2309 = vmatprep.subr.mxu0 0.0
    %2310 = vmatpush1.msra.mxu0 0.0
    %2311 = vmatprep.subr.mxu0 0.0
    %2312 = vmatpush1.msra.mxu0 0.0
    %2313 = vmatprep.subr.mxu0 0.0
    %2314 = vmatpush1.msra.mxu0 0.0
    %2315 = vmatprep.subr.mxu0 0.0
    %2316 = vmatpush1.msra.mxu0 0.0
    %2317 = vmatprep.subr.mxu0 0.0
    %2318 = vmatpush1.msra.mxu0 0.0
    %2319 = vmatprep.subr.mxu0 0.0
    %2320 = vmatpush1.msra.mxu0 0.0
    %2321 = vmatprep.subr.mxu0 0.0
    %2322 = vmatpush1.msra.mxu0 0.0
    %2323 = vmatprep.subr.mxu0 0.0
    %2324 = vmatpush1.msra.mxu0 0.0
    %2325 = vmatprep.subr.mxu0 0.0
    %2326 = vmatpush1.msra.mxu0 0.0
    %2327 = vmatprep.subr.mxu0 0.0
    %2328 = vmatpush1.msra.mxu0 0.0
    %2329 = vmatprep.subr.mxu0 0.0
    %2330 = vmatpush1.msra.mxu0 0.0
    %2331 = vmatprep.subr.mxu0 0.0
    %2332 = vmatpush1.msra.mxu0 0.0
    %2333 = vmatprep.subr.mxu0 0.0
    %2334 = vmatpush1.msra.mxu0 0.0
    %2335 = vmatprep.subr.mxu0 0.0
    %2336 = vmatpush1.msra.mxu0 0.0
    %2337 = vmatprep.subr.mxu0 0.0
    %2338 = vmatpush1.msra.mxu0 0.0
    %2339 = vmatprep.subr.mxu0 0.0
    %2340 = vmatpush1.msra.mxu0 0.0
    %2341 = vmatprep.mubr.f32.mxu0 0.0
    %2342 = vmatmul.mubr.f32.gmra.mrb[0].mxu0 %v1843
    %v2343 = vpop.f32.mrb[0].mxu0
    %v2344 = vadd.f32 0.0, %v2343
    %v2345 = vpop.f32.mrb[0].mxu0
    %v2346 = vadd.f32 0.0, %v2345
    %2347 = vmatprep.mubr.f32.mxu0 0.0
    %2348 = vmatmul.mubr.f32.gmra.mrb[0].mxu0 %v1846
    %v2349 = vpop.f32.mrb[0].mxu0
    %v2350 = vadd.f32 0.0, %v2349
    %v2351 = vpop.f32.mrb[0].mxu0
    %v2352 = vadd.f32 0.0, %v2351
    %2353 = vdwg.mxu0
    %2354 = vmatprep.subr.mxu0 %v2191
    %2355 = vmatpush1.msra.mxu0 %v2190
    %2356 = vmatprep.subr.mxu0 %v2198
    %2357 = vmatpush1.msra.mxu0 %v2197
    %2358 = vmatprep.subr.mxu0 0.0
    %2359 = vmatpush1.msra.mxu0 0.0
    %2360 = vmatprep.subr.mxu0 0.0
    %2361 = vmatpush1.msra.mxu0 0.0
    %2362 = vmatprep.subr.mxu0 0.0
    %2363 = vmatpush1.msra.mxu0 0.0
    %2364 = vmatprep.subr.mxu0 0.0
    %2365 = vmatpush1.msra.mxu0 0.0
    %2366 = vmatprep.subr.mxu0 0.0
    %2367 = vmatpush1.msra.mxu0 0.0
    %2368 = vmatprep.subr.mxu0 0.0
    %2369 = vmatpush1.msra.mxu0 0.0
    %2370 = vmatprep.subr.mxu0 0.0
    %2371 = vmatpush1.msra.mxu0 0.0
    %2372 = vmatprep.subr.mxu0 0.0
    %2373 = vmatpush1.msra.mxu0 0.0
    %2374 = vmatprep.subr.mxu0 0.0
    %2375 = vmatpush1.msra.mxu0 0.0
    %2376 = vmatprep.subr.mxu0 0.0
    %2377 = vmatpush1.msra.mxu0 0.0
    %2378 = vmatprep.subr.mxu0 0.0
    %2379 = vmatpush1.msra.mxu0 0.0
    %2380 = vmatprep.subr.mxu0 0.0
    %2381 = vmatpush1.msra.mxu0 0.0
    %2382 = vmatprep.subr.mxu0 0.0
    %2383 = vmatpush1.msra.mxu0 0.0
    %2384 = vmatprep.subr.mxu0 0.0
    %2385 = vmatpush1.msra.mxu0 0.0
    %2386 = vmatprep.subr.mxu0 0.0
    %2387 = vmatpush1.msra.mxu0 0.0
    %2388 = vmatprep.subr.mxu0 0.0
    %2389 = vmatpush1.msra.mxu0 0.0
    %2390 = vmatprep.subr.mxu0 0.0
    %2391 = vmatpush1.msra.mxu0 0.0
    %2392 = vmatprep.subr.mxu0 0.0
    %2393 = vmatpush1.msra.mxu0 0.0
    %2394 = vmatprep.subr.mxu0 0.0
    %2395 = vmatpush1.msra.mxu0 0.0
    %2396 = vmatprep.subr.mxu0 0.0
    %2397 = vmatpush1.msra.mxu0 0.0
    %2398 = vmatprep.subr.mxu0 0.0
    %2399 = vmatpush1.msra.mxu0 0.0
    %2400 = vmatprep.subr.mxu0 0.0
    %2401 = vmatpush1.msra.mxu0 0.0
    %2402 = vmatprep.subr.mxu0 0.0
    %2403 = vmatpush1.msra.mxu0 0.0
    %2404 = vmatprep.subr.mxu0 0.0
    %2405 = vmatpush1.msra.mxu0 0.0
    %2406 = vmatprep.subr.mxu0 0.0
    %2407 = vmatpush1.msra.mxu0 0.0
    %2408 = vmatprep.subr.mxu0 0.0
    %2409 = vmatpush1.msra.mxu0 0.0
    %2410 = vmatprep.subr.mxu0 0.0
    %2411 = vmatpush1.msra.mxu0 0.0
    %2412 = vmatprep.subr.mxu0 0.0
    %2413 = vmatpush1.msra.mxu0 0.0
    %2414 = vmatprep.subr.mxu0 0.0
    %2415 = vmatpush1.msra.mxu0 0.0
    %2416 = vmatprep.subr.mxu0 0.0
    %2417 = vmatpush1.msra.mxu0 0.0
    %2418 = vmatprep.mubr.f32.mxu0 0.0
    %2419 = vmatmul.mubr.f32.gmra.mrb[0].mxu0 %v1843
    %v2420 = vpop.f32.mrb[0].mxu0
    %v2421 = vadd.f32 0.0, %v2420
    %v2422 = vpop.f32.mrb[0].mxu0
    %v2423 = vadd.f32 0.0, %v2422
    %2424 = vmatprep.mubr.f32.mxu0 0.0
    %2425 = vmatmul.mubr.f32.gmra.mrb[0].mxu0 %v1846
    %v2426 = vpop.f32.mrb[0].mxu0
    %v2427 = vadd.f32 0.0, %v2426
    %v2428 = vpop.f32.mrb[0].mxu0
    %v2429 = vadd.f32 0.0, %v2428
    %2430 = vdwg.mxu0
    %2431 = vmatprep.subr.mxu0 0.0
    %2432 = vmatpush1.msra.mxu0 %v2192
    %2433 = vmatprep.subr.mxu0 0.0
    %2434 = vmatpush1.msra.mxu0 %v2199
    %2435 = vmatprep.subr.mxu0 0.0
    %2436 = vmatpush1.msra.mxu0 0.0
    %2437 = vmatprep.subr.mxu0 0.0
    %2438 = vmatpush1.msra.mxu0 0.0
    %2439 = vmatprep.subr.mxu0 0.0
    %2440 = vmatpush1.msra.mxu0 0.0
    %2441 = vmatprep.subr.mxu0 0.0
    %2442 = vmatpush1.msra.mxu0 0.0
    %2443 = vmatprep.subr.mxu0 0.0
    %2444 = vmatpush1.msra.mxu0 0.0
    %2445 = vmatprep.subr.mxu0 0.0
    %2446 = vmatpush1.msra.mxu0 0.0
    %2447 = vmatprep.subr.mxu0 0.0
    %2448 = vmatpush1.msra.mxu0 0.0
    %2449 = vmatprep.subr.mxu0 0.0
    %2450 = vmatpush1.msra.mxu0 0.0
    %2451 = vmatprep.subr.mxu0 0.0
    %2452 = vmatpush1.msra.mxu0 0.0
    %2453 = vmatprep.subr.mxu0 0.0
    %2454 = vmatpush1.msra.mxu0 0.0
    %2455 = vmatprep.subr.mxu0 0.0
    %2456 = vmatpush1.msra.mxu0 0.0
    %2457 = vmatprep.subr.mxu0 0.0
    %2458 = vmatpush1.msra.mxu0 0.0
    %2459 = vmatprep.subr.mxu0 0.0
    %2460 = vmatpush1.msra.mxu0 0.0
    %2461 = vmatprep.subr.mxu0 0.0
    %2462 = vmatpush1.msra.mxu0 0.0
    %2463 = vmatprep.subr.mxu0 0.0
    %2464 = vmatpush1.msra.mxu0 0.0
    %2465 = vmatprep.subr.mxu0 0.0
    %2466 = vmatpush1.msra.mxu0 0.0
    %2467 = vmatprep.subr.mxu0 0.0
    %2468 = vmatpush1.msra.mxu0 0.0
    %2469 = vmatprep.subr.mxu0 0.0
    %2470 = vmatpush1.msra.mxu0 0.0
    %2471 = vmatprep.subr.mxu0 0.0
    %2472 = vmatpush1.msra.mxu0 0.0
    %2473 = vmatprep.subr.mxu0 0.0
    %2474 = vmatpush1.msra.mxu0 0.0
    %2475 = vmatprep.subr.mxu0 0.0
    %2476 = vmatpush1.msra.mxu0 0.0
    %2477 = vmatprep.subr.mxu0 0.0
    %2478 = vmatpush1.msra.mxu0 0.0
    %2479 = vmatprep.subr.mxu0 0.0
    %2480 = vmatpush1.msra.mxu0 0.0
    %2481 = vmatprep.subr.mxu0 0.0
    %2482 = vmatpush1.msra.mxu0 0.0
    %2483 = vmatprep.subr.mxu0 0.0
    %2484 = vmatpush1.msra.mxu0 0.0
    %2485 = vmatprep.subr.mxu0 0.0
    %2486 = vmatpush1.msra.mxu0 0.0
    %2487 = vmatprep.subr.mxu0 0.0
    %2488 = vmatpush1.msra.mxu0 0.0
    %2489 = vmatprep.subr.mxu0 0.0
    %2490 = vmatpush1.msra.mxu0 0.0
    %2491 = vmatprep.subr.mxu0 0.0
    %2492 = vmatpush1.msra.mxu0 0.0
    %2493 = vmatprep.subr.mxu0 0.0
    %2494 = vmatpush1.msra.mxu0 0.0
    %2495 = vmatprep.mubr.f32.mxu0 0.0
    %2496 = vmatmul.mubr.f32.gmra.mrb[0].mxu0 %v1843
    %v2497 = vpop.f32.mrb[0].mxu0
    %v2498 = vadd.f32 0.0, %v2497
    %v2499 = vpop.f32.mrb[0].mxu0
    %2500 = vmatprep.mubr.f32.mxu0 0.0
    %2501 = vmatmul.mubr.f32.gmra.mrb[0].mxu0 %v1846
    %v2502 = vpop.f32.mrb[0].mxu0
    %v2503 = vadd.f32 0.0, %v2502
    %v2504 = vpop.f32.mrb[0].mxu0
    %2505 = vdwg.mxu0
    %v2506 = vadd.f32 %v2267, %v2269
    %v2507 = vadd.f32 %v2506, %v2344
    %v2508 = vadd.f32 %v2507, %v2346
    %v2509 = vadd.f32 %v2508, %v2421
    %v2510 = vadd.f32 %v2509, %v2423
    %v2511 = vsel %vm1841, %v2498, 0.0
    %v2512 = vadd.f32 %v2510, %v2511
    %2513 = vadd.xlane.f32.xlu0 %v2512
    %v2514 = vpop.xlane.xlu0 %2513
    %v2515 = vadd.f32 %v2273, %v2275
    %v2516 = vadd.f32 %v2515, %v2350
    %v2517 = vadd.f32 %v2516, %v2352
    %v2518 = vadd.f32 %v2517, %v2427
    %v2519 = vadd.f32 %v2518, %v2429
    %v2520 = vsel %vm1841, %v2503, 0.0
    %v2521 = vadd.f32 %v2519, %v2520
    %2522 = vadd.xlane.f32.xlu0 %v2521
    %v2523 = vpop.xlane.xlu0 %2522
    %v2524 = vadd.f32 %v2514, 1e-05
    %v2525 = vadd.f32 %v2523, 1e-05
    %v2526 = vrsqrt.pop %v2524
    %v2527 = vrsqrt.pop %v2525
    %v2528 = vld [vmem:[%s3] sm:$0xff]
    %v2529 = vld [vmem:[%s3 + $0x8] sm:$0xff]
    %v2530 = vmul.f32 %v2526, %v2528
    %v2531 = vmul.f32 %v2527, %v2529
    %2533 = vset.pattern.permute.xlu0 0
    %2534 = vperm.xlu0 %2533, %v2530
    %v2535 = vpop.permute.xlu0 %2534
    %2538 = vset.pattern.permute.xlu0 0
    %2539 = vperm.xlu0 %2538, %v2531
    %v2540 = vpop.permute.xlu0 %2539
    %v2542 = vmul.f32 %v2172, %v2535
    %v2543 = vmul.f32 %v2173, %v2535
    %v2544 = vmul.f32 %v2174, %v2535
    %v2545 = vmul.f32 %v2175, %v2535
    %v2546 = vmul.f32 %v2176, %v2535
    %v2547 = vmul.f32 %v2177, %v2535
    %v2548 = vmul.f32 %v2178, %v2535
    %v2549 = vmul.f32 %v2179, %v2540
    %v2550 = vmul.f32 %v2180, %v2540
    %v2551 = vmul.f32 %v2181, %v2540
    %v2552 = vmul.f32 %v2182, %v2540
    %v2553 = vmul.f32 %v2183, %v2540
    %v2554 = vmul.f32 %v2184, %v2540
    %v2555 = vmul.f32 %v2185, %v2540
    %v2556 = vld [vmem:[%s4] sm:$0xff]
    %v2557 = vld [vmem:[%s4 + $0x8] sm:$0xff]
    %2559 = vset.pattern.permute.xlu0 0
    %2560 = vperm.xlu0 %2559, %v2556
    %v2561 = vpop.permute.xlu0 %2560
    %2564 = vset.pattern.permute.xlu0 0
    %2565 = vperm.xlu0 %2564, %v2557
    %v2566 = vpop.permute.xlu0 %2565
    %v2568 = vadd.f32 %v2542, %v2561
    %v2569 = vadd.f32 %v2543, %v2561
    %v2570 = vadd.f32 %v2544, %v2561
    %v2571 = vadd.f32 %v2545, %v2561
    %v2572 = vadd.f32 %v2546, %v2561
    %v2573 = vadd.f32 %v2547, %v2561
    %v2574 = vadd.f32 %v2548, %v2561
    %v2575 = vadd.f32 %v2549, %v2566
    %v2576 = vadd.f32 %v2550, %v2566
    %v2577 = vadd.f32 %v2551, %v2566
    %v2578 = vadd.f32 %v2552, %v2566
    %v2579 = vadd.f32 %v2553, %v2566
    %v2580 = vadd.f32 %v2554, %v2566
    %v2581 = vadd.f32 %v2555, %v2566
    %v2582 = vmax.f32 %v2568, 0.0
    %v2583 = vmax.f32 %v2569, 0.0
    %v2584 = vmax.f32 %v2570, 0.0
    %v2585 = vmax.f32 %v2571, 0.0
    %v2586 = vmax.f32 %v2572, 0.0
    %v2587 = vmax.f32 %v2573, 0.0
    %v2588 = vmax.f32 %v2574, 0.0
    %v2589 = vmax.f32 %v2575, 0.0
    %v2590 = vmax.f32 %v2576, 0.0
    %v2591 = vmax.f32 %v2577, 0.0
    %v2592 = vmax.f32 %v2578, 0.0
    %v2593 = vmax.f32 %v2579, 0.0
    %v2594 = vmax.f32 %v2580, 0.0
    %v2595 = vmax.f32 %v2581, 0.0
    %2596 = vst [vmem:[#allocation4] sm:$0xff] %v2582
    %2597 = vst [vmem:[#allocation4 + $0x8] sm:$0xff] %v2583
    %2598 = vst [vmem:[#allocation4 + $0x10] sm:$0xff] %v2584
    %2599 = vst [vmem:[#allocation4 + $0x18] sm:$0xff] %v2585
    %2600 = vst [vmem:[#allocation4 + $0x20] sm:$0xff] %v2586
    %2601 = vst [vmem:[#allocation4 + $0x28] sm:$0xff] %v2587
    %2602 = vst.msk [vmem:[#allocation4 + $0x30] sm:$0xff] %vm1841, %v2588
    %2603 = vst [vmem:[#allocation4 + $0x38] sm:$0xff] %v2589
    %2604 = vst [vmem:[#allocation4 + $0x40] sm:$0xff] %v2590
    %2605 = vst [vmem:[#allocation4 + $0x48] sm:$0xff] %v2591
    %2606 = vst [vmem:[#allocation4 + $0x50] sm:$0xff] %v2592
    %2607 = vst [vmem:[#allocation4 + $0x58] sm:$0xff] %v2593
    %2608 = vst [vmem:[#allocation4 + $0x60] sm:$0xff] %v2594
    %2609 = vst.msk [vmem:[#allocation4 + $0x68] sm:$0xff] %vm1841, %v2595
    %vm2610 = vcmask 392320
    %2611 = vst.msk [vmem:[#allocation4 + $0x30] sm:$0xff] %vm2610, 0.0
    %2612 = vst.msk [vmem:[#allocation4 + $0x68] sm:$0xff] %vm2610, 0.0
    %v2613 = vld [vmem:[#allocation4] sm:$0xff]
    %v2614 = vld [vmem:[#allocation4 + $0x8] sm:$0xff]
    %v2615 = vld [vmem:[#allocation4 + $0x10] sm:$0xff]
    %v2616 = vld [vmem:[#allocation4 + $0x18] sm:$0xff]
    %v2617 = vld [vmem:[#allocation4 + $0x20] sm:$0xff]
    %v2618 = vld [vmem:[#allocation4 + $0x28] sm:$0xff]
    %v2619 = vld [vmem:[#allocation4 + $0x30] sm:$0xff]
    %v2620 = vld [vmem:[#allocation4 + $0x38] sm:$0xff]
    %v2621 = vld [vmem:[#allocation4 + $0x40] sm:$0xff]
    %v2622 = vld [vmem:[#allocation4 + $0x48] sm:$0xff]
    %v2623 = vld [vmem:[#allocation4 + $0x50] sm:$0xff]
    %v2624 = vld [vmem:[#allocation4 + $0x58] sm:$0xff]
    %v2625 = vld [vmem:[#allocation4 + $0x60] sm:$0xff]
    %v2626 = vld [vmem:[#allocation4 + $0x68] sm:$0xff]
    %2641 = vrot.lane.b32.xlu0 %v2613, 127
    %v2642 = vpop.permute.xlu0 %2641
    %2643 = vrot.lane.b32.xlu0 %v2614, 127
    %v2644 = vpop.permute.xlu0 %2643
    %2645 = vrot.lane.b32.xlu0 %v2615, 127
    %v2646 = vpop.permute.xlu0 %2645
    %2647 = vrot.lane.b32.xlu0 %v2616, 127
    %v2648 = vpop.permute.xlu0 %2647
    %2649 = vrot.lane.b32.xlu0 %v2617, 127
    %v2650 = vpop.permute.xlu0 %2649
    %2651 = vrot.lane.b32.xlu0 %v2618, 127
    %v2652 = vpop.permute.xlu0 %2651
    %2653 = vrot.lane.b32.xlu0 %v2619, 127
    %v2654 = vpop.permute.xlu0 %2653
    %2655 = vrot.lane.b32.xlu0 %v2620, 127
    %v2656 = vpop.permute.xlu0 %2655
    %2657 = vrot.lane.b32.xlu0 %v2621, 127
    %v2658 = vpop.permute.xlu0 %2657
    %2659 = vrot.lane.b32.xlu0 %v2622, 127
    %v2660 = vpop.permute.xlu0 %2659
    %2661 = vrot.lane.b32.xlu0 %v2623, 127
    %v2662 = vpop.permute.xlu0 %2661
    %2663 = vrot.lane.b32.xlu0 %v2624, 127
    %v2664 = vpop.permute.xlu0 %2663
    %2665 = vrot.lane.b32.xlu0 %v2625, 127
    %v2666 = vpop.permute.xlu0 %2665
    %2667 = vrot.lane.b32.xlu0 %v2626, 127
    %v2668 = vpop.permute.xlu0 %2667
    %vm2669 = vcmask 1039360
    %v2670 = vsel %vm2669, %v2642, %v2644
    %v2671 = vsel %vm2669, %v2644, %v2646
    %v2672 = vsel %vm2669, %v2646, %v2648
    %v2673 = vsel %vm2669, %v2648, %v2650
    %v2674 = vsel %vm2669, %v2650, %v2652
    %v2675 = vsel %vm2669, %v2652, %v2654
    %v2676 = vsel %vm2669, %v2656, %v2658
    %v2677 = vsel %vm2669, %v2658, %v2660
    %v2678 = vsel %vm2669, %v2660, %v2662
    %v2679 = vsel %vm2669, %v2662, %v2664
    %v2680 = vsel %vm2669, %v2664, %v2666
    %v2681 = vsel %vm2669, %v2666, %v2668
    %v2696 = vmax.f32 %v2613, %v2670
    %v2697 = vmax.f32 %v2614, %v2671
    %v2698 = vmax.f32 %v2615, %v2672
    %v2699 = vmax.f32 %v2616, %v2673
    %v2700 = vmax.f32 %v2617, %v2674
    %v2701 = vmax.f32 %v2618, %v2675
    %v2702 = vmax.f32 %v2619, %v2654
    %v2703 = vmax.f32 %v2620, %v2676
    %v2704 = vmax.f32 %v2621, %v2677
    %v2705 = vmax.f32 %v2622, %v2678
    %v2706 = vmax.f32 %v2623, %v2679
    %v2707 = vmax.f32 %v2624, %v2680
    %v2708 = vmax.f32 %v2625, %v2681
    %v2709 = vmax.f32 %v2626, %v2668
    %2724 = vrot.lane.b32.xlu0 %v2696, 100
    %v2725 = vpop.permute.xlu0 %2724
    %2726 = vrot.lane.b32.xlu0 %v2697, 100
    %v2727 = vpop.permute.xlu0 %2726
    %2728 = vrot.lane.b32.xlu0 %v2698, 100
    %v2729 = vpop.permute.xlu0 %2728
    %2730 = vrot.lane.b32.xlu0 %v2699, 100
    %v2731 = vpop.permute.xlu0 %2730
    %2732 = vrot.lane.b32.xlu0 %v2700, 100
    %v2733 = vpop.permute.xlu0 %2732
    %2734 = vrot.lane.b32.xlu0 %v2701, 100
    %v2735 = vpop.permute.xlu0 %2734
    %2736 = vrot.lane.b32.xlu0 %v2702, 100
    %v2737 = vpop.permute.xlu0 %2736
    %2738 = vrot.lane.b32.xlu0 %v2703, 100
    %v2739 = vpop.permute.xlu0 %2738
    %2740 = vrot.lane.b32.xlu0 %v2704, 100
    %v2741 = vpop.permute.xlu0 %2740
    %2742 = vrot.lane.b32.xlu0 %v2705, 100
    %v2743 = vpop.permute.xlu0 %2742
    %2744 = vrot.lane.b32.xlu0 %v2706, 100
    %v2745 = vpop.permute.xlu0 %2744
    %2746 = vrot.lane.b32.xlu0 %v2707, 100
    %v2747 = vpop.permute.xlu0 %2746
    %2748 = vrot.lane.b32.xlu0 %v2708, 100
    %v2749 = vpop.permute.xlu0 %2748
    %2750 = vrot.lane.b32.xlu0 %v2709, 100
    %v2751 = vpop.permute.xlu0 %2750
    %vm2752 = vcmask 818176
    %v2753 = vsel %vm2752, %v2725, %v2727
    %v2754 = vsel %vm2752, %v2727, %v2729
    %v2755 = vsel %vm2752, %v2729, %v2731
    %v2756 = vsel %vm2752, %v2731, %v2733
    %v2757 = vsel %vm2752, %v2733, %v2735
    %v2758 = vsel %vm2752, %v2735, %v2737
    %v2759 = vsel %vm2752, %v2739, %v2741
    %v2760 = vsel %vm2752, %v2741, %v2743
    %v2761 = vsel %vm2752, %v2743, %v2745
    %v2762 = vsel %vm2752, %v2745, %v2747
    %v2763 = vsel %vm2752, %v2747, %v2749
    %v2764 = vsel %vm2752, %v2749, %v2751
    %v2779 = vmax.f32 %v2696, %v2753
    %v2780 = vmax.f32 %v2697, %v2754
    %v2781 = vmax.f32 %v2698, %v2755
    %v2782 = vmax.f32 %v2699, %v2756
    %v2783 = vmax.f32 %v2700, %v2757
    %v2784 = vmax.f32 %v2701, %v2758
    %v2785 = vmax.f32 %v2702, %v2737
    %v2786 = vmax.f32 %v2703, %v2759
    %v2787 = vmax.f32 %v2704, %v2760
    %v2788 = vmax.f32 %v2705, %v2761
    %v2789 = vmax.f32 %v2706, %v2762
    %v2790 = vmax.f32 %v2707, %v2763
    %v2791 = vmax.f32 %v2708, %v2764
    %v2792 = vmax.f32 %v2709, %v2751
    %v2793 = vld [vmem:[%s17] sm:$0xff]
    %v2794 = vld [vmem:[%s17 + $0x8] sm:$0xff]
    %v2795 = vld [vmem:[%s17 + $0x10] sm:$0xff]
    %v2796 = vld [vmem:[%s17 + $0x18] sm:$0xff]
    %v2797 = vld [vmem:[%s17 + $0x20] sm:$0xff]
    %v2798 = vld [vmem:[%s17 + $0x28] sm:$0xff]
    %v2799 = vld [vmem:[%s17 + $0x30] sm:$0xff]
    %v2800 = vld [vmem:[%s17 + $0x38] sm:$0xff]
    %v2801 = vld [vmem:[%s17 + $0x40] sm:$0xff]
    %v2802 = vld [vmem:[%s17 + $0x48] sm:$0xff]
    %v2803 = vld [vmem:[%s17 + $0x50] sm:$0xff]
    %v2804 = vld [vmem:[%s17 + $0x58] sm:$0xff]
    %v2805 = vld [vmem:[%s17 + $0x60] sm:$0xff]
    %v2806 = vld [vmem:[%s17 + $0x68] sm:$0xff]
    %v2807 = vld [vmem:[%s17 + $0x70] sm:$0xff]
    %v2808 = vld [vmem:[%s17 + $0x78] sm:$0xff]
    %v2809 = vld [vmem:[%s17 + $0x80] sm:$0xff]
    %v2810 = vld [vmem:[%s17 + $0x88] sm:$0xff]
    %v2811 = vld [vmem:[%s17 + $0x90] sm:$0xff]
    %v2812 = vld [vmem:[%s17 + $0x98] sm:$0xff]
    %v2813 = vld [vmem:[%s17 + $0xa0] sm:$0xff]
    %v2814 = vld [vmem:[%s17 + $0xa8] sm:$0xff]
    %v2815 = vld [vmem:[%s17 + $0xb0] sm:$0xff]
    %v2816 = vld [vmem:[%s17 + $0xb8] sm:$0xff]
    %v2817 = vld [vmem:[%s17 + $0xc0] sm:$0xff]
    %v2818 = vld [vmem:[%s17 + $0xc8] sm:$0xff]
    %v2819 = vld [vmem:[%s17 + $0xd0] sm:$0xff]
    %v2820 = vld [vmem:[%s17 + $0xd8] sm:$0xff]
    %v2821 = vld [vmem:[%s17 + $0xe0] sm:$0xff]
    %v2822 = vld [vmem:[%s17 + $0xe8] sm:$0xff]
    %v2823 = vld [vmem:[%s17 + $0xf0] sm:$0xff]
    %v2824 = vld [vmem:[%s17 + $0xf8] sm:$0xff]
    %v2825 = vld [vmem:[%s17 + $0x100] sm:$0xff]
    %v2826 = vld [vmem:[%s17 + $0x108] sm:$0xff]
    %v2827 = vld [vmem:[%s17 + $0x110] sm:$0xff]
    %v2828 = vld [vmem:[%s17 + $0x118] sm:$0xff]
    %v2829 = vld [vmem:[%s17 + $0x120] sm:$0xff]
    %v2830 = vld [vmem:[%s17 + $0x128] sm:$0xff]
    %v2831 = vld [vmem:[%s17 + $0x130] sm:$0xff]
    %v2832 = vld [vmem:[%s17 + $0x138] sm:$0xff]
    %v2833 = vld [vmem:[%s17 + $0x140] sm:$0xff]
    %v2834 = vld [vmem:[%s17 + $0x148] sm:$0xff]
    %v2835 = vld [vmem:[%s17 + $0x150] sm:$0xff]
    %v2836 = vld [vmem:[%s17 + $0x158] sm:$0xff]
    %v2837 = vld [vmem:[%s17 + $0x160] sm:$0xff]
    %v2838 = vld [vmem:[%s17 + $0x168] sm:$0xff]
    %v2839 = vld [vmem:[%s17 + $0x170] sm:$0xff]
    %v2840 = vld [vmem:[%s17 + $0x178] sm:$0xff]
    %v2841 = vld [vmem:[%s17 + $0x180] sm:$0xff]
    %v2842 = vld [vmem:[%s17 + $0x188] sm:$0xff]
    %v2843 = vld [vmem:[%s17 + $0x190] sm:$0xff]
    %v2844 = vld [vmem:[%s17 + $0x198] sm:$0xff]
    %v2845 = vld [vmem:[%s17 + $0x1a0] sm:$0xff]
    %v2846 = vld [vmem:[%s17 + $0x1a8] sm:$0xff]
    %v2847 = vld [vmem:[%s17 + $0x1b0] sm:$0xff]
    %v2848 = vld [vmem:[%s17 + $0x1b8] sm:$0xff]
    %v2849 = vld [vmem:[%s17 + $0x1c0] sm:$0xff]
    %v2850 = vld [vmem:[%s17 + $0x1c8] sm:$0xff]
    %v2851 = vld [vmem:[%s17 + $0x1d0] sm:$0xff]
    %v2852 = vld [vmem:[%s17 + $0x1d8] sm:$0xff]
    %v2853 = vld [vmem:[%s17 + $0x1e0] sm:$0xff]
    %v2854 = vld [vmem:[%s17 + $0x1e8] sm:$0xff]
    %v2855 = vld [vmem:[%s17 + $0x1f0] sm:$0xff]
    %v2856 = vld [vmem:[%s17 + $0x1f8] sm:$0xff]
    %v2857 = vld [vmem:[%s17 + $0x200] sm:$0xff]
    %v2858 = vld [vmem:[%s17 + $0x208] sm:$0xff]
    %v2859 = vld [vmem:[%s17 + $0x210] sm:$0xff]
    %v2860 = vld [vmem:[%s17 + $0x218] sm:$0xff]
    %v2861 = vld [vmem:[%s17 + $0x220] sm:$0xff]
    %v2862 = vld [vmem:[%s17 + $0x228] sm:$0xff]
    %v2863 = vld [vmem:[%s17 + $0x230] sm:$0xff]
    %v2864 = vld [vmem:[%s17 + $0x238] sm:$0xff]
    %v2865 = vld [vmem:[%s17 + $0x240] sm:$0xff]
    %v2866 = vld [vmem:[%s17 + $0x248] sm:$0xff]
    %v2867 = vld [vmem:[%s17 + $0x250] sm:$0xff]
    %v2868 = vld [vmem:[%s17 + $0x258] sm:$0xff]
    %v2869 = vld [vmem:[%s17 + $0x260] sm:$0xff]
    %v2870 = vld [vmem:[%s17 + $0x268] sm:$0xff]
    %v2871 = vld [vmem:[%s17 + $0x270] sm:$0xff]
    %v2872 = vld [vmem:[%s17 + $0x278] sm:$0xff]
    %v2873 = vld [vmem:[%s17 + $0x280] sm:$0xff]
    %v2874 = vld [vmem:[%s17 + $0x288] sm:$0xff]
    %v2875 = vld [vmem:[%s17 + $0x290] sm:$0xff]
    %v2876 = vld [vmem:[%s17 + $0x298] sm:$0xff]
    %v2877 = vld [vmem:[%s17 + $0x2a0] sm:$0xff]
    %v2878 = vld [vmem:[%s17 + $0x2a8] sm:$0xff]
    %v2879 = vld [vmem:[%s17 + $0x2b0] sm:$0xff]
    %v2880 = vld [vmem:[%s17 + $0x2b8] sm:$0xff]
    %v2881 = vld [vmem:[%s17 + $0x2c0] sm:$0xff]
    %v2882 = vld [vmem:[%s17 + $0x2c8] sm:$0xff]
    %v2883 = vld [vmem:[%s17 + $0x2d0] sm:$0xff]
    %v2884 = vld [vmem:[%s17 + $0x2d8] sm:$0xff]
    %v2885 = vld [vmem:[%s17 + $0x2e0] sm:$0xff]
    %v2886 = vld [vmem:[%s17 + $0x2e8] sm:$0xff]
    %v2887 = vld [vmem:[%s17 + $0x2f0] sm:$0xff]
    %v2888 = vld [vmem:[%s17 + $0x2f8] sm:$0xff]
    %v2889 = vld [vmem:[%s17 + $0x300] sm:$0xff]
    %v2890 = vld [vmem:[%s17 + $0x308] sm:$0xff]
    %v2891 = vld [vmem:[%s17 + $0x310] sm:$0xff]
    %v2892 = vld [vmem:[%s17 + $0x318] sm:$0xff]
    %v2893 = vld [vmem:[%s17 + $0x320] sm:$0xff]
    %v2894 = vld [vmem:[%s17 + $0x328] sm:$0xff]
    %v2895 = vld [vmem:[%s17 + $0x330] sm:$0xff]
    %v2896 = vld [vmem:[%s17 + $0x338] sm:$0xff]
    %v2897 = vld [vmem:[%s17 + $0x340] sm:$0xff]
    %v2898 = vld [vmem:[%s17 + $0x348] sm:$0xff]
    %v2899 = vld [vmem:[%s17 + $0x350] sm:$0xff]
    %v2900 = vld [vmem:[%s17 + $0x358] sm:$0xff]
    %v2901 = vld [vmem:[%s17 + $0x360] sm:$0xff]
    %v2902 = vld [vmem:[%s17 + $0x368] sm:$0xff]
    %v2903 = vld [vmem:[%s17 + $0x370] sm:$0xff]
    %v2904 = vld [vmem:[%s17 + $0x378] sm:$0xff]
    %v2905 = vld [vmem:[%s17 + $0x380] sm:$0xff]
    %v2906 = vld [vmem:[%s17 + $0x388] sm:$0xff]
    %v2907 = vld [vmem:[%s17 + $0x390] sm:$0xff]
    %v2908 = vld [vmem:[%s17 + $0x398] sm:$0xff]
    %v2909 = vld [vmem:[%s17 + $0x3a0] sm:$0xff]
    %v2910 = vld [vmem:[%s17 + $0x3a8] sm:$0xff]
    %v2911 = vld [vmem:[%s17 + $0x3b0] sm:$0xff]
    %v2912 = vld [vmem:[%s17 + $0x3b8] sm:$0xff]
    %v2913 = vld [vmem:[%s17 + $0x3c0] sm:$0xff]
    %v2914 = vld [vmem:[%s17 + $0x3c8] sm:$0xff]
    %v2915 = vld [vmem:[%s17 + $0x3d0] sm:$0xff]
    %v2916 = vld [vmem:[%s17 + $0x3d8] sm:$0xff]
    %v2917 = vld [vmem:[%s17 + $0x3e0] sm:$0xff]
    %v2918 = vld [vmem:[%s17 + $0x3e8] sm:$0xff]
    %v2919 = vld [vmem:[%s17 + $0x3f0] sm:$0xff]
    %v2920 = vld [vmem:[%s17 + $0x3f8] sm:$0xff]
    %v2921 = vld [vmem:[%s17 + $0x400] sm:$0xff]
    %v2922 = vld [vmem:[%s17 + $0x408] sm:$0xff]
    %v2923 = vld [vmem:[%s17 + $0x410] sm:$0xff]
    %v2924 = vld [vmem:[%s17 + $0x418] sm:$0xff]
    %v2925 = vld [vmem:[%s17 + $0x420] sm:$0xff]
    %v2926 = vld [vmem:[%s17 + $0x428] sm:$0xff]
    %v2927 = vld [vmem:[%s17 + $0x430] sm:$0xff]
    %v2928 = vld [vmem:[%s17 + $0x438] sm:$0xff]
    %v2929 = vld [vmem:[%s17 + $0x440] sm:$0xff]
    %v2930 = vld [vmem:[%s17 + $0x448] sm:$0xff]
    %v2931 = vld [vmem:[%s17 + $0x450] sm:$0xff]
    %v2932 = vld [vmem:[%s17 + $0x458] sm:$0xff]
    %v2933 = vld [vmem:[%s17 + $0x460] sm:$0xff]
    %v2934 = vld [vmem:[%s17 + $0x468] sm:$0xff]
    %v2935 = vld [vmem:[%s17 + $0x470] sm:$0xff]
    %v2936 = vld [vmem:[%s17 + $0x478] sm:$0xff]
    %v2937 = vld [vmem:[%s17 + $0x480] sm:$0xff]
    %v2938 = vld [vmem:[%s17 + $0x488] sm:$0xff]
    %v2939 = vld [vmem:[%s17 + $0x490] sm:$0xff]
    %v2940 = vld [vmem:[%s17 + $0x498] sm:$0xff]
    %v2941 = vld [vmem:[%s17 + $0x4a0] sm:$0xff]
    %v2942 = vld [vmem:[%s17 + $0x4a8] sm:$0xff]
    %v2943 = vld [vmem:[%s17 + $0x4b0] sm:$0xff]
    %v2944 = vld [vmem:[%s17 + $0x4b8] sm:$0xff]
    %v2945 = vld [vmem:[%s17 + $0x4c0] sm:$0xff]
    %v2946 = vld [vmem:[%s17 + $0x4c8] sm:$0xff]
    %v2947 = vld [vmem:[%s17 + $0x4d0] sm:$0xff]
    %v2948 = vld [vmem:[%s17 + $0x4d8] sm:$0xff]
    %v2949 = vld [vmem:[%s17 + $0x4e0] sm:$0xff]
    %v2950 = vld [vmem:[%s17 + $0x4e8] sm:$0xff]
    %v2951 = vld [vmem:[%s17 + $0x4f0] sm:$0xff]
    %v2952 = vld [vmem:[%s17 + $0x4f8] sm:$0xff]
    %v2953 = vld [vmem:[%s17 + $0x500] sm:$0xff]
    %v2954 = vld [vmem:[%s17 + $0x508] sm:$0xff]
    %v2955 = vld [vmem:[%s17 + $0x510] sm:$0xff]
    %v2956 = vld [vmem:[%s17 + $0x518] sm:$0xff]
    %v2957 = vld [vmem:[%s17 + $0x520] sm:$0xff]
    %v2958 = vld [vmem:[%s17 + $0x528] sm:$0xff]
    %v2959 = vld [vmem:[%s17 + $0x530] sm:$0xff]
    %v2960 = vld [vmem:[%s17 + $0x538] sm:$0xff]
    %v2961 = vld [vmem:[%s17 + $0x540] sm:$0xff]
    %v2962 = vld [vmem:[%s17 + $0x548] sm:$0xff]
    %v2963 = vld [vmem:[%s17 + $0x550] sm:$0xff]
    %v2964 = vld [vmem:[%s17 + $0x558] sm:$0xff]
    %v2965 = vld [vmem:[%s17 + $0x560] sm:$0xff]
    %v2966 = vld [vmem:[%s17 + $0x568] sm:$0xff]
    %v2967 = vld [vmem:[%s17 + $0x570] sm:$0xff]
    %v2968 = vld [vmem:[%s17 + $0x578] sm:$0xff]
    %v2969 = vld [vmem:[%s17 + $0x580] sm:$0xff]
    %v2970 = vld [vmem:[%s17 + $0x588] sm:$0xff]
    %v2971 = vld [vmem:[%s17 + $0x590] sm:$0xff]
    %v2972 = vld [vmem:[%s17 + $0x598] sm:$0xff]
    %v2973 = vld [vmem:[%s17 + $0x5a0] sm:$0xff]
    %v2974 = vld [vmem:[%s17 + $0x5a8] sm:$0xff]
    %v2975 = vld [vmem:[%s17 + $0x5b0] sm:$0xff]
    %v2976 = vld [vmem:[%s17 + $0x5b8] sm:$0xff]
    %v2977 = vld [vmem:[%s17 + $0x5c0] sm:$0xff]
    %v2978 = vld [vmem:[%s17 + $0x5c8] sm:$0xff]
    %v2979 = vld [vmem:[%s17 + $0x5d0] sm:$0xff]
    %v2980 = vld [vmem:[%s17 + $0x5d8] sm:$0xff]
    %v2981 = vld [vmem:[%s17 + $0x5e0] sm:$0xff]
    %v2982 = vld [vmem:[%s17 + $0x5e8] sm:$0xff]
    %v2983 = vld [vmem:[%s17 + $0x5f0] sm:$0xff]
    %v2984 = vld [vmem:[%s17 + $0x5f8] sm:$0xff]
    %v2985 = vld [vmem:[%s17 + $0x600] sm:$0xff]
    %v2986 = vld [vmem:[%s17 + $0x608] sm:$0xff]
    %v2987 = vld [vmem:[%s17 + $0x610] sm:$0xff]
    %v2988 = vld [vmem:[%s17 + $0x618] sm:$0xff]
    %v2990 = vsel %vm1841, %v2785, 0
    %v2993 = vsel %vm1841, %v2792, 0
    %2995 = vmatprep.subr.mxu0 %v2794
    %2996 = vmatpush1.msra.mxu0 %v2793
    %2997 = vmatprep.subr.mxu0 %v2796
    %2998 = vmatpush1.msra.mxu0 %v2795
    %2999 = vmatprep.subr.mxu0 %v2798
    %3000 = vmatpush1.msra.mxu0 %v2797
    %3001 = vmatprep.subr.mxu0 %v2800
    %3002 = vmatpush1.msra.mxu0 %v2799
    %3003 = vmatprep.subr.mxu0 %v2802
    %3004 = vmatpush1.msra.mxu0 %v2801
    %3005 = vmatprep.subr.mxu0 %v2804
    %3006 = vmatpush1.msra.mxu0 %v2803
    %3007 = vmatprep.subr.mxu0 %v2806
    %3008 = vmatpush1.msra.mxu0 %v2805
    %3009 = vmatprep.subr.mxu0 %v2808
    %3010 = vmatpush1.msra.mxu0 %v2807
    %3011 = vmatprep.subr.mxu0 %v2810
    %3012 = vmatpush1.msra.mxu0 %v2809
    %3013 = vmatprep.subr.mxu0 %v2812
    %3014 = vmatpush1.msra.mxu0 %v2811
    %3015 = vmatprep.subr.mxu0 %v2814
    %3016 = vmatpush1.msra.mxu0 %v2813
    %3017 = vmatprep.subr.mxu0 %v2816
    %3018 = vmatpush1.msra.mxu0 %v2815
    %3019 = vmatprep.subr.mxu0 %v2818
    %3020 = vmatpush1.msra.mxu0 %v2817
    %3021 = vmatprep.subr.mxu0 %v2820
    %3022 = vmatpush1.msra.mxu0 %v2819
    %3023 = vmatprep.subr.mxu0 %v2822
    %3024 = vmatpush1.msra.mxu0 %v2821
    %3025 = vmatprep.subr.mxu0 %v2824
    %3026 = vmatpush1.msra.mxu0 %v2823
    %3027 = vmatprep.subr.mxu0 %v2826
    %3028 = vmatpush1.msra.mxu0 %v2825
    %3029 = vmatprep.subr.mxu0 %v2828
    %3030 = vmatpush1.msra.mxu0 %v2827
    %3031 = vmatprep.subr.mxu0 %v2830
    %3032 = vmatpush1.msra.mxu0 %v2829
    %3033 = vmatprep.subr.mxu0 %v2832
    %3034 = vmatpush1.msra.mxu0 %v2831
    %3035 = vmatprep.subr.mxu0 %v2834
    %3036 = vmatpush1.msra.mxu0 %v2833
    %3037 = vmatprep.subr.mxu0 %v2836
    %3038 = vmatpush1.msra.mxu0 %v2835
    %3039 = vmatprep.subr.mxu0 %v2838
    %3040 = vmatpush1.msra.mxu0 %v2837
    %3041 = vmatprep.subr.mxu0 %v2840
    %3042 = vmatpush1.msra.mxu0 %v2839
    %3043 = vmatprep.subr.mxu0 %v2842
    %3044 = vmatpush1.msra.mxu0 %v2841
    %3045 = vmatprep.subr.mxu0 %v2844
    %3046 = vmatpush1.msra.mxu0 %v2843
    %3047 = vmatprep.subr.mxu0 %v2846
    %3048 = vmatpush1.msra.mxu0 %v2845
    %3049 = vmatprep.subr.mxu0 %v2848
    %3050 = vmatpush1.msra.mxu0 %v2847
    %3051 = vmatprep.subr.mxu0 %v2850
    %3052 = vmatpush1.msra.mxu0 %v2849
    %3053 = vmatprep.subr.mxu0 %v2852
    %3054 = vmatpush1.msra.mxu0 %v2851
    %3055 = vmatprep.subr.mxu0 %v2854
    %3056 = vmatpush1.msra.mxu0 %v2853
    %3057 = vmatprep.subr.mxu0 %v2856
    %3058 = vmatpush1.msra.mxu0 %v2855
    %3059 = vmatprep.mubr.f32.mxu0 %v2780
    %3060 = vmatmul.mubr.f32.gmra.mrb[0].mxu0 %v2779
    %v3061 = vpop.f32.mrb[0].mxu0
    %v3062 = vadd.f32 0.0, %v3061
    %v3063 = vpop.f32.mrb[0].mxu0
    %v3064 = vadd.f32 0.0, %v3063
    %3065 = vmatprep.mubr.f32.mxu0 %v2787
    %3066 = vmatmul.mubr.f32.gmra.mrb[0].mxu0 %v2786
    %v3067 = vpop.f32.mrb[0].mxu0
    %v3068 = vadd.f32 0.0, %v3067
    %v3069 = vpop.f32.mrb[0].mxu0
    %v3070 = vadd.f32 0.0, %v3069
    %3071 = vdwg.mxu0
    %3072 = vmatprep.subr.mxu0 %v2858
    %3073 = vmatpush1.msra.mxu0 %v2857
    %3074 = vmatprep.subr.mxu0 %v2860
    %3075 = vmatpush1.msra.mxu0 %v2859
    %3076 = vmatprep.subr.mxu0 %v2862
    %3077 = vmatpush1.msra.mxu0 %v2861
    %3078 = vmatprep.subr.mxu0 %v2864
    %3079 = vmatpush1.msra.mxu0 %v2863
    %3080 = vmatprep.subr.mxu0 %v2866
    %3081 = vmatpush1.msra.mxu0 %v2865
    %3082 = vmatprep.subr.mxu0 %v2868
    %3083 = vmatpush1.msra.mxu0 %v2867
    %3084 = vmatprep.subr.mxu0 %v2870
    %3085 = vmatpush1.msra.mxu0 %v2869
    %3086 = vmatprep.subr.mxu0 %v2872
    %3087 = vmatpush1.msra.mxu0 %v2871
    %3088 = vmatprep.subr.mxu0 %v2874
    %3089 = vmatpush1.msra.mxu0 %v2873
    %3090 = vmatprep.subr.mxu0 %v2876
    %3091 = vmatpush1.msra.mxu0 %v2875
    %3092 = vmatprep.subr.mxu0 %v2878
    %3093 = vmatpush1.msra.mxu0 %v2877
    %3094 = vmatprep.subr.mxu0 %v2880
    %3095 = vmatpush1.msra.mxu0 %v2879
    %3096 = vmatprep.subr.mxu0 %v2882
    %3097 = vmatpush1.msra.mxu0 %v2881
    %3098 = vmatprep.subr.mxu0 %v2884
    %3099 = vmatpush1.msra.mxu0 %v2883
    %3100 = vmatprep.subr.mxu0 %v2886
    %3101 = vmatpush1.msra.mxu0 %v2885
    %3102 = vmatprep.subr.mxu0 %v2888
    %3103 = vmatpush1.msra.mxu0 %v2887
    %3104 = vmatprep.subr.mxu0 %v2890
    %3105 = vmatpush1.msra.mxu0 %v2889
    %3106 = vmatprep.subr.mxu0 %v2892
    %3107 = vmatpush1.msra.mxu0 %v2891
    %3108 = vmatprep.subr.mxu0 %v2894
    %3109 = vmatpush1.msra.mxu0 %v2893
    %3110 = vmatprep.subr.mxu0 %v2896
    %3111 = vmatpush1.msra.mxu0 %v2895
    %3112 = vmatprep.subr.mxu0 %v2898
    %3113 = vmatpush1.msra.mxu0 %v2897
    %3114 = vmatprep.subr.mxu0 %v2900
    %3115 = vmatpush1.msra.mxu0 %v2899
    %3116 = vmatprep.subr.mxu0 %v2902
    %3117 = vmatpush1.msra.mxu0 %v2901
    %3118 = vmatprep.subr.mxu0 %v2904
    %3119 = vmatpush1.msra.mxu0 %v2903
    %3120 = vmatprep.subr.mxu0 %v2906
    %3121 = vmatpush1.msra.mxu0 %v2905
    %3122 = vmatprep.subr.mxu0 %v2908
    %3123 = vmatpush1.msra.mxu0 %v2907
    %3124 = vmatprep.subr.mxu0 %v2910
    %3125 = vmatpush1.msra.mxu0 %v2909
    %3126 = vmatprep.subr.mxu0 %v2912
    %3127 = vmatpush1.msra.mxu0 %v2911
    %3128 = vmatprep.subr.mxu0 %v2914
    %3129 = vmatpush1.msra.mxu0 %v2913
    %3130 = vmatprep.subr.mxu0 %v2916
    %3131 = vmatpush1.msra.mxu0 %v2915
    %3132 = vmatprep.subr.mxu0 %v2918
    %3133 = vmatpush1.msra.mxu0 %v2917
    %3134 = vmatprep.subr.mxu0 %v2920
    %3135 = vmatpush1.msra.mxu0 %v2919
    %3136 = vmatprep.mubr.f32.mxu0 %v2782
    %3137 = vmatmul.mubr.f32.gmra.mrb[0].mxu0 %v2781
    %v3138 = vpop.f32.mrb[0].mxu0
    %v3139 = vadd.f32 %v3062, %v3138
    %v3140 = vpop.f32.mrb[0].mxu0
    %v3141 = vadd.f32 %v3064, %v3140
    %3142 = vmatprep.mubr.f32.mxu0 %v2789
    %3143 = vmatmul.mubr.f32.gmra.mrb[0].mxu0 %v2788
    %v3144 = vpop.f32.mrb[0].mxu0
    %v3145 = vadd.f32 %v3068, %v3144
    %v3146 = vpop.f32.mrb[0].mxu0
    %v3147 = vadd.f32 %v3070, %v3146
    %3148 = vdwg.mxu0
    %3149 = vmatprep.subr.mxu0 %v2922
    %3150 = vmatpush1.msra.mxu0 %v2921
    %3151 = vmatprep.subr.mxu0 %v2924
    %3152 = vmatpush1.msra.mxu0 %v2923
    %3153 = vmatprep.subr.mxu0 %v2926
    %3154 = vmatpush1.msra.mxu0 %v2925
    %3155 = vmatprep.subr.mxu0 %v2928
    %3156 = vmatpush1.msra.mxu0 %v2927
    %3157 = vmatprep.subr.mxu0 %v2930
    %3158 = vmatpush1.msra.mxu0 %v2929
    %3159 = vmatprep.subr.mxu0 %v2932
    %3160 = vmatpush1.msra.mxu0 %v2931
    %3161 = vmatprep.subr.mxu0 %v2934
    %3162 = vmatpush1.msra.mxu0 %v2933
    %3163 = vmatprep.subr.mxu0 %v2936
    %3164 = vmatpush1.msra.mxu0 %v2935
    %3165 = vmatprep.subr.mxu0 %v2938
    %3166 = vmatpush1.msra.mxu0 %v2937
    %3167 = vmatprep.subr.mxu0 %v2940
    %3168 = vmatpush1.msra.mxu0 %v2939
    %3169 = vmatprep.subr.mxu0 %v2942
    %3170 = vmatpush1.msra.mxu0 %v2941
    %3171 = vmatprep.subr.mxu0 %v2944
    %3172 = vmatpush1.msra.mxu0 %v2943
    %3173 = vmatprep.subr.mxu0 %v2946
    %3174 = vmatpush1.msra.mxu0 %v2945
    %3175 = vmatprep.subr.mxu0 %v2948
    %3176 = vmatpush1.msra.mxu0 %v2947
    %3177 = vmatprep.subr.mxu0 %v2950
    %3178 = vmatpush1.msra.mxu0 %v2949
    %3179 = vmatprep.subr.mxu0 %v2952
    %3180 = vmatpush1.msra.mxu0 %v2951
    %3181 = vmatprep.subr.mxu0 %v2954
    %3182 = vmatpush1.msra.mxu0 %v2953
    %3183 = vmatprep.subr.mxu0 %v2956
    %3184 = vmatpush1.msra.mxu0 %v2955
    %3185 = vmatprep.subr.mxu0 %v2958
    %3186 = vmatpush1.msra.mxu0 %v2957
    %3187 = vmatprep.subr.mxu0 %v2960
    %3188 = vmatpush1.msra.mxu0 %v2959
    %3189 = vmatprep.subr.mxu0 %v2962
    %3190 = vmatpush1.msra.mxu0 %v2961
    %3191 = vmatprep.subr.mxu0 %v2964
    %3192 = vmatpush1.msra.mxu0 %v2963
    %3193 = vmatprep.subr.mxu0 %v2966
    %3194 = vmatpush1.msra.mxu0 %v2965
    %3195 = vmatprep.subr.mxu0 %v2968
    %3196 = vmatpush1.msra.mxu0 %v2967
    %3197 = vmatprep.subr.mxu0 %v2970
    %3198 = vmatpush1.msra.mxu0 %v2969
    %3199 = vmatprep.subr.mxu0 %v2972
    %3200 = vmatpush1.msra.mxu0 %v2971
    %3201 = vmatprep.subr.mxu0 %v2974
    %3202 = vmatpush1.msra.mxu0 %v2973
    %3203 = vmatprep.subr.mxu0 %v2976
    %3204 = vmatpush1.msra.mxu0 %v2975
    %3205 = vmatprep.subr.mxu0 %v2978
    %3206 = vmatpush1.msra.mxu0 %v2977
    %3207 = vmatprep.subr.mxu0 %v2980
    %3208 = vmatpush1.msra.mxu0 %v2979
    %3209 = vmatprep.subr.mxu0 %v2982
    %3210 = vmatpush1.msra.mxu0 %v2981
    %3211 = vmatprep.subr.mxu0 %v2984
    %3212 = vmatpush1.msra.mxu0 %v2983
    %3213 = vmatprep.mubr.f32.mxu0 %v2784
    %3214 = vmatmul.mubr.f32.gmra.mrb[0].mxu0 %v2783
    %v3215 = vpop.f32.mrb[0].mxu0
    %v3216 = vadd.f32 %v3139, %v3215
    %v3217 = vpop.f32.mrb[0].mxu0
    %v3218 = vadd.f32 %v3141, %v3217
    %3219 = vmatprep.mubr.f32.mxu0 %v2791
    %3220 = vmatmul.mubr.f32.gmra.mrb[0].mxu0 %v2790
    %v3221 = vpop.f32.mrb[0].mxu0
    %v3222 = vadd.f32 %v3145, %v3221
    %v3223 = vpop.f32.mrb[0].mxu0
    %v3224 = vadd.f32 %v3147, %v3223
    %3225 = vdwg.mxu0
    %3226 = vmatprep.subr.mxu0 %v2986
    %3227 = vmatpush1.msra.mxu0 %v2985
    %3228 = vmatprep.subr.mxu0 %v2988
    %3229 = vmatpush1.msra.mxu0 %v2987
    %3230 = vmatprep.subr.mxu0 0.0
    %3231 = vmatpush1.msra.mxu0 0.0
    %3232 = vmatprep.subr.mxu0 0.0
    %3233 = vmatpush1.msra.mxu0 0.0
    %3234 = vmatprep.subr.mxu0 0.0
    %3235 = vmatpush1.msra.mxu0 0.0
    %3236 = vmatprep.subr.mxu0 0.0
    %3237 = vmatpush1.msra.mxu0 0.0
    %3238 = vmatprep.subr.mxu0 0.0
    %3239 = vmatpush1.msra.mxu0 0.0
    %3240 = vmatprep.subr.mxu0 0.0
    %3241 = vmatpush1.msra.mxu0 0.0
    %3242 = vmatprep.subr.mxu0 0.0
    %3243 = vmatpush1.msra.mxu0 0.0
    %3244 = vmatprep.subr.mxu0 0.0
    %3245 = vmatpush1.msra.mxu0 0.0
    %3246 = vmatprep.subr.mxu0 0.0
    %3247 = vmatpush1.msra.mxu0 0.0
    %3248 = vmatprep.subr.mxu0 0.0
    %3249 = vmatpush1.msra.mxu0 0.0
    %3250 = vmatprep.subr.mxu0 0.0
    %3251 = vmatpush1.msra.mxu0 0.0
    %3252 = vmatprep.subr.mxu0 0.0
    %3253 = vmatpush1.msra.mxu0 0.0
    %3254 = vmatprep.subr.mxu0 0.0
    %3255 = vmatpush1.msra.mxu0 0.0
    %3256 = vmatprep.subr.mxu0 0.0
    %3257 = vmatpush1.msra.mxu0 0.0
    %3258 = vmatprep.subr.mxu0 0.0
    %3259 = vmatpush1.msra.mxu0 0.0
    %3260 = vmatprep.subr.mxu0 0.0
    %3261 = vmatpush1.msra.mxu0 0.0
    %3262 = vmatprep.subr.mxu0 0.0
    %3263 = vmatpush1.msra.mxu0 0.0
    %3264 = vmatprep.subr.mxu0 0.0
    %3265 = vmatpush1.msra.mxu0 0.0
    %3266 = vmatprep.subr.mxu0 0.0
    %3267 = vmatpush1.msra.mxu0 0.0
    %3268 = vmatprep.subr.mxu0 0.0
    %3269 = vmatpush1.msra.mxu0 0.0
    %3270 = vmatprep.subr.mxu0 0.0
    %3271 = vmatpush1.msra.mxu0 0.0
    %3272 = vmatprep.subr.mxu0 0.0
    %3273 = vmatpush1.msra.mxu0 0.0
    %3274 = vmatprep.subr.mxu0 0.0
    %3275 = vmatpush1.msra.mxu0 0.0
    %3276 = vmatprep.subr.mxu0 0.0
    %3277 = vmatpush1.msra.mxu0 0.0
    %3278 = vmatprep.subr.mxu0 0.0
    %3279 = vmatpush1.msra.mxu0 0.0
    %3280 = vmatprep.subr.mxu0 0.0
    %3281 = vmatpush1.msra.mxu0 0.0
    %3282 = vmatprep.subr.mxu0 0.0
    %3283 = vmatpush1.msra.mxu0 0.0
    %3284 = vmatprep.subr.mxu0 0.0
    %3285 = vmatpush1.msra.mxu0 0.0
    %3286 = vmatprep.subr.mxu0 0.0
    %3287 = vmatpush1.msra.mxu0 0.0
    %3288 = vmatprep.subr.mxu0 0.0
    %3289 = vmatpush1.msra.mxu0 0.0
    %3290 = vmatprep.mubr.f32.mxu0 0.0
    %3291 = vmatmul.mubr.f32.gmra.mrb[0].mxu0 %v2990
    %v3292 = vpop.f32.mrb[0].mxu0
    %v3293 = vadd.f32 %v3216, %v3292
    %v3294 = vpop.f32.mrb[0].mxu0
    %v3295 = vadd.f32 %v3218, %v3294
    %3296 = vmatprep.mubr.f32.mxu0 0.0
    %3297 = vmatmul.mubr.f32.gmra.mrb[0].mxu0 %v2993
    %v3298 = vpop.f32.mrb[0].mxu0
    %v3299 = vadd.f32 %v3222, %v3298
    %v3300 = vpop.f32.mrb[0].mxu0
    %v3301 = vadd.f32 %v3224, %v3300
    %3302 = vdwg.mxu0
    %3303 = vst.msk [vmem:[#allocation5] sm:$0xff] %vm1841, 0.0
    %3304 = vst.msk [vmem:[#allocation5 + $0x10] sm:$0xff] %vm1841, 0.0
    %3309 = vrot.lane.b32.xlu0 %v3293, 16
    %v3310 = vpop.permute.xlu0 %3309
    %3311 = vrot.lane.b32.xlu0 %v3295, 16
    %v3312 = vpop.permute.xlu0 %3311
    %3313 = vrot.lane.b32.xlu0 %v3299, 16
    %v3314 = vpop.permute.xlu0 %3313
    %3315 = vrot.lane.b32.xlu0 %v3301, 16
    %v3316 = vpop.permute.xlu0 %3315
    %v3317 = vsel %vm1841, %v3310, %v3312
    %v3318 = vsel %vm1841, %v3314, %v3316
    %vm3323 = vcmask 1047680
    %3324 = vst.msk [vmem:[#allocation5] sm:$0xff] %vm3323, %v3310
    %vm3325 = vcmask 687104
    %3326 = vst.msk [vmem:[#allocation5 + $0x8] sm:$0xff] %vm3325, %v3317
    %3327 = vst.msk [vmem:[#allocation5 + $0x10] sm:$0xff] %vm3323, %v3314
    %3328 = vst.msk [vmem:[#allocation5 + $0x18] sm:$0xff] %vm3325, %v3318
    %vm3329 = vcmask 818848
    %3330 = vst.msk [vmem:[#allocation5 + $0x8] sm:$0xff] %vm3329, 0.0
    %3331 = vst.msk [vmem:[#allocation5 + $0x18] sm:$0xff] %vm3329, 0.0
    %v3332 = vld [vmem:[#allocation5] sm:$0xff]
    %v3333 = vld [vmem:[#allocation5 + $0x8] sm:$0xff]
    %v3334 = vld [vmem:[#allocation5 + $0x10] sm:$0xff]
    %v3335 = vld [vmem:[#allocation5 + $0x18] sm:$0xff]
    %v3336 = vld [vmem:[%s16] ss:$8 sm:$0x3]
    %v3338 = vlaneseq
    %v3339 = vshrl.u32 %v3338, 7
    %v3340 = vsub.s32 0, %v3339
    %v3341 = vrot.slane %v3336, %v3340
    %v3342 = vlaneseq
    %v3343 = vshrl.u32 %v3342, 7
    %v3344 = vsub.s32 1, %v3343
    %v3345 = vrot.slane %v3336, %v3344
    %3346 = vrot.lane.b32.xlu0 %v3341, 1
    %v3347 = vpop.permute.xlu0 %3346
    %3348 = vrot.lane.b32.xlu0 %v3345, 1
    %v3349 = vpop.permute.xlu0 %3348
    %vm3350 = vcmask 7168
    %v3351 = vsel %vm3350, %v3347, %v3349
    %v3354 = vmul.f32 %v3332, %v3347
    %v3355 = vmul.f32 %v3333, %v3351
    %v3356 = vmul.f32 %v3334, %v3347
    %v3357 = vmul.f32 %v3335, %v3351
    %3362 = vrot.lane.b32.xlu0 %v3354, 127
    %v3363 = vpop.permute.xlu0 %3362
    %3364 = vrot.lane.b32.xlu0 %v3355, 127
    %v3365 = vpop.permute.xlu0 %3364
    %3366 = vrot.lane.b32.xlu0 %v3356, 127
    %v3367 = vpop.permute.xlu0 %3366
    %3368 = vrot.lane.b32.xlu0 %v3357, 127
    %v3369 = vpop.permute.xlu0 %3368
    %v3370 = vsel %vm2669, %v3363, %v3365
    %v3371 = vsel %vm2669, %v3367, %v3369
    %3376 = vst [vmem:[#allocation6] sm:$0xff] %v3370
    %3377 = vst.msk [vmem:[#allocation6 + $0x8] sm:$0xff] %vm1297, %v3365
    %3378 = vst [vmem:[#allocation6 + $0x10] sm:$0xff] %v3371
    %3379 = vst.msk [vmem:[#allocation6 + $0x18] sm:$0xff] %vm1297, %v3369
    %v3380 = vld [vmem:[#allocation5] sm:$0xff]
    %v3381 = vld [vmem:[#allocation5 + $0x8] sm:$0xff]
    %v3382 = vld [vmem:[#allocation5 + $0x10] sm:$0xff]
    %v3383 = vld [vmem:[#allocation5 + $0x18] sm:$0xff]
    %s3384 = scalar_lea.vmem %s16, 1
    %v3385 = vld [vmem:[%s3384] ss:$8 sm:$0x3]
    %v3387 = vlaneseq
    %v3388 = vshrl.u32 %v3387, 7
    %v3389 = vsub.s32 0, %v3388
    %v3390 = vrot.slane %v3385, %v3389
    %v3391 = vlaneseq
    %v3392 = vshrl.u32 %v3391, 7
    %v3393 = vsub.s32 1, %v3392
    %v3394 = vrot.slane %v3385, %v3393
    %3395 = vrot.lane.b32.xlu0 %v3390, 2
    %v3396 = vpop.permute.xlu0 %3395
    %3397 = vrot.lane.b32.xlu0 %v3394, 2
    %v3398 = vpop.permute.xlu0 %3397
    %vm3399 = vcmask 15360
    %v3400 = vsel %vm3399, %v3396, %v3398
    %v3403 = vmul.f32 %v3380, %v3396
    %v3404 = vmul.f32 %v3381, %v3400
    %v3405 = vmul.f32 %v3382, %v3396
    %v3406 = vmul.f32 %v3383, %v3400
    %3411 = vrot.lane.b32.xlu0 %v3403, 126
    %v3412 = vpop.permute.xlu0 %3411
    %3413 = vrot.lane.b32.xlu0 %v3404, 126
    %v3414 = vpop.permute.xlu0 %3413
    %3415 = vrot.lane.b32.xlu0 %v3405, 126
    %v3416 = vpop.permute.xlu0 %3415
    %3417 = vrot.lane.b32.xlu0 %v3406, 126
    %v3418 = vpop.permute.xlu0 %3417
    %vm3419 = vcmask 1031168
    %v3420 = vsel %vm3419, %v3412, %v3414
    %v3421 = vsel %vm3419, %v3416, %v3418
    %3426 = vst [vmem:[#allocation6 + $0x20] sm:$0xff] %v3420
    %3427 = vst.msk [vmem:[#allocation6 + $0x28] sm:$0xff] %vm1297, %v3414
    %3428 = vst [vmem:[#allocation6 + $0x30] sm:$0xff] %v3421
    %3429 = vst.msk [vmem:[#allocation6 + $0x38] sm:$0xff] %vm1297, %v3418
    %v3430 = vld [vmem:[#allocation5] sm:$0xff]
    %v3431 = vld [vmem:[#allocation5 + $0x8] sm:$0xff]
    %v3432 = vld [vmem:[#allocation5 + $0x10] sm:$0xff]
    %v3433 = vld [vmem:[#allocation5 + $0x18] sm:$0xff]
    %s3434 = scalar_lea.vmem %s16, 2
    %v3435 = vld [vmem:[%s3434] ss:$8 sm:$0x3]
    %v3437 = vlaneseq
    %v3438 = vshrl.u32 %v3437, 7
    %v3439 = vsub.s32 0, %v3438
    %v3440 = vrot.slane %v3435, %v3439
    %v3441 = vlaneseq
    %v3442 = vshrl.u32 %v3441, 7
    %v3443 = vsub.s32 1, %v3442
    %v3444 = vrot.slane %v3435, %v3443
    %3445 = vrot.lane.b32.xlu0 %v3440, 3
    %v3446 = vpop.permute.xlu0 %3445
    %3447 = vrot.lane.b32.xlu0 %v3444, 3
    %v3448 = vpop.permute.xlu0 %3447
    %v3449 = vsel %vm169, %v3446, %v3448
    %v3452 = vmul.f32 %v3430, %v3446
    %v3453 = vmul.f32 %v3431, %v3449
    %v3454 = vmul.f32 %v3432, %v3446
    %v3455 = vmul.f32 %v3433, %v3449
    %3460 = vrot.lane.b32.xlu0 %v3452, 125
    %v3461 = vpop.permute.xlu0 %3460
    %3462 = vrot.lane.b32.xlu0 %v3453, 125
    %v3463 = vpop.permute.xlu0 %3462
    %3464 = vrot.lane.b32.xlu0 %v3454, 125
    %v3465 = vpop.permute.xlu0 %3464
    %3466 = vrot.lane.b32.xlu0 %v3455, 125
    %v3467 = vpop.permute.xlu0 %3466
    %v3468 = vsel %vm226, %v3461, %v3463
    %v3469 = vsel %vm226, %v3465, %v3467
    %3474 = vst [vmem:[#allocation6 + $0x40] sm:$0xff] %v3468
    %3475 = vst.msk [vmem:[#allocation6 + $0x48] sm:$0xff] %vm1297, %v3463
    %3476 = vst [vmem:[#allocation6 + $0x50] sm:$0xff] %v3469
    %3477 = vst.msk [vmem:[#allocation6 + $0x58] sm:$0xff] %vm1297, %v3467
    %v3478 = vld [vmem:[#allocation5] sm:$0xff]
    %v3479 = vld [vmem:[#allocation5 + $0x8] sm:$0xff]
    %v3480 = vld [vmem:[#allocation5 + $0x10] sm:$0xff]
    %v3481 = vld [vmem:[#allocation5 + $0x18] sm:$0xff]
    %s3482 = scalar_lea.vmem %s16, 3
    %v3483 = vld [vmem:[%s3482] ss:$8 sm:$0x3]
    %v3485 = vlaneseq
    %v3486 = vshrl.u32 %v3485, 7
    %v3487 = vsub.s32 0, %v3486
    %v3488 = vrot.slane %v3483, %v3487
    %v3489 = vlaneseq
    %v3490 = vshrl.u32 %v3489, 7
    %v3491 = vsub.s32 1, %v3490
    %v3492 = vrot.slane %v3483, %v3491
    %3493 = vrot.lane.b32.xlu0 %v3488, 15
    %v3494 = vpop.permute.xlu0 %3493
    %3495 = vrot.lane.b32.xlu0 %v3492, 15
    %v3496 = vpop.permute.xlu0 %3495
    %vm3497 = vcmask 121856
    %v3498 = vsel %vm3497, %v3494, %v3496
    %v3501 = vmul.f32 %v3478, %v3494
    %v3502 = vmul.f32 %v3479, %v3498
    %v3503 = vmul.f32 %v3480, %v3494
    %v3504 = vmul.f32 %v3481, %v3498
    %3509 = vrot.lane.b32.xlu0 %v3501, 113
    %v3510 = vpop.permute.xlu0 %3509
    %3511 = vrot.lane.b32.xlu0 %v3502, 113
    %v3512 = vpop.permute.xlu0 %3511
    %3513 = vrot.lane.b32.xlu0 %v3503, 113
    %v3514 = vpop.permute.xlu0 %3513
    %3515 = vrot.lane.b32.xlu0 %v3504, 113
    %v3516 = vpop.permute.xlu0 %3515
    %vm3517 = vcmask 924672
    %v3518 = vsel %vm3517, %v3510, %v3512
    %v3519 = vsel %vm3517, %v3514, %v3516
    %3524 = vst [vmem:[#allocation6 + $0x60] sm:$0xff] %v3518
    %3525 = vst.msk [vmem:[#allocation6 + $0x68] sm:$0xff] %vm1297, %v3512
    %3526 = vst [vmem:[#allocation6 + $0x70] sm:$0xff] %v3519
    %3527 = vst.msk [vmem:[#allocation6 + $0x78] sm:$0xff] %vm1297, %v3516
    %v3528 = vld [vmem:[#allocation5] sm:$0xff]
    %v3529 = vld [vmem:[#allocation5 + $0x8] sm:$0xff]
    %v3530 = vld [vmem:[#allocation5 + $0x10] sm:$0xff]
    %v3531 = vld [vmem:[#allocation5 + $0x18] sm:$0xff]
    %s3532 = scalar_lea.vmem %s16, 4
    %v3533 = vld [vmem:[%s3532] ss:$8 sm:$0x3]
    %v3535 = vlaneseq
    %v3536 = vshrl.u32 %v3535, 7
    %v3537 = vsub.s32 0, %v3536
    %v3538 = vrot.slane %v3533, %v3537
    %v3539 = vlaneseq
    %v3540 = vshrl.u32 %v3539, 7
    %v3541 = vsub.s32 1, %v3540
    %v3542 = vrot.slane %v3533, %v3541
    %3543 = vrot.lane.b32.xlu0 %v3538, 16
    %v3544 = vpop.permute.xlu0 %3543
    %3545 = vrot.lane.b32.xlu0 %v3542, 16
    %v3546 = vpop.permute.xlu0 %3545
    %v3547 = vsel %vm1841, %v3544, %v3546
    %v3550 = vmul.f32 %v3528, %v3544
    %v3551 = vmul.f32 %v3529, %v3547
    %v3552 = vmul.f32 %v3530, %v3544
    %v3553 = vmul.f32 %v3531, %v3547
    %3558 = vrot.lane.b32.xlu0 %v3550, 112
    %v3559 = vpop.permute.xlu0 %3558
    %3560 = vrot.lane.b32.xlu0 %v3551, 112
    %v3561 = vpop.permute.xlu0 %3560
    %3562 = vrot.lane.b32.xlu0 %v3552, 112
    %v3563 = vpop.permute.xlu0 %3562
    %3564 = vrot.lane.b32.xlu0 %v3553, 112
    %v3565 = vpop.permute.xlu0 %3564
    %vm3566 = vcmask 916480
    %v3567 = vsel %vm3566, %v3559, %v3561
    %v3568 = vsel %vm3566, %v3563, %v3565
    %3573 = vst [vmem:[#allocation6 + $0x80] sm:$0xff] %v3567
    %3574 = vst.msk [vmem:[#allocation6 + $0x88] sm:$0xff] %vm1297, %v3561
    %3575 = vst [vmem:[#allocation6 + $0x90] sm:$0xff] %v3568
    %3576 = vst.msk [vmem:[#allocation6 + $0x98] sm:$0xff] %vm1297, %v3565
    %v3577 = vld [vmem:[#allocation5] sm:$0xff]
    %v3578 = vld [vmem:[#allocation5 + $0x8] sm:$0xff]
    %v3579 = vld [vmem:[#allocation5 + $0x10] sm:$0xff]
    %v3580 = vld [vmem:[#allocation5 + $0x18] sm:$0xff]
    %s3581 = scalar_lea.vmem %s16, 5
    %v3582 = vld [vmem:[%s3581] ss:$8 sm:$0x3]
    %v3584 = vlaneseq
    %v3585 = vshrl.u32 %v3584, 7
    %v3586 = vsub.s32 0, %v3585
    %v3587 = vrot.slane %v3582, %v3586
    %v3588 = vlaneseq
    %v3589 = vshrl.u32 %v3588, 7
    %v3590 = vsub.s32 1, %v3589
    %v3591 = vrot.slane %v3582, %v3590
    %3592 = vrot.lane.b32.xlu0 %v3587, 17
    %v3593 = vpop.permute.xlu0 %3592
    %3594 = vrot.lane.b32.xlu0 %v3591, 17
    %v3595 = vpop.permute.xlu0 %3594
    %vm3596 = vcmask 138240
    %v3597 = vsel %vm3596, %v3593, %v3595
    %v3600 = vmul.f32 %v3577, %v3593
    %v3601 = vmul.f32 %v3578, %v3597
    %v3602 = vmul.f32 %v3579, %v3593
    %v3603 = vmul.f32 %v3580, %v3597
    %3608 = vrot.lane.b32.xlu0 %v3600, 111
    %v3609 = vpop.permute.xlu0 %3608
    %3610 = vrot.lane.b32.xlu0 %v3601, 111
    %v3611 = vpop.permute.xlu0 %3610
    %3612 = vrot.lane.b32.xlu0 %v3602, 111
    %v3613 = vpop.permute.xlu0 %3612
    %3614 = vrot.lane.b32.xlu0 %v3603, 111
    %v3615 = vpop.permute.xlu0 %3614
    %vm3616 = vcmask 908288
    %v3617 = vsel %vm3616, %v3609, %v3611
    %v3618 = vsel %vm3616, %v3613, %v3615
    %3623 = vst [vmem:[#allocation6 + $0xa0] sm:$0xff] %v3617
    %3624 = vst.msk [vmem:[#allocation6 + $0xa8] sm:$0xff] %vm1297, %v3611
    %3625 = vst [vmem:[#allocation6 + $0xb0] sm:$0xff] %v3618
    %3626 = vst.msk [vmem:[#allocation6 + $0xb8] sm:$0xff] %vm1297, %v3615
    %v3627 = vld [vmem:[#allocation5] sm:$0xff]
    %v3628 = vld [vmem:[#allocation5 + $0x8] sm:$0xff]
    %v3629 = vld [vmem:[#allocation5 + $0x10] sm:$0xff]
    %v3630 = vld [vmem:[#allocation5 + $0x18] sm:$0xff]
    %s3631 = scalar_lea.vmem %s16, 6
    %v3632 = vld [vmem:[%s3631] ss:$8 sm:$0x3]
    %v3634 = vlaneseq
    %v3635 = vshrl.u32 %v3634, 7
    %v3636 = vsub.s32 0, %v3635
    %v3637 = vrot.slane %v3632, %v3636
    %v3638 = vlaneseq
    %v3639 = vshrl.u32 %v3638, 7
    %v3640 = vsub.s32 1, %v3639
    %v3641 = vrot.slane %v3632, %v3640
    %3642 = vrot.lane.b32.xlu0 %v3637, 29
    %v3643 = vpop.permute.xlu0 %3642
    %3644 = vrot.lane.b32.xlu0 %v3641, 29
    %v3645 = vpop.permute.xlu0 %3644
    %vm3646 = vcmask 236544
    %v3647 = vsel %vm3646, %v3643, %v3645
    %v3650 = vmul.f32 %v3627, %v3643
    %v3651 = vmul.f32 %v3628, %v3647
    %v3652 = vmul.f32 %v3629, %v3643
    %v3653 = vmul.f32 %v3630, %v3647
    %3658 = vrot.lane.b32.xlu0 %v3650, 99
    %v3659 = vpop.permute.xlu0 %3658
    %3660 = vrot.lane.b32.xlu0 %v3651, 99
    %v3661 = vpop.permute.xlu0 %3660
    %3662 = vrot.lane.b32.xlu0 %v3652, 99
    %v3663 = vpop.permute.xlu0 %3662
    %3664 = vrot.lane.b32.xlu0 %v3653, 99
    %v3665 = vpop.permute.xlu0 %3664
    %vm3666 = vcmask 809984
    %v3667 = vsel %vm3666, %v3659, %v3661
    %v3668 = vsel %vm3666, %v3663, %v3665
    %3673 = vst [vmem:[#allocation6 + $0xc0] sm:$0xff] %v3667
    %3674 = vst.msk [vmem:[#allocation6 + $0xc8] sm:$0xff] %vm1297, %v3661
    %3675 = vst [vmem:[#allocation6 + $0xd0] sm:$0xff] %v3668
    %3676 = vst.msk [vmem:[#allocation6 + $0xd8] sm:$0xff] %vm1297, %v3665
    %v3677 = vld [vmem:[#allocation5] sm:$0xff]
    %v3678 = vld [vmem:[#allocation5 + $0x8] sm:$0xff]
    %v3679 = vld [vmem:[#allocation5 + $0x10] sm:$0xff]
    %v3680 = vld [vmem:[#allocation5 + $0x18] sm:$0xff]
    %s3681 = scalar_lea.vmem %s16, 7
    %v3682 = vld [vmem:[%s3681] ss:$8 sm:$0x3]
    %v3684 = vlaneseq
    %v3685 = vshrl.u32 %v3684, 7
    %v3686 = vsub.s32 0, %v3685
    %v3687 = vrot.slane %v3682, %v3686
    %v3688 = vlaneseq
    %v3689 = vshrl.u32 %v3688, 7
    %v3690 = vsub.s32 1, %v3689
    %v3691 = vrot.slane %v3682, %v3690
    %3692 = vrot.lane.b32.xlu0 %v3687, 30
    %v3693 = vpop.permute.xlu0 %3692
    %3694 = vrot.lane.b32.xlu0 %v3691, 30
    %v3695 = vpop.permute.xlu0 %3694
    %vm3696 = vcmask 244736
    %v3697 = vsel %vm3696, %v3693, %v3695
    %v3700 = vmul.f32 %v3677, %v3693
    %v3701 = vmul.f32 %v3678, %v3697
    %v3702 = vmul.f32 %v3679, %v3693
    %v3703 = vmul.f32 %v3680, %v3697
    %3708 = vrot.lane.b32.xlu0 %v3700, 98
    %v3709 = vpop.permute.xlu0 %3708
    %3710 = vrot.lane.b32.xlu0 %v3701, 98
    %v3711 = vpop.permute.xlu0 %3710
    %3712 = vrot.lane.b32.xlu0 %v3702, 98
    %v3713 = vpop.permute.xlu0 %3712
    %3714 = vrot.lane.b32.xlu0 %v3703, 98
    %v3715 = vpop.permute.xlu0 %3714
    %vm3716 = vcmask 801792
    %v3717 = vsel %vm3716, %v3709, %v3711
    %v3718 = vsel %vm3716, %v3713, %v3715
    %3723 = vst [vmem:[#allocation6 + $0xe0] sm:$0xff] %v3717
    %3724 = vst.msk [vmem:[#allocation6 + $0xe8] sm:$0xff] %vm1297, %v3711
    %3725 = vst [vmem:[#allocation6 + $0xf0] sm:$0xff] %v3718
    %3726 = vst.msk [vmem:[#allocation6 + $0xf8] sm:$0xff] %vm1297, %v3715
    %v3727 = vld [vmem:[#allocation5] sm:$0xff]
    %v3728 = vld [vmem:[#allocation5 + $0x8] sm:$0xff]
    %v3729 = vld [vmem:[#allocation5 + $0x10] sm:$0xff]
    %v3730 = vld [vmem:[#allocation5 + $0x18] sm:$0xff]
    %s3731 = scalar_lea.vmem %s16, 16
    %v3732 = vld [vmem:[%s3731] ss:$8 sm:$0x3]
    %v3734 = vlaneseq
    %v3735 = vshrl.u32 %v3734, 7
    %v3736 = vsub.s32 0, %v3735
    %v3737 = vrot.slane %v3732, %v3736
    %v3738 = vlaneseq
    %v3739 = vshrl.u32 %v3738, 7
    %v3740 = vsub.s32 1, %v3739
    %v3741 = vrot.slane %v3732, %v3740
    %3742 = vrot.lane.b32.xlu0 %v3737, 31
    %v3743 = vpop.permute.xlu0 %3742
    %3744 = vrot.lane.b32.xlu0 %v3741, 31
    %v3745 = vpop.permute.xlu0 %3744
    %v3746 = vsel %vm629, %v3743, %v3745
    %v3749 = vmul.f32 %v3727, %v3743
    %v3750 = vmul.f32 %v3728, %v3746
    %v3751 = vmul.f32 %v3729, %v3743
    %v3752 = vmul.f32 %v3730, %v3746
    %3757 = vrot.lane.b32.xlu0 %v3749, 97
    %v3758 = vpop.permute.xlu0 %3757
    %3759 = vrot.lane.b32.xlu0 %v3750, 97
    %v3760 = vpop.permute.xlu0 %3759
    %3761 = vrot.lane.b32.xlu0 %v3751, 97
    %v3762 = vpop.permute.xlu0 %3761
    %3763 = vrot.lane.b32.xlu0 %v3752, 97
    %v3764 = vpop.permute.xlu0 %3763
    %v3765 = vsel %vm687, %v3758, %v3760
    %v3766 = vsel %vm687, %v3762, %v3764
    %3771 = vst [vmem:[#allocation6 + $0x100] sm:$0xff] %v3765
    %3772 = vst.msk [vmem:[#allocation6 + $0x108] sm:$0xff] %vm1297, %v3760
    %3773 = vst [vmem:[#allocation6 + $0x110] sm:$0xff] %v3766
    %3774 = vst.msk [vmem:[#allocation6 + $0x118] sm:$0xff] %vm1297, %v3764
    %v3775 = vld [vmem:[%s6] sm:$0xff]
    %v3776 = vld [vmem:[%s6 + $0x8] sm:$0xff]
    %v3777 = vld [vmem:[%s6 + $0x10] sm:$0xff]
    %v3778 = vld [vmem:[%s6 + $0x18] sm:$0xff]
    %v3779 = vld [vmem:[%s6 + $0x20] sm:$0xff]
    %v3780 = vld [vmem:[%s6 + $0x28] sm:$0xff]
    %v3781 = vld [vmem:[%s6 + $0x30] sm:$0xff]
    %v3782 = vld [vmem:[%s6 + $0x38] sm:$0xff]
    %v3783 = vld [vmem:[#allocation6] sm:$0xff]
    %v3784 = vld [vmem:[#allocation6 + $0x8] sm:$0xff]
    %v3785 = vld [vmem:[#allocation6 + $0x10] sm:$0xff]
    %v3786 = vld [vmem:[#allocation6 + $0x18] sm:$0xff]
    %v3787 = vld [vmem:[#allocation6 + $0x20] sm:$0xff]
    %v3788 = vld [vmem:[#allocation6 + $0x28] sm:$0xff]
    %v3789 = vld [vmem:[#allocation6 + $0x30] sm:$0xff]
    %v3790 = vld [vmem:[#allocation6 + $0x38] sm:$0xff]
    %v3791 = vld [vmem:[#allocation6 + $0x40] sm:$0xff]
    %v3792 = vld [vmem:[#allocation6 + $0x48] sm:$0xff]
    %v3793 = vld [vmem:[#allocation6 + $0x50] sm:$0xff]
    %v3794 = vld [vmem:[#allocation6 + $0x58] sm:$0xff]
    %v3795 = vld [vmem:[#allocation6 + $0x60] sm:$0xff]
    %v3796 = vld [vmem:[#allocation6 + $0x68] sm:$0xff]
    %v3797 = vld [vmem:[#allocation6 + $0x70] sm:$0xff]
    %v3798 = vld [vmem:[#allocation6 + $0x78] sm:$0xff]
    %v3799 = vld [vmem:[#allocation6 + $0x80] sm:$0xff]
    %v3800 = vld [vmem:[#allocation6 + $0x88] sm:$0xff]
    %v3801 = vld [vmem:[#allocation6 + $0x90] sm:$0xff]
    %v3802 = vld [vmem:[#allocation6 + $0x98] sm:$0xff]
    %v3803 = vld [vmem:[#allocation6 + $0xa0] sm:$0xff]
    %v3804 = vld [vmem:[#allocation6 + $0xa8] sm:$0xff]
    %v3805 = vld [vmem:[#allocation6 + $0xb0] sm:$0xff]
    %v3806 = vld [vmem:[#allocation6 + $0xb8] sm:$0xff]
    %v3807 = vld [vmem:[#allocation6 + $0xc0] sm:$0xff]
    %v3808 = vld [vmem:[#allocation6 + $0xc8] sm:$0xff]
    %v3809 = vld [vmem:[#allocation6 + $0xd0] sm:$0xff]
    %v3810 = vld [vmem:[#allocation6 + $0xd8] sm:$0xff]
    %v3811 = vld [vmem:[#allocation6 + $0xe0] sm:$0xff]
    %v3812 = vld [vmem:[#allocation6 + $0xe8] sm:$0xff]
    %v3813 = vld [vmem:[#allocation6 + $0xf0] sm:$0xff]
    %v3814 = vld [vmem:[#allocation6 + $0xf8] sm:$0xff]
    %v3815 = vld [vmem:[#allocation6 + $0x100] sm:$0xff]
    %v3816 = vld [vmem:[#allocation6 + $0x108] sm:$0xff]
    %v3817 = vld [vmem:[#allocation6 + $0x110] sm:$0xff]
    %v3818 = vld [vmem:[#allocation6 + $0x118] sm:$0xff]
    %v3819 = vld [vmem:[%s7] sm:$0xff]
    %v3820 = vld [vmem:[%s7 + $0x8] sm:$0xff]
    %v3821 = vld [vmem:[%s7 + $0x10] sm:$0xff]
    %v3822 = vld [vmem:[%s7 + $0x18] sm:$0xff]
    %3824 = vset.pattern.permute.xlu0 0
    %3825 = vperm.xlu0 %3824, %v3819
    %v3826 = vpop.permute.xlu0 %3825
    %3829 = vset.pattern.permute.xlu0 0
    %3830 = vperm.xlu0 %3829, %v3820
    %v3831 = vpop.permute.xlu0 %3830
    %3834 = vset.pattern.permute.xlu0 0
    %3835 = vperm.xlu0 %3834, %v3821
    %v3836 = vpop.permute.xlu0 %3835
    %3839 = vset.pattern.permute.xlu0 0
    %3840 = vperm.xlu0 %3839, %v3822
    %v3841 = vpop.permute.xlu0 %3840
    %v3844 = vsel %vm1841, %v3776, 0
    %v3847 = vsel %vm1841, %v3778, 0
    %v3850 = vsel %vm1841, %v3780, 0
    %v3853 = vsel %vm1841, %v3782, 0
    %3855 = vmatprep.subr.mxu0 %v3784
    %3856 = vmatpush1.msra.mxu0 %v3783
    %3857 = vmatprep.subr.mxu0 %v3786
    %3858 = vmatpush1.msra.mxu0 %v3785
    %3859 = vmatprep.subr.mxu0 %v3788
    %3860 = vmatpush1.msra.mxu0 %v3787
    %3861 = vmatprep.subr.mxu0 %v3790
    %3862 = vmatpush1.msra.mxu0 %v3789
    %3863 = vmatprep.subr.mxu0 %v3792
    %3864 = vmatpush1.msra.mxu0 %v3791
    %3865 = vmatprep.subr.mxu0 %v3794
    %3866 = vmatpush1.msra.mxu0 %v3793
    %3867 = vmatprep.subr.mxu0 %v3796
    %3868 = vmatpush1.msra.mxu0 %v3795
    %3869 = vmatprep.subr.mxu0 %v3798
    %3870 = vmatpush1.msra.mxu0 %v3797
    %3871 = vmatprep.subr.mxu0 %v3800
    %3872 = vmatpush1.msra.mxu0 %v3799
    %3873 = vmatprep.subr.mxu0 %v3802
    %3874 = vmatpush1.msra.mxu0 %v3801
    %3875 = vmatprep.subr.mxu0 %v3804
    %3876 = vmatpush1.msra.mxu0 %v3803
    %3877 = vmatprep.subr.mxu0 %v3806
    %3878 = vmatpush1.msra.mxu0 %v3805
    %3879 = vmatprep.subr.mxu0 %v3808
    %3880 = vmatpush1.msra.mxu0 %v3807
    %3881 = vmatprep.subr.mxu0 %v3810
    %3882 = vmatpush1.msra.mxu0 %v3809
    %3883 = vmatprep.subr.mxu0 %v3812
    %3884 = vmatpush1.msra.mxu0 %v3811
    %3885 = vmatprep.subr.mxu0 %v3814
    %3886 = vmatpush1.msra.mxu0 %v3813
    %3887 = vmatprep.subr.mxu0 %v3816
    %3888 = vmatpush1.msra.mxu0 %v3815
    %3889 = vmatprep.subr.mxu0 %v3818
    %3890 = vmatpush1.msra.mxu0 %v3817
    %3891 = vmatprep.subr.mxu0 0.0
    %3892 = vmatpush1.msra.mxu0 0.0
    %3893 = vmatprep.subr.mxu0 0.0
    %3894 = vmatpush1.msra.mxu0 0.0
    %3895 = vmatprep.subr.mxu0 0.0
    %3896 = vmatpush1.msra.mxu0 0.0
    %3897 = vmatprep.subr.mxu0 0.0
    %3898 = vmatpush1.msra.mxu0 0.0
    %3899 = vmatprep.subr.mxu0 0.0
    %3900 = vmatpush1.msra.mxu0 0.0
    %3901 = vmatprep.subr.mxu0 0.0
    %3902 = vmatpush1.msra.mxu0 0.0
    %3903 = vmatprep.subr.mxu0 0.0
    %3904 = vmatpush1.msra.mxu0 0.0
    %3905 = vmatprep.subr.mxu0 0.0
    %3906 = vmatpush1.msra.mxu0 0.0
    %3907 = vmatprep.subr.mxu0 0.0
    %3908 = vmatpush1.msra.mxu0 0.0
    %3909 = vmatprep.subr.mxu0 0.0
    %3910 = vmatpush1.msra.mxu0 0.0
    %3911 = vmatprep.subr.mxu0 0.0
    %3912 = vmatpush1.msra.mxu0 0.0
    %3913 = vmatprep.subr.mxu0 0.0
    %3914 = vmatpush1.msra.mxu0 0.0
    %3915 = vmatprep.subr.mxu0 0.0
    %3916 = vmatpush1.msra.mxu0 0.0
    %3917 = vmatprep.subr.mxu0 0.0
    %3918 = vmatpush1.msra.mxu0 0.0
    %3919 = vmatprep.mubr.f32.mxu0 %v3844
    %3920 = vmatmul.mubr.f32.gmra.mrb[0].mxu0 %v3775
    %v3921 = vpop.f32.mrb[0].mxu0
    %v3922 = vadd.f32 %v3826, %v3921
    %v3923 = vpop.f32.mrb[0].mxu0
    %v3924 = vadd.f32 %v3826, %v3923
    %3925 = vmatprep.mubr.f32.mxu0 %v3847
    %3926 = vmatmul.mubr.f32.gmra.mrb[0].mxu0 %v3777
    %v3927 = vpop.f32.mrb[0].mxu0
    %v3928 = vadd.f32 %v3831, %v3927
    %v3929 = vpop.f32.mrb[0].mxu0
    %v3930 = vadd.f32 %v3831, %v3929
    %3931 = vmatprep.mubr.f32.mxu0 %v3850
    %3932 = vmatmul.mubr.f32.gmra.mrb[0].mxu0 %v3779
    %v3933 = vpop.f32.mrb[0].mxu0
    %v3934 = vadd.f32 %v3836, %v3933
    %v3935 = vpop.f32.mrb[0].mxu0
    %v3936 = vadd.f32 %v3836, %v3935
    %3937 = vmatprep.mubr.f32.mxu0 %v3853
    %3938 = vmatmul.mubr.f32.gmra.mrb[0].mxu0 %v3781
    %v3939 = vpop.f32.mrb[0].mxu0
    %v3940 = vadd.f32 %v3841, %v3939
    %v3941 = vpop.f32.mrb[0].mxu0
    %v3942 = vadd.f32 %v3841, %v3941
    %3943 = vdwg.mxu0
    %v3944 = vld [vmem:[%s10] sm:$0xff]
    %v3945 = vld [vmem:[%s10 + $0x8] sm:$0xff]
    %v3946 = vld [vmem:[%s10 + $0x10] sm:$0xff]
    %v3947 = vld [vmem:[%s10 + $0x18] sm:$0xff]
    %v3949 = vsel %vm75, %v3944, 0
    %v3952 = vsel %vm75, %v3945, 0
    %v3955 = vsel %vm75, %v3946, 0
    %v3958 = vsel %vm75, %v3947, 0
    %3960 = vmatprep.subr.mxu0 %v3924
    %3961 = vmatpush1.msra.mxu0 %v3922
    %3962 = vmatprep.subr.mxu0 %v3930
    %3963 = vmatpush1.msra.mxu0 %v3928
    %3964 = vmatprep.subr.mxu0 %v3936
    %3965 = vmatpush1.msra.mxu0 %v3934
    %3966 = vmatprep.subr.mxu0 %v3942
    %3967 = vmatpush1.msra.mxu0 %v3940
    %3968 = vmatprep.subr.mxu0 0.0
    %3969 = vmatpush1.msra.mxu0 0.0
    %3970 = vmatprep.subr.mxu0 0.0
    %3971 = vmatpush1.msra.mxu0 0.0
    %3972 = vmatprep.subr.mxu0 0.0
    %3973 = vmatpush1.msra.mxu0 0.0
    %3974 = vmatprep.subr.mxu0 0.0
    %3975 = vmatpush1.msra.mxu0 0.0
    %3976 = vmatprep.subr.mxu0 0.0
    %3977 = vmatpush1.msra.mxu0 0.0
    %3978 = vmatprep.subr.mxu0 0.0
    %3979 = vmatpush1.msra.mxu0 0.0
    %3980 = vmatprep.subr.mxu0 0.0
    %3981 = vmatpush1.msra.mxu0 0.0
    %3982 = vmatprep.subr.mxu0 0.0
    %3983 = vmatpush1.msra.mxu0 0.0
    %3984 = vmatprep.subr.mxu0 0.0
    %3985 = vmatpush1.msra.mxu0 0.0
    %3986 = vmatprep.subr.mxu0 0.0
    %3987 = vmatpush1.msra.mxu0 0.0
    %3988 = vmatprep.subr.mxu0 0.0
    %3989 = vmatpush1.msra.mxu0 0.0
    %3990 = vmatprep.subr.mxu0 0.0
    %3991 = vmatpush1.msra.mxu0 0.0
    %3992 = vmatprep.subr.mxu0 0.0
    %3993 = vmatpush1.msra.mxu0 0.0
    %3994 = vmatprep.subr.mxu0 0.0
    %3995 = vmatpush1.msra.mxu0 0.0
    %3996 = vmatprep.subr.mxu0 0.0
    %3997 = vmatpush1.msra.mxu0 0.0
    %3998 = vmatprep.subr.mxu0 0.0
    %3999 = vmatpush1.msra.mxu0 0.0
    %4000 = vmatprep.subr.mxu0 0.0
    %4001 = vmatpush1.msra.mxu0 0.0
    %4002 = vmatprep.subr.mxu0 0.0
    %4003 = vmatpush1.msra.mxu0 0.0
    %4004 = vmatprep.subr.mxu0 0.0
    %4005 = vmatpush1.msra.mxu0 0.0
    %4006 = vmatprep.subr.mxu0 0.0
    %4007 = vmatpush1.msra.mxu0 0.0
    %4008 = vmatprep.subr.mxu0 0.0
    %4009 = vmatpush1.msra.mxu0 0.0
    %4010 = vmatprep.subr.mxu0 0.0
    %4011 = vmatpush1.msra.mxu0 0.0
    %4012 = vmatprep.subr.mxu0 0.0
    %4013 = vmatpush1.msra.mxu0 0.0
    %4014 = vmatprep.subr.mxu0 0.0
    %4015 = vmatpush1.msra.mxu0 0.0
    %4016 = vmatprep.subr.mxu0 0.0
    %4017 = vmatpush1.msra.mxu0 0.0
    %4018 = vmatprep.subr.mxu0 0.0
    %4019 = vmatpush1.msra.mxu0 0.0
    %4020 = vmatprep.subr.mxu0 0.0
    %4021 = vmatpush1.msra.mxu0 0.0
    %4022 = vmatprep.subr.mxu0 0.0
    %4023 = vmatpush1.msra.mxu0 0.0
    %4024 = vmatprep.mubr.f32.mxu0 0.0
    %4025 = vmatmul.mubr.f32.gmra.mrb[0].mxu0 %v3949
    %v4026 = vpop.f32.mrb[0].mxu0
    %v4027 = vadd.f32 0.0, %v4026
    %v4028 = vpop.f32.mrb[0].mxu0
    %v4029 = vadd.f32 0.0, %v4028
    %4030 = vmatprep.mubr.f32.mxu0 0.0
    %4031 = vmatmul.mubr.f32.gmra.mrb[0].mxu0 %v3952
    %v4032 = vpop.f32.mrb[0].mxu0
    %v4033 = vadd.f32 0.0, %v4032
    %v4034 = vpop.f32.mrb[0].mxu0
    %v4035 = vadd.f32 0.0, %v4034
    %4036 = vmatprep.mubr.f32.mxu0 0.0
    %4037 = vmatmul.mubr.f32.gmra.mrb[0].mxu0 %v3955
    %v4038 = vpop.f32.mrb[0].mxu0
    %v4039 = vadd.f32 0.0, %v4038
    %v4040 = vpop.f32.mrb[0].mxu0
    %v4041 = vadd.f32 0.0, %v4040
    %4042 = vmatprep.mubr.f32.mxu0 0.0
    %4043 = vmatmul.mubr.f32.gmra.mrb[0].mxu0 %v3958
    %v4044 = vpop.f32.mrb[0].mxu0
    %v4045 = vadd.f32 0.0, %v4044
    %v4046 = vpop.f32.mrb[0].mxu0
    %v4047 = vadd.f32 0.0, %v4046
    %4048 = vdwg.mxu0
    %v4049 = vsel %vm1297, %v4029, 0.0
    %v4050 = vadd.f32 %v4027, %v4049
    %4051 = vadd.xlane.f32.xlu0 %v4050
    %v4052 = vpop.xlane.xlu0 %4051
    %v4053 = vsel %vm1297, %v4035, 0.0
    %v4054 = vadd.f32 %v4033, %v4053
    %4055 = vadd.xlane.f32.xlu0 %v4054
    %v4056 = vpop.xlane.xlu0 %4055
    %v4057 = vsel %vm1297, %v4041, 0.0
    %v4058 = vadd.f32 %v4039, %v4057
    %4059 = vadd.xlane.f32.xlu0 %v4058
    %v4060 = vpop.xlane.xlu0 %4059
    %v4061 = vsel %vm1297, %v4047, 0.0
    %v4062 = vadd.f32 %v4045, %v4061
    %4063 = vadd.xlane.f32.xlu0 %v4062
    %v4064 = vpop.xlane.xlu0 %4063
    %v4065 = vsub.f32 %v3922, %v4052
    %v4066 = vsub.f32 %v3924, %v4052
    %v4067 = vsub.f32 %v3928, %v4056
    %v4068 = vsub.f32 %v3930, %v4056
    %v4069 = vsub.f32 %v3934, %v4060
    %v4070 = vsub.f32 %v3936, %v4060
    %v4071 = vsub.f32 %v3940, %v4064
    %v4072 = vsub.f32 %v3942, %v4064
    %v4073 = vmul.f32 %v4065, %v4065
    %v4074 = vmul.f32 %v4066, %v4066
    %v4075 = vmul.f32 %v4067, %v4067
    %v4076 = vmul.f32 %v4068, %v4068
    %v4077 = vmul.f32 %v4069, %v4069
    %v4078 = vmul.f32 %v4070, %v4070
    %v4079 = vmul.f32 %v4071, %v4071
    %v4080 = vmul.f32 %v4072, %v4072
    %4081 = vmatprep.subr.mxu0 %v4074
    %4082 = vmatpush1.msra.mxu0 %v4073
    %4083 = vmatprep.subr.mxu0 %v4076
    %4084 = vmatpush1.msra.mxu0 %v4075
    %4085 = vmatprep.subr.mxu0 %v4078
    %4086 = vmatpush1.msra.mxu0 %v4077
    %4087 = vmatprep.subr.mxu0 %v4080
    %4088 = vmatpush1.msra.mxu0 %v4079
    %4089 = vmatprep.subr.mxu0 0.0
    %4090 = vmatpush1.msra.mxu0 0.0
    %4091 = vmatprep.subr.mxu0 0.0
    %4092 = vmatpush1.msra.mxu0 0.0
    %4093 = vmatprep.subr.mxu0 0.0
    %4094 = vmatpush1.msra.mxu0 0.0
    %4095 = vmatprep.subr.mxu0 0.0
    %4096 = vmatpush1.msra.mxu0 0.0
    %4097 = vmatprep.subr.mxu0 0.0
    %4098 = vmatpush1.msra.mxu0 0.0
    %4099 = vmatprep.subr.mxu0 0.0
    %4100 = vmatpush1.msra.mxu0 0.0
    %4101 = vmatprep.subr.mxu0 0.0
    %4102 = vmatpush1.msra.mxu0 0.0
    %4103 = vmatprep.subr.mxu0 0.0
    %4104 = vmatpush1.msra.mxu0 0.0
    %4105 = vmatprep.subr.mxu0 0.0
    %4106 = vmatpush1.msra.mxu0 0.0
    %4107 = vmatprep.subr.mxu0 0.0
    %4108 = vmatpush1.msra.mxu0 0.0
    %4109 = vmatprep.subr.mxu0 0.0
    %4110 = vmatpush1.msra.mxu0 0.0
    %4111 = vmatprep.subr.mxu0 0.0
    %4112 = vmatpush1.msra.mxu0 0.0
    %4113 = vmatprep.subr.mxu0 0.0
    %4114 = vmatpush1.msra.mxu0 0.0
    %4115 = vmatprep.subr.mxu0 0.0
    %4116 = vmatpush1.msra.mxu0 0.0
    %4117 = vmatprep.subr.mxu0 0.0
    %4118 = vmatpush1.msra.mxu0 0.0
    %4119 = vmatprep.subr.mxu0 0.0
    %4120 = vmatpush1.msra.mxu0 0.0
    %4121 = vmatprep.subr.mxu0 0.0
    %4122 = vmatpush1.msra.mxu0 0.0
    %4123 = vmatprep.subr.mxu0 0.0
    %4124 = vmatpush1.msra.mxu0 0.0
    %4125 = vmatprep.subr.mxu0 0.0
    %4126 = vmatpush1.msra.mxu0 0.0
    %4127 = vmatprep.subr.mxu0 0.0
    %4128 = vmatpush1.msra.mxu0 0.0
    %4129 = vmatprep.subr.mxu0 0.0
    %4130 = vmatpush1.msra.mxu0 0.0
    %4131 = vmatprep.subr.mxu0 0.0
    %4132 = vmatpush1.msra.mxu0 0.0
    %4133 = vmatprep.subr.mxu0 0.0
    %4134 = vmatpush1.msra.mxu0 0.0
    %4135 = vmatprep.subr.mxu0 0.0
    %4136 = vmatpush1.msra.mxu0 0.0
    %4137 = vmatprep.subr.mxu0 0.0
    %4138 = vmatpush1.msra.mxu0 0.0
    %4139 = vmatprep.subr.mxu0 0.0
    %4140 = vmatpush1.msra.mxu0 0.0
    %4141 = vmatprep.subr.mxu0 0.0
    %4142 = vmatpush1.msra.mxu0 0.0
    %4143 = vmatprep.subr.mxu0 0.0
    %4144 = vmatpush1.msra.mxu0 0.0
    %4145 = vmatprep.mubr.f32.mxu0 0.0
    %4146 = vmatmul.mubr.f32.gmra.mrb[0].mxu0 %v3949
    %v4147 = vpop.f32.mrb[0].mxu0
    %v4148 = vadd.f32 0.0, %v4147
    %v4149 = vpop.f32.mrb[0].mxu0
    %v4150 = vadd.f32 0.0, %v4149
    %4151 = vmatprep.mubr.f32.mxu0 0.0
    %4152 = vmatmul.mubr.f32.gmra.mrb[0].mxu0 %v3952
    %v4153 = vpop.f32.mrb[0].mxu0
    %v4154 = vadd.f32 0.0, %v4153
    %v4155 = vpop.f32.mrb[0].mxu0
    %v4156 = vadd.f32 0.0, %v4155
    %4157 = vmatprep.mubr.f32.mxu0 0.0
    %4158 = vmatmul.mubr.f32.gmra.mrb[0].mxu0 %v3955
    %v4159 = vpop.f32.mrb[0].mxu0
    %v4160 = vadd.f32 0.0, %v4159
    %v4161 = vpop.f32.mrb[0].mxu0
    %v4162 = vadd.f32 0.0, %v4161
    %4163 = vmatprep.mubr.f32.mxu0 0.0
    %4164 = vmatmul.mubr.f32.gmra.mrb[0].mxu0 %v3958
    %v4165 = vpop.f32.mrb[0].mxu0
    %v4166 = vadd.f32 0.0, %v4165
    %v4167 = vpop.f32.mrb[0].mxu0
    %v4168 = vadd.f32 0.0, %v4167
    %4169 = vdwg.mxu0
    %v4170 = vsel %vm1297, %v4150, 0.0
    %v4171 = vadd.f32 %v4148, %v4170
    %4172 = vadd.xlane.f32.xlu0 %v4171
    %v4173 = vpop.xlane.xlu0 %4172
    %v4174 = vsel %vm1297, %v4156, 0.0
    %v4175 = vadd.f32 %v4154, %v4174
    %4176 = vadd.xlane.f32.xlu0 %v4175
    %v4177 = vpop.xlane.xlu0 %4176
    %v4178 = vsel %vm1297, %v4162, 0.0
    %v4179 = vadd.f32 %v4160, %v4178
    %4180 = vadd.xlane.f32.xlu0 %v4179
    %v4181 = vpop.xlane.xlu0 %4180
    %v4182 = vsel %vm1297, %v4168, 0.0
    %v4183 = vadd.f32 %v4166, %v4182
    %4184 = vadd.xlane.f32.xlu0 %v4183
    %v4185 = vpop.xlane.xlu0 %4184
    %v4186 = vadd.f32 %v4173, 1e-05
    %v4187 = vadd.f32 %v4177, 1e-05
    %v4188 = vadd.f32 %v4181, 1e-05
    %v4189 = vadd.f32 %v4185, 1e-05
    %v4190 = vrsqrt.pop %v4186
    %v4191 = vrsqrt.pop %v4187
    %v4192 = vrsqrt.pop %v4188
    %v4193 = vrsqrt.pop %v4189
    %v4194 = vld [vmem:[%s8] sm:$0xff]
    %v4195 = vld [vmem:[%s8 + $0x8] sm:$0xff]
    %v4196 = vld [vmem:[%s8 + $0x10] sm:$0xff]
    %v4197 = vld [vmem:[%s8 + $0x18] sm:$0xff]
    %v4198 = vmul.f32 %v4190, %v4194
    %v4199 = vmul.f32 %v4191, %v4195
    %v4200 = vmul.f32 %v4192, %v4196
    %v4201 = vmul.f32 %v4193, %v4197
    %4203 = vset.pattern.permute.xlu0 0
    %4204 = vperm.xlu0 %4203, %v4198
    %v4205 = vpop.permute.xlu0 %4204
    %4208 = vset.pattern.permute.xlu0 0
    %4209 = vperm.xlu0 %4208, %v4199
    %v4210 = vpop.permute.xlu0 %4209
    %4213 = vset.pattern.permute.xlu0 0
    %4214 = vperm.xlu0 %4213, %v4200
    %v4215 = vpop.permute.xlu0 %4214
    %4218 = vset.pattern.permute.xlu0 0
    %4219 = vperm.xlu0 %4218, %v4201
    %v4220 = vpop.permute.xlu0 %4219
    %v4222 = vmul.f32 %v4065, %v4205
    %v4223 = vmul.f32 %v4066, %v4205
    %v4224 = vmul.f32 %v4067, %v4210
    %v4225 = vmul.f32 %v4068, %v4210
    %v4226 = vmul.f32 %v4069, %v4215
    %v4227 = vmul.f32 %v4070, %v4215
    %v4228 = vmul.f32 %v4071, %v4220
    %v4229 = vmul.f32 %v4072, %v4220
    %v4230 = vld [vmem:[%s9] sm:$0xff]
    %v4231 = vld [vmem:[%s9 + $0x8] sm:$0xff]
    %v4232 = vld [vmem:[%s9 + $0x10] sm:$0xff]
    %v4233 = vld [vmem:[%s9 + $0x18] sm:$0xff]
    %4235 = vset.pattern.permute.xlu0 0
    %4236 = vperm.xlu0 %4235, %v4230
    %v4237 = vpop.permute.xlu0 %4236
    %4240 = vset.pattern.permute.xlu0 0
    %4241 = vperm.xlu0 %4240, %v4231
    %v4242 = vpop.permute.xlu0 %4241
    %4245 = vset.pattern.permute.xlu0 0
    %4246 = vperm.xlu0 %4245, %v4232
    %v4247 = vpop.permute.xlu0 %4246
    %4250 = vset.pattern.permute.xlu0 0
    %4251 = vperm.xlu0 %4250, %v4233
    %v4252 = vpop.permute.xlu0 %4251
    %v4254 = vadd.f32 %v4222, %v4237
    %v4255 = vadd.f32 %v4223, %v4237
    %v4256 = vadd.f32 %v4224, %v4242
    %v4257 = vadd.f32 %v4225, %v4242
    %v4258 = vadd.f32 %v4226, %v4247
    %v4259 = vadd.f32 %v4227, %v4247
    %v4260 = vadd.f32 %v4228, %v4252
    %v4261 = vadd.f32 %v4229, %v4252
    %v4262 = vmax.f32 %v4254, 0.0
    %v4263 = vmax.f32 %v4255, 0.0
    %v4264 = vmax.f32 %v4256, 0.0
    %v4265 = vmax.f32 %v4257, 0.0
    %v4266 = vmax.f32 %v4258, 0.0
    %v4267 = vmax.f32 %v4259, 0.0
    %v4268 = vmax.f32 %v4260, 0.0
    %v4269 = vmax.f32 %v4261, 0.0
    %4270 = vst [vmem:[#allocation7] sm:$0xff] %v4262
    %4271 = vst.msk [vmem:[#allocation7 + $0x8] sm:$0xff] %vm1297, %v4263
    %4272 = vst [vmem:[#allocation7 + $0x10] sm:$0xff] %v4264
    %4273 = vst.msk [vmem:[#allocation7 + $0x18] sm:$0xff] %vm1297, %v4265
    %4274 = vst [vmem:[#allocation7 + $0x20] sm:$0xff] %v4266
    %4275 = vst.msk [vmem:[#allocation7 + $0x28] sm:$0xff] %vm1297, %v4267
    %4276 = vst [vmem:[#allocation7 + $0x30] sm:$0xff] %v4268
    %4277 = vst.msk [vmem:[#allocation7 + $0x38] sm:$0xff] %vm1297, %v4269
    %vm4278 = vcmask 687648
    %4279 = vst.msk [vmem:[#allocation7 + $0x8] sm:$0xff] %vm4278, 0.0
    %4280 = vst.msk [vmem:[#allocation7 + $0x18] sm:$0xff] %vm4278, 0.0
    %4281 = vst.msk [vmem:[#allocation7 + $0x28] sm:$0xff] %vm4278, 0.0
    %4282 = vst.msk [vmem:[#allocation7 + $0x38] sm:$0xff] %vm4278, 0.0
    %v4283 = vld [vmem:[#allocation7] sm:$0xff]
    %v4284 = vld [vmem:[#allocation7 + $0x8] sm:$0xff]
    %v4285 = vld [vmem:[#allocation7 + $0x10] sm:$0xff]
    %v4286 = vld [vmem:[#allocation7 + $0x18] sm:$0xff]
    %v4287 = vld [vmem:[#allocation7 + $0x20] sm:$0xff]
    %v4288 = vld [vmem:[#allocation7 + $0x28] sm:$0xff]
    %v4289 = vld [vmem:[#allocation7 + $0x30] sm:$0xff]
    %v4290 = vld [vmem:[#allocation7 + $0x38] sm:$0xff]
    %4299 = vrot.lane.b32.xlu0 %v4283, 127
    %v4300 = vpop.permute.xlu0 %4299
    %4301 = vrot.lane.b32.xlu0 %v4284, 127
    %v4302 = vpop.permute.xlu0 %4301
    %4303 = vrot.lane.b32.xlu0 %v4285, 127
    %v4304 = vpop.permute.xlu0 %4303
    %4305 = vrot.lane.b32.xlu0 %v4286, 127
    %v4306 = vpop.permute.xlu0 %4305
    %4307 = vrot.lane.b32.xlu0 %v4287, 127
    %v4308 = vpop.permute.xlu0 %4307
    %4309 = vrot.lane.b32.xlu0 %v4288, 127
    %v4310 = vpop.permute.xlu0 %4309
    %4311 = vrot.lane.b32.xlu0 %v4289, 127
    %v4312 = vpop.permute.xlu0 %4311
    %4313 = vrot.lane.b32.xlu0 %v4290, 127
    %v4314 = vpop.permute.xlu0 %4313
    %v4315 = vsel %vm2669, %v4300, %v4302
    %v4316 = vsel %vm2669, %v4304, %v4306
    %v4317 = vsel %vm2669, %v4308, %v4310
    %v4318 = vsel %vm2669, %v4312, %v4314
    %v4327 = vmax.f32 %v4283, %v4315
    %v4328 = vmax.f32 %v4284, %v4302
    %v4329 = vmax.f32 %v4285, %v4316
    %v4330 = vmax.f32 %v4286, %v4306
    %v4331 = vmax.f32 %v4287, %v4317
    %v4332 = vmax.f32 %v4288, %v4310
    %v4333 = vmax.f32 %v4289, %v4318
    %v4334 = vmax.f32 %v4290, %v4314
    %4343 = vrot.lane.b32.xlu0 %v4327, 114
    %v4344 = vpop.permute.xlu0 %4343
    %4345 = vrot.lane.b32.xlu0 %v4328, 114
    %v4346 = vpop.permute.xlu0 %4345
    %4347 = vrot.lane.b32.xlu0 %v4329, 114
    %v4348 = vpop.permute.xlu0 %4347
    %4349 = vrot.lane.b32.xlu0 %v4330, 114
    %v4350 = vpop.permute.xlu0 %4349
    %4351 = vrot.lane.b32.xlu0 %v4331, 114
    %v4352 = vpop.permute.xlu0 %4351
    %4353 = vrot.lane.b32.xlu0 %v4332, 114
    %v4354 = vpop.permute.xlu0 %4353
    %4355 = vrot.lane.b32.xlu0 %v4333, 114
    %v4356 = vpop.permute.xlu0 %4355
    %4357 = vrot.lane.b32.xlu0 %v4334, 114
    %v4358 = vpop.permute.xlu0 %4357
    %vm4359 = vcmask 932864
    %v4360 = vsel %vm4359, %v4344, %v4346
    %v4361 = vsel %vm4359, %v4348, %v4350
    %v4362 = vsel %vm4359, %v4352, %v4354
    %v4363 = vsel %vm4359, %v4356, %v4358
    %v4372 = vmax.f32 %v4327, %v4360
    %v4373 = vmax.f32 %v4328, %v4346
    %v4374 = vmax.f32 %v4329, %v4361
    %v4375 = vmax.f32 %v4330, %v4350
    %v4376 = vmax.f32 %v4331, %v4362
    %v4377 = vmax.f32 %v4332, %v4354
    %v4378 = vmax.f32 %v4333, %v4363
    %v4379 = vmax.f32 %v4334, %v4358
    %v4380 = vld [vmem:[%s18] sm:$0xff]
    %v4381 = vld [vmem:[%s18 + $0x8] sm:$0xff]
    %v4382 = vld [vmem:[%s18 + $0x10] sm:$0xff]
    %v4383 = vld [vmem:[%s18 + $0x18] sm:$0xff]
    %v4384 = vld [vmem:[%s18 + $0x20] sm:$0xff]
    %v4385 = vld [vmem:[%s18 + $0x28] sm:$0xff]
    %v4386 = vld [vmem:[%s18 + $0x30] sm:$0xff]
    %v4387 = vld [vmem:[%s18 + $0x38] sm:$0xff]
    %v4388 = vld [vmem:[%s18 + $0x40] sm:$0xff]
    %v4389 = vld [vmem:[%s18 + $0x48] sm:$0xff]
    %v4390 = vld [vmem:[%s18 + $0x50] sm:$0xff]
    %v4391 = vld [vmem:[%s18 + $0x58] sm:$0xff]
    %v4392 = vld [vmem:[%s18 + $0x60] sm:$0xff]
    %v4393 = vld [vmem:[%s18 + $0x68] sm:$0xff]
    %v4394 = vld [vmem:[%s18 + $0x70] sm:$0xff]
    %v4395 = vld [vmem:[%s18 + $0x78] sm:$0xff]
    %v4396 = vld [vmem:[%s18 + $0x80] sm:$0xff]
    %v4397 = vld [vmem:[%s18 + $0x88] sm:$0xff]
    %v4398 = vld [vmem:[%s18 + $0x90] sm:$0xff]
    %v4399 = vld [vmem:[%s18 + $0x98] sm:$0xff]
    %v4400 = vld [vmem:[%s18 + $0xa0] sm:$0xff]
    %v4401 = vld [vmem:[%s18 + $0xa8] sm:$0xff]
    %v4402 = vld [vmem:[%s18 + $0xb0] sm:$0xff]
    %v4403 = vld [vmem:[%s18 + $0xb8] sm:$0xff]
    %v4404 = vld [vmem:[%s18 + $0xc0] sm:$0xf]
    %v4406 = vsel %vm1297, %v4373, 0
    %v4409 = vsel %vm1297, %v4375, 0
    %v4412 = vsel %vm1297, %v4377, 0
    %v4415 = vsel %vm1297, %v4379, 0
    %vm4417 = vcmask 1043456
    %v4419 = vsel %vm4417, %v4404, 0
    %4421 = vmatprep.subr.mxu0 0.0
    %4422 = vmatpush1.msra.mxu0 %v4380
    %4423 = vmatprep.subr.mxu0 0.0
    %4424 = vmatpush1.msra.mxu0 %v4381
    %4425 = vmatprep.subr.mxu0 0.0
    %4426 = vmatpush1.msra.mxu0 %v4382
    %4427 = vmatprep.subr.mxu0 0.0
    %4428 = vmatpush1.msra.mxu0 %v4383
    %4429 = vmatprep.subr.mxu0 0.0
    %4430 = vmatpush1.msra.mxu0 %v4384
    %4431 = vmatprep.subr.mxu0 0.0
    %4432 = vmatpush1.msra.mxu0 %v4385
    %4433 = vmatprep.subr.mxu0 0.0
    %4434 = vmatpush1.msra.mxu0 %v4386
    %4435 = vmatprep.subr.mxu0 0.0
    %4436 = vmatpush1.msra.mxu0 %v4387
    %4437 = vmatprep.subr.mxu0 0.0
    %4438 = vmatpush1.msra.mxu0 %v4388
    %4439 = vmatprep.subr.mxu0 0.0
    %4440 = vmatpush1.msra.mxu0 %v4389
    %4441 = vmatprep.subr.mxu0 0.0
    %4442 = vmatpush1.msra.mxu0 %v4390
    %4443 = vmatprep.subr.mxu0 0.0
    %4444 = vmatpush1.msra.mxu0 %v4391
    %4445 = vmatprep.subr.mxu0 0.0
    %4446 = vmatpush1.msra.mxu0 %v4392
    %4447 = vmatprep.subr.mxu0 0.0
    %4448 = vmatpush1.msra.mxu0 %v4393
    %4449 = vmatprep.subr.mxu0 0.0
    %4450 = vmatpush1.msra.mxu0 %v4394
    %4451 = vmatprep.subr.mxu0 0.0
    %4452 = vmatpush1.msra.mxu0 %v4395
    %4453 = vmatprep.subr.mxu0 0.0
    %4454 = vmatpush1.msra.mxu0 %v4396
    %4455 = vmatprep.subr.mxu0 0.0
    %4456 = vmatpush1.msra.mxu0 %v4397
    %4457 = vmatprep.subr.mxu0 0.0
    %4458 = vmatpush1.msra.mxu0 %v4398
    %4459 = vmatprep.subr.mxu0 0.0
    %4460 = vmatpush1.msra.mxu0 %v4399
    %4461 = vmatprep.subr.mxu0 0.0
    %4462 = vmatpush1.msra.mxu0 %v4400
    %4463 = vmatprep.subr.mxu0 0.0
    %4464 = vmatpush1.msra.mxu0 %v4401
    %4465 = vmatprep.subr.mxu0 0.0
    %4466 = vmatpush1.msra.mxu0 %v4402
    %4467 = vmatprep.subr.mxu0 0.0
    %4468 = vmatpush1.msra.mxu0 %v4403
    %4469 = vmatprep.subr.mxu0 0.0
    %4470 = vmatpush1.msra.mxu0 %v4419
    %4471 = vmatprep.subr.mxu0 0.0
    %4472 = vmatpush1.msra.mxu0 0.0
    %4473 = vmatprep.subr.mxu0 0.0
    %4474 = vmatpush1.msra.mxu0 0.0
    %4475 = vmatprep.subr.mxu0 0.0
    %4476 = vmatpush1.msra.mxu0 0.0
    %4477 = vmatprep.subr.mxu0 0.0
    %4478 = vmatpush1.msra.mxu0 0.0
    %4479 = vmatprep.subr.mxu0 0.0
    %4480 = vmatpush1.msra.mxu0 0.0
    %4481 = vmatprep.subr.mxu0 0.0
    %4482 = vmatpush1.msra.mxu0 0.0
    %4483 = vmatprep.subr.mxu0 0.0
    %4484 = vmatpush1.msra.mxu0 0.0
    %4485 = vmatprep.mubr.f32.mxu0 %v4406
    %4486 = vmatmul.mubr.f32.gmra.mrb[0].mxu0 %v4372
    %v4487 = vpop.f32.mrb[0].mxu0
    %v4488 = vadd.f32 0.0, %v4487
    %v4489 = vpop.f32.mrb[0].mxu0
    %4490 = vmatprep.mubr.f32.mxu0 %v4409
    %4491 = vmatmul.mubr.f32.gmra.mrb[0].mxu0 %v4374
    %v4492 = vpop.f32.mrb[0].mxu0
    %v4493 = vadd.f32 0.0, %v4492
    %v4494 = vpop.f32.mrb[0].mxu0
    %4495 = vmatprep.mubr.f32.mxu0 %v4412
    %4496 = vmatmul.mubr.f32.gmra.mrb[0].mxu0 %v4376
    %v4497 = vpop.f32.mrb[0].mxu0
    %v4498 = vadd.f32 0.0, %v4497
    %v4499 = vpop.f32.mrb[0].mxu0
    %4500 = vmatprep.mubr.f32.mxu0 %v4415
    %4501 = vmatmul.mubr.f32.gmra.mrb[0].mxu0 %v4378
    %v4502 = vpop.f32.mrb[0].mxu0
    %v4503 = vadd.f32 0.0, %v4502
    %v4504 = vpop.f32.mrb[0].mxu0
    %4505 = vdwg.mxu0
    %vm4506 = vcmask 400384
    %4507 = vst.msk [vmem:[#allocation8] sm:$0xff] %vm4506, %v4488
    %4508 = vst.msk [vmem:[#allocation8 + $0x8] sm:$0xff] %vm4506, %v4493
    %4509 = vst.msk [vmem:[#allocation8 + $0x10] sm:$0xff] %vm4506, %v4498
    %4510 = vst.msk [vmem:[#allocation8 + $0x18] sm:$0xff] %vm4506, %v4503
    %v4511 = vld [vmem:[#allocation8] sm:$0x3]
    %vm4512 = vcmask 394240
    %4513 = vst.msk [vmem:[#allocation9] sm:$0x3] %vm4512, %v4511
    %v4514 = vld [vmem:[#allocation8 + $0x2] sm:$0x3]
    %v4517 = vunpack.c.l.s4 1983009808
    %v4518 = vunpack.c.0.s8 %v4517
    %v4519 = vlaneseq
    %v4520 = vshrl.u32 %v4519, 7
    %v4521 = vsub.s32 %v4518, %v4520
    %v4522 = vrot.slane %v4514, %v4521
    %4523 = vrot.lane.b32.xlu0 %v4522, 49
    %v4524 = vpop.permute.xlu0 %4523
    %vm4526 = vcmask 796040
    %4527 = vst.msk [vmem:[#allocation9] sm:$0x3] %vm4526, %v4524
    %v4528 = vld [vmem:[#allocation8 + $0x4] sm:$0x3]
    %v4531 = vunpack.c.l.s4 1983009808
    %v4532 = vunpack.c.0.s8 %v4531
    %v4533 = vlaneseq
    %v4534 = vshrl.u32 %v4533, 7
    %v4535 = vsub.s32 %v4532, %v4534
    %v4536 = vrot.slane %v4528, %v4535
    %4537 = vrot.lane.b32.xlu0 %v4536, 98
    %v4538 = vpop.permute.xlu0 %4537
    %v4539 = vrot.slane %v4538, 6
    %v4540 = vsel %vm3716, %v4539, %v4538
    %vm4542 = vcmask 1042192
    %vm4543 = vcmask 150530
    %vm4544 = vmor %vm4543, %vm4542
    %4545 = vst.msk [vmem:[#allocation9] sm:$0xf] %vm4544, %v4540
    %v4546 = vld [vmem:[#allocation8 + $0x6] sm:$0x3]
    %v4549 = vunpack.c.l.s4 1983009808
    %v4550 = vunpack.c.0.s8 %v4549
    %v4551 = vlaneseq
    %v4552 = vshrl.u32 %v4551, 7
    %v4553 = vsub.s32 %v4550, %v4552
    %v4554 = vrot.slane %v4546, %v4553
    %4555 = vrot.lane.b32.xlu0 %v4554, 19
    %v4556 = vpop.permute.xlu0 %4555
    %vm4558 = vcmask 550040
    %4559 = vst.msk [vmem:[#allocation9 + $0x2] sm:$0x3] %vm4558, %v4556
    %v4560 = vld [vmem:[#allocation8 + $0x8] sm:$0x3]
    %v4563 = vunpack.c.l.s4 1983009808
    %v4564 = vunpack.c.0.s8 %v4563
    %v4565 = vlaneseq
    %v4566 = vshrl.u32 %v4565, 7
    %v4567 = vsub.s32 %v4564, %v4566
    %v4568 = vrot.slane %v4560, %v4567
    %4569 = vrot.lane.b32.xlu0 %v4568, 68
    %v4570 = vpop.permute.xlu0 %4569
    %vm4572 = vcmask 951840
    %4573 = vst.msk [vmem:[#allocation9 + $0x2] sm:$0x3] %vm4572, %v4570
    %v4574 = vld [vmem:[#allocation8 + $0xa] sm:$0x3]
    %v4577 = vunpack.c.l.s4 1983009808
    %v4578 = vunpack.c.0.s8 %v4577
    %v4579 = vlaneseq
    %v4580 = vshrl.u32 %v4579, 7
    %v4581 = vsub.s32 %v4578, %v4580
    %v4582 = vrot.slane %v4574, %v4581
    %4583 = vrot.lane.b32.xlu0 %v4582, 117
    %v4584 = vpop.permute.xlu0 %4583
    %v4585 = vrot.slane %v4584, 6
    %vm4586 = vcmask 957440
    %v4587 = vsel %vm4586, %v4585, %v4584
    %vm4589 = vcmask 1042344
    %vm4590 = vcmask 306178
    %vm4591 = vmor %vm4590, %vm4589
    %4592 = vst.msk [vmem:[#allocation9 + $0x2] sm:$0xf] %vm4591, %v4587
    %v4593 = vld [vmem:[#allocation8 + $0xc] sm:$0x3]
    %v4596 = vunpack.c.l.s4 1983009808
    %v4597 = vunpack.c.0.s8 %v4596
    %v4598 = vlaneseq
    %v4599 = vshrl.u32 %v4598, 7
    %v4600 = vsub.s32 %v4597, %v4599
    %v4601 = vrot.slane %v4593, %v4600
    %4602 = vrot.lane.b32.xlu0 %v4601, 38
    %v4603 = vpop.permute.xlu0 %4602
    %vm4605 = vcmask 705840
    %4606 = vst.msk [vmem:[#allocation9 + $0x4] sm:$0x3] %vm4605, %v4603
    %v4607 = vld [vmem:[#allocation8 + $0xe] sm:$0x3]
    %v4610 = vunpack.c.l.s4 1983009808
    %v4611 = vunpack.c.0.s8 %v4610
    %v4612 = vlaneseq
    %v4613 = vshrl.u32 %v4612, 7
    %v4614 = vsub.s32 %v4611, %v4613
    %v4615 = vrot.slane %v4607, %v4614
    %4616 = vrot.lane.b32.xlu0 %v4615, 87
    %v4617 = vpop.permute.xlu0 %4616
    %v4618 = vrot.slane %v4617, 6
    %vm4619 = vcmask 711680
    %v4620 = vsel %vm4619, %v4618, %v4617
    %vm4622 = vcmask 1042104
    %vm4623 = vcmask 60418
    %vm4624 = vmor %vm4623, %vm4622
    %4625 = vst.msk [vmem:[#allocation9 + $0x4] sm:$0xf] %vm4624, %v4620
    %v4626 = vld [vmem:[#allocation8 + $0x10] sm:$0x3]
    %v4629 = vunpack.c.l.s4 1983009808
    %v4630 = vunpack.c.0.s8 %v4629
    %v4631 = vlaneseq
    %v4632 = vshrl.u32 %v4631, 7
    %v4633 = vsub.s32 %v4630, %v4632
    %v4634 = vrot.slane %v4626, %v4633
    %4635 = vrot.lane.b32.xlu0 %v4634, 8
    %v4636 = vpop.permute.xlu0 %4635
    %vm4638 = vcmask 459840
    %4639 = vst.msk [vmem:[#allocation9 + $0x6] sm:$0x3] %vm4638, %v4636
    %v4640 = vld [vmem:[#allocation8 + $0x12] sm:$0x3]
    %v4643 = vunpack.c.l.s4 1983009808
    %v4644 = vunpack.c.0.s8 %v4643
    %v4645 = vlaneseq
    %v4646 = vshrl.u32 %v4645, 7
    %v4647 = vsub.s32 %v4644, %v4646
    %v4648 = vrot.slane %v4640, %v4647
    %4649 = vrot.lane.b32.xlu0 %v4648, 57
    %v4650 = vpop.permute.xlu0 %4649
    %vm4652 = vcmask 861640
    %4653 = vst.msk [vmem:[#allocation9 + $0x6] sm:$0x3] %vm4652, %v4650
    %v4654 = vld [vmem:[#allocation8 + $0x14] sm:$0x3]
    %v4657 = vunpack.c.l.s4 1983009808
    %v4658 = vunpack.c.0.s8 %v4657
    %v4659 = vlaneseq
    %v4660 = vshrl.u32 %v4659, 7
    %v4661 = vsub.s32 %v4658, %v4660
    %v4662 = vrot.slane %v4654, %v4661
    %4663 = vrot.lane.b32.xlu0 %v4662, 106
    %v4664 = vpop.permute.xlu0 %4663
    %v4665 = vrot.slane %v4664, 6
    %vm4666 = vcmask 867328
    %v4667 = vsel %vm4666, %v4665, %v4664
    %vm4669 = vcmask 1042256
    %vm4670 = vcmask 216066
    %vm4671 = vmor %vm4670, %vm4669
    %4672 = vst.msk [vmem:[#allocation9 + $0x6] sm:$0xf] %vm4671, %v4667
    %v4673 = vld [vmem:[#allocation8 + $0x16] sm:$0x3]
    %v4676 = vunpack.c.l.s4 1983009808
    %v4677 = vunpack.c.0.s8 %v4676
    %v4678 = vlaneseq
    %v4679 = vshrl.u32 %v4678, 7
    %v4680 = vsub.s32 %v4677, %v4679
    %v4681 = vrot.slane %v4673, %v4680
    %4682 = vrot.lane.b32.xlu0 %v4681, 27
    %v4683 = vpop.permute.xlu0 %4682
    %vm4685 = vcmask 615640
    %4686 = vst.msk [vmem:[#allocation9 + $0x8] sm:$0x3] %vm4685, %v4683
    %v4687 = vld [vmem:[#allocation8 + $0x18] sm:$0x3]
    %v4690 = vunpack.c.l.s4 1983009808
    %v4691 = vunpack.c.0.s8 %v4690
    %v4692 = vlaneseq
    %v4693 = vshrl.u32 %v4692, 7
    %v4694 = vsub.s32 %v4691, %v4693
    %v4695 = vrot.slane %v4687, %v4694
    %4696 = vrot.lane.b32.xlu0 %v4695, 76
    %v4697 = vpop.permute.xlu0 %4696
    %vm4699 = vcmask 1017440
    %4700 = vst.msk [vmem:[#allocation9 + $0x8] sm:$0x3] %vm4699, %v4697
    %v4701 = vld [vmem:[#allocation8 + $0x1a] sm:$0x3]
    %v4704 = vunpack.c.l.s4 1983009808
    %v4705 = vunpack.c.0.s8 %v4704
    %v4706 = vlaneseq
    %v4707 = vshrl.u32 %v4706, 7
    %v4708 = vsub.s32 %v4705, %v4707
    %v4709 = vrot.slane %v4701, %v4708
    %4710 = vrot.lane.b32.xlu0 %v4709, 125
    %v4711 = vpop.permute.xlu0 %4710
    %v4712 = vrot.slane %v4711, 6
    %v4713 = vsel %vm226, %v4712, %v4711
    %vm4715 = vcmask 1042408
    %vm4716 = vcmask 371714
    %vm4717 = vmor %vm4716, %vm4715
    %4718 = vst.msk [vmem:[#allocation9 + $0x8] sm:$0xf] %vm4717, %v4713
    %v4719 = vld [vmem:[#allocation8 + $0x1c] sm:$0x3]
    %v4722 = vunpack.c.l.s4 1983009808
    %v4723 = vunpack.c.0.s8 %v4722
    %v4724 = vlaneseq
    %v4725 = vshrl.u32 %v4724, 7
    %v4726 = vsub.s32 %v4723, %v4725
    %v4727 = vrot.slane %v4719, %v4726
    %4728 = vrot.lane.b32.xlu0 %v4727, 46
    %v4729 = vpop.permute.xlu0 %4728
    %vm4731 = vcmask 771440
    %4732 = vst.msk [vmem:[#allocation9 + $0xa] sm:$0x3] %vm4731, %v4729
    %v4733 = vld [vmem:[#allocation8 + $0x1e] sm:$0x3]
    %v4736 = vunpack.c.l.s4 1983009808
    %v4737 = vunpack.c.0.s8 %v4736
    %v4738 = vlaneseq
    %v4739 = vshrl.u32 %v4738, 7
    %v4740 = vsub.s32 %v4737, %v4739
    %v4741 = vrot.slane %v4733, %v4740
    %4742 = vrot.lane.b32.xlu0 %v4741, 95
    %v4743 = vpop.permute.xlu0 %4742
    %v4744 = vrot.slane %v4743, 6
    %v4745 = vsel %vm991, %v4744, %v4743
    %vm4747 = vcmask 1042168
    %vm4748 = vmor %vm399, %vm4747
    %4749 = vst.msk [vmem:[#allocation9 + $0xa] sm:$0xf] %vm4748, %v4745
    %v4750 = vld [vmem:[#allocation9] sm:$0xff]
    %v4751 = vld [vmem:[#allocation9 + $0x8] sm:$0x3f]
    %v4752 = vld [vmem:[%s11] sm:$0xff]
    %v4753 = vld [vmem:[%s11 + $0x8] sm:$0xff]
    %v4754 = vld [vmem:[%s11 + $0x10] sm:$0xff]
    %v4755 = vld [vmem:[%s11 + $0x18] sm:$0xff]
    %v4756 = vld [vmem:[%s11 + $0x20] sm:$0xff]
    %v4757 = vld [vmem:[%s11 + $0x28] sm:$0xff]
    %v4758 = vld [vmem:[%s11 + $0x30] sm:$0xff]
    %v4759 = vld [vmem:[%s11 + $0x38] sm:$0xff]
    %v4760 = vld [vmem:[%s11 + $0x40] sm:$0xff]
    %v4761 = vld [vmem:[%s11 + $0x48] sm:$0xff]
    %v4762 = vld [vmem:[%s11 + $0x50] sm:$0xff]
    %v4763 = vld [vmem:[%s11 + $0x58] sm:$0xff]
    %v4764 = vld [vmem:[%s11 + $0x60] sm:$0xff]
    %v4765 = vld [vmem:[%s11 + $0x68] sm:$0xff]
    %v4766 = vld [vmem:[%s11 + $0x70] sm:$0xff]
    %v4767 = vld [vmem:[%s11 + $0x78] sm:$0xff]
    %v4768 = vld [vmem:[%s11 + $0x80] sm:$0xff]
    %v4769 = vld [vmem:[%s11 + $0x88] sm:$0xff]
    %v4770 = vld [vmem:[%s11 + $0x90] sm:$0xff]
    %v4771 = vld [vmem:[%s11 + $0x98] sm:$0xff]
    %v4772 = vld [vmem:[%s11 + $0xa0] sm:$0xff]
    %v4773 = vld [vmem:[%s11 + $0xa8] sm:$0xff]
    %v4774 = vld [vmem:[%s11 + $0xb0] sm:$0xff]
    %v4775 = vld [vmem:[%s11 + $0xb8] sm:$0xff]
    %v4776 = vld [vmem:[%s11 + $0xc0] sm:$0xff]
    %v4777 = vld [vmem:[%s11 + $0xc8] sm:$0xff]
    %v4778 = vld [vmem:[%s11 + $0xd0] sm:$0xff]
    %v4779 = vld [vmem:[%s11 + $0xd8] sm:$0xff]
    %v4780 = vld [vmem:[%s11 + $0xe0] sm:$0xff]
    %v4781 = vld [vmem:[%s11 + $0xe8] sm:$0xff]
    %v4782 = vld [vmem:[%s11 + $0xf0] sm:$0xff]
    %v4783 = vld [vmem:[%s11 + $0xf8] sm:$0xff]
    %v4784 = vld [vmem:[%s11 + $0x100] sm:$0xff]
    %v4785 = vld [vmem:[%s11 + $0x108] sm:$0xff]
    %v4786 = vld [vmem:[%s11 + $0x110] sm:$0xff]
    %v4787 = vld [vmem:[%s11 + $0x118] sm:$0xff]
    %v4788 = vld [vmem:[%s11 + $0x120] sm:$0xff]
    %v4789 = vld [vmem:[%s11 + $0x128] sm:$0xff]
    %v4790 = vld [vmem:[%s11 + $0x130] sm:$0xff]
    %v4791 = vld [vmem:[%s11 + $0x138] sm:$0xff]
    %v4792 = vld [vmem:[%s11 + $0x140] sm:$0xff]
    %v4793 = vld [vmem:[%s11 + $0x148] sm:$0xff]
    %v4794 = vld [vmem:[%s11 + $0x150] sm:$0xff]
    %v4795 = vld [vmem:[%s11 + $0x158] sm:$0xff]
    %v4796 = vld [vmem:[%s11 + $0x160] sm:$0xff]
    %v4797 = vld [vmem:[%s11 + $0x168] sm:$0xff]
    %v4798 = vld [vmem:[%s11 + $0x170] sm:$0xff]
    %v4799 = vld [vmem:[%s11 + $0x178] sm:$0xff]
    %v4800 = vld [vmem:[%s11 + $0x180] sm:$0xff]
    %v4801 = vld [vmem:[%s11 + $0x188] sm:$0xff]
    %v4802 = vld [vmem:[%s11 + $0x190] sm:$0xff]
    %v4803 = vld [vmem:[%s11 + $0x198] sm:$0xff]
    %v4804 = vld [vmem:[%s11 + $0x1a0] sm:$0xff]
    %v4805 = vld [vmem:[%s11 + $0x1a8] sm:$0xff]
    %v4806 = vld [vmem:[%s11 + $0x1b0] sm:$0xff]
    %v4807 = vld [vmem:[%s11 + $0x1b8] sm:$0xff]
    %v4808 = vld [vmem:[%s11 + $0x1c0] sm:$0xff]
    %v4809 = vld [vmem:[%s11 + $0x1c8] sm:$0xff]
    %v4810 = vld [vmem:[%s11 + $0x1d0] sm:$0xff]
    %v4811 = vld [vmem:[%s11 + $0x1d8] sm:$0xff]
    %v4812 = vld [vmem:[%s11 + $0x1e0] sm:$0xff]
    %v4813 = vld [vmem:[%s11 + $0x1e8] sm:$0xff]
    %v4814 = vld [vmem:[%s11 + $0x1f0] sm:$0xff]
    %v4815 = vld [vmem:[%s11 + $0x1f8] sm:$0xff]
    %v4816 = vld [vmem:[%s11 + $0x200] sm:$0xff]
    %v4817 = vld [vmem:[%s11 + $0x208] sm:$0xff]
    %v4818 = vld [vmem:[%s11 + $0x210] sm:$0xff]
    %v4819 = vld [vmem:[%s11 + $0x218] sm:$0xff]
    %v4820 = vld [vmem:[%s11 + $0x220] sm:$0xff]
    %v4821 = vld [vmem:[%s11 + $0x228] sm:$0xff]
    %v4822 = vld [vmem:[%s11 + $0x230] sm:$0xff]
    %v4823 = vld [vmem:[%s11 + $0x238] sm:$0xff]
    %v4824 = vld [vmem:[%s11 + $0x240] sm:$0xff]
    %v4825 = vld [vmem:[%s11 + $0x248] sm:$0xff]
    %v4826 = vld [vmem:[%s11 + $0x250] sm:$0xff]
    %v4827 = vld [vmem:[%s11 + $0x258] sm:$0xff]
    %v4828 = vld [vmem:[%s11 + $0x260] sm:$0xff]
    %v4829 = vld [vmem:[%s11 + $0x268] sm:$0xff]
    %v4830 = vld [vmem:[%s11 + $0x270] sm:$0xff]
    %v4831 = vld [vmem:[%s11 + $0x278] sm:$0xff]
    %v4832 = vld [vmem:[%s11 + $0x280] sm:$0xff]
    %v4833 = vld [vmem:[%s11 + $0x288] sm:$0xff]
    %v4834 = vld [vmem:[%s11 + $0x290] sm:$0xff]
    %v4835 = vld [vmem:[%s11 + $0x298] sm:$0xff]
    %v4836 = vld [vmem:[%s11 + $0x2a0] sm:$0xff]
    %v4837 = vld [vmem:[%s11 + $0x2a8] sm:$0xff]
    %v4838 = vld [vmem:[%s11 + $0x2b0] sm:$0xff]
    %v4839 = vld [vmem:[%s11 + $0x2b8] sm:$0xff]
    %v4840 = vld [vmem:[%s11 + $0x2c0] sm:$0xff]
    %v4841 = vld [vmem:[%s11 + $0x2c8] sm:$0xff]
    %v4842 = vld [vmem:[%s11 + $0x2d0] sm:$0xff]
    %v4843 = vld [vmem:[%s11 + $0x2d8] sm:$0xff]
    %v4844 = vld [vmem:[%s11 + $0x2e0] sm:$0xff]
    %v4845 = vld [vmem:[%s11 + $0x2e8] sm:$0xff]
    %v4846 = vld [vmem:[%s11 + $0x2f0] sm:$0xff]
    %v4847 = vld [vmem:[%s11 + $0x2f8] sm:$0xff]
    %v4848 = vld [vmem:[%s11 + $0x300] sm:$0xff]
    %v4849 = vld [vmem:[%s11 + $0x308] sm:$0xff]
    %v4850 = vld [vmem:[%s12] sm:$0x1]
    %v4852 = vlaneseq
    %v4853 = vshrl.u32 %v4852, 7
    %v4854 = vsub.s32 0, %v4853
    %v4855 = vrot.slane %v4850, %v4854
    %v4859 = vcombine.high %v4750, %v4750
    %v4861 = vunpack.c.l.s4 1983009808
    %v4862 = vunpack.c.0.s8 %v4861
    %v4863 = vlaneseq
    %v4864 = vshrl.u32 %v4863, 7
    %v4865 = vsub.s32 %v4862, %v4864
    %v4866 = vrot.slane %v4750, %v4865
    %v4868 = vunpack.c.l.s4 1983009808
    %v4869 = vunpack.c.0.s8 %v4868
    %v4870 = vlaneseq
    %v4871 = vshrl.u32 %v4870, 7
    %v4872 = vsub.s32 %v4869, %v4871
    %v4873 = vrot.slane %v4859, %v4872
    %v4874 = vcombine.high %v4866, %v4866
    %v4875 = vcombine.high %v4873, %v4873
    %v4876 = vcombine.high %v4751, %v4751
    %v4878 = vunpack.c.l.s4 1983009808
    %v4879 = vunpack.c.0.s8 %v4878
    %v4880 = vlaneseq
    %v4881 = vshrl.u32 %v4880, 7
    %v4882 = vsub.s32 %v4879, %v4881
    %v4883 = vrot.slane %v4751, %v4882
    %v4885 = vunpack.c.l.s4 1983009808
    %v4886 = vunpack.c.0.s8 %v4885
    %v4887 = vlaneseq
    %v4888 = vshrl.u32 %v4887, 7
    %v4889 = vsub.s32 %v4886, %v4888
    %v4890 = vrot.slane %v4876, %v4889
    %v4891 = vcombine.high %v4883, %v4883
    %v4898 = vsel %vm1841, %v4890, 0
    %4900 = vmatprep.subr.mxu0 0.0
    %4901 = vmatpush1.msra.mxu0 %v4752
    %4902 = vmatprep.subr.mxu0 0.0
    %4903 = vmatpush1.msra.mxu0 %v4753
    %4904 = vmatprep.subr.mxu0 0.0
    %4905 = vmatpush1.msra.mxu0 %v4754
    %4906 = vmatprep.subr.mxu0 0.0
    %4907 = vmatpush1.msra.mxu0 %v4755
    %4908 = vmatprep.subr.mxu0 0.0
    %4909 = vmatpush1.msra.mxu0 %v4756
    %4910 = vmatprep.subr.mxu0 0.0
    %4911 = vmatpush1.msra.mxu0 %v4757
    %4912 = vmatprep.subr.mxu0 0.0
    %4913 = vmatpush1.msra.mxu0 %v4758
    %4914 = vmatprep.subr.mxu0 0.0
    %4915 = vmatpush1.msra.mxu0 %v4759
    %4916 = vmatprep.subr.mxu0 0.0
    %4917 = vmatpush1.msra.mxu0 %v4760
    %4918 = vmatprep.subr.mxu0 0.0
    %4919 = vmatpush1.msra.mxu0 %v4761
    %4920 = vmatprep.subr.mxu0 0.0
    %4921 = vmatpush1.msra.mxu0 %v4762
    %4922 = vmatprep.subr.mxu0 0.0
    %4923 = vmatpush1.msra.mxu0 %v4763
    %4924 = vmatprep.subr.mxu0 0.0
    %4925 = vmatpush1.msra.mxu0 %v4764
    %4926 = vmatprep.subr.mxu0 0.0
    %4927 = vmatpush1.msra.mxu0 %v4765
    %4928 = vmatprep.subr.mxu0 0.0
    %4929 = vmatpush1.msra.mxu0 %v4766
    %4930 = vmatprep.subr.mxu0 0.0
    %4931 = vmatpush1.msra.mxu0 %v4767
    %4932 = vmatprep.subr.mxu0 0.0
    %4933 = vmatpush1.msra.mxu0 %v4768
    %4934 = vmatprep.subr.mxu0 0.0
    %4935 = vmatpush1.msra.mxu0 %v4769
    %4936 = vmatprep.subr.mxu0 0.0
    %4937 = vmatpush1.msra.mxu0 %v4770
    %4938 = vmatprep.subr.mxu0 0.0
    %4939 = vmatpush1.msra.mxu0 %v4771
    %4940 = vmatprep.subr.mxu0 0.0
    %4941 = vmatpush1.msra.mxu0 %v4772
    %4942 = vmatprep.subr.mxu0 0.0
    %4943 = vmatpush1.msra.mxu0 %v4773
    %4944 = vmatprep.subr.mxu0 0.0
    %4945 = vmatpush1.msra.mxu0 %v4774
    %4946 = vmatprep.subr.mxu0 0.0
    %4947 = vmatpush1.msra.mxu0 %v4775
    %4948 = vmatprep.subr.mxu0 0.0
    %4949 = vmatpush1.msra.mxu0 %v4776
    %4950 = vmatprep.subr.mxu0 0.0
    %4951 = vmatpush1.msra.mxu0 %v4777
    %4952 = vmatprep.subr.mxu0 0.0
    %4953 = vmatpush1.msra.mxu0 %v4778
    %4954 = vmatprep.subr.mxu0 0.0
    %4955 = vmatpush1.msra.mxu0 %v4779
    %4956 = vmatprep.subr.mxu0 0.0
    %4957 = vmatpush1.msra.mxu0 %v4780
    %4958 = vmatprep.subr.mxu0 0.0
    %4959 = vmatpush1.msra.mxu0 %v4781
    %4960 = vmatprep.subr.mxu0 0.0
    %4961 = vmatpush1.msra.mxu0 %v4782
    %4962 = vmatprep.subr.mxu0 0.0
    %4963 = vmatpush1.msra.mxu0 %v4783
    %4964 = vmatprep.mubr.f32.mxu0 %v4874
    %4965 = vmatmul.mubr.f32.gmra.mrb[0].mxu0 %v4866
    %v4966 = vpop.f32.mrb[0].mxu0
    %v4967 = vadd.f32 %v4855, %v4966
    %v4968 = vpop.f32.mrb[0].mxu0
    %4969 = vdwg.mxu0
    %4970 = vmatprep.subr.mxu0 0.0
    %4971 = vmatpush1.msra.mxu0 %v4784
    %4972 = vmatprep.subr.mxu0 0.0
    %4973 = vmatpush1.msra.mxu0 %v4785
    %4974 = vmatprep.subr.mxu0 0.0
    %4975 = vmatpush1.msra.mxu0 %v4786
    %4976 = vmatprep.subr.mxu0 0.0
    %4977 = vmatpush1.msra.mxu0 %v4787
    %4978 = vmatprep.subr.mxu0 0.0
    %4979 = vmatpush1.msra.mxu0 %v4788
    %4980 = vmatprep.subr.mxu0 0.0
    %4981 = vmatpush1.msra.mxu0 %v4789
    %4982 = vmatprep.subr.mxu0 0.0
    %4983 = vmatpush1.msra.mxu0 %v4790
    %4984 = vmatprep.subr.mxu0 0.0
    %4985 = vmatpush1.msra.mxu0 %v4791
    %4986 = vmatprep.subr.mxu0 0.0
    %4987 = vmatpush1.msra.mxu0 %v4792
    %4988 = vmatprep.subr.mxu0 0.0
    %4989 = vmatpush1.msra.mxu0 %v4793
    %4990 = vmatprep.subr.mxu0 0.0
    %4991 = vmatpush1.msra.mxu0 %v4794
    %4992 = vmatprep.subr.mxu0 0.0
    %4993 = vmatpush1.msra.mxu0 %v4795
    %4994 = vmatprep.subr.mxu0 0.0
    %4995 = vmatpush1.msra.mxu0 %v4796
    %4996 = vmatprep.subr.mxu0 0.0
    %4997 = vmatpush1.msra.mxu0 %v4797
    %4998 = vmatprep.subr.mxu0 0.0
    %4999 = vmatpush1.msra.mxu0 %v4798
    %5000 = vmatprep.subr.mxu0 0.0
    %5001 = vmatpush1.msra.mxu0 %v4799
    %5002 = vmatprep.subr.mxu0 0.0
    %5003 = vmatpush1.msra.mxu0 %v4800
    %5004 = vmatprep.subr.mxu0 0.0
    %5005 = vmatpush1.msra.mxu0 %v4801
    %5006 = vmatprep.subr.mxu0 0.0
    %5007 = vmatpush1.msra.mxu0 %v4802
    %5008 = vmatprep.subr.mxu0 0.0
    %5009 = vmatpush1.msra.mxu0 %v4803
    %5010 = vmatprep.subr.mxu0 0.0
    %5011 = vmatpush1.msra.mxu0 %v4804
    %5012 = vmatprep.subr.mxu0 0.0
    %5013 = vmatpush1.msra.mxu0 %v4805
    %5014 = vmatprep.subr.mxu0 0.0
    %5015 = vmatpush1.msra.mxu0 %v4806
    %5016 = vmatprep.subr.mxu0 0.0
    %5017 = vmatpush1.msra.mxu0 %v4807
    %5018 = vmatprep.subr.mxu0 0.0
    %5019 = vmatpush1.msra.mxu0 %v4808
    %5020 = vmatprep.subr.mxu0 0.0
    %5021 = vmatpush1.msra.mxu0 %v4809
    %5022 = vmatprep.subr.mxu0 0.0
    %5023 = vmatpush1.msra.mxu0 %v4810
    %5024 = vmatprep.subr.mxu0 0.0
    %5025 = vmatpush1.msra.mxu0 %v4811
    %5026 = vmatprep.subr.mxu0 0.0
    %5027 = vmatpush1.msra.mxu0 %v4812
    %5028 = vmatprep.subr.mxu0 0.0
    %5029 = vmatpush1.msra.mxu0 %v4813
    %5030 = vmatprep.subr.mxu0 0.0
    %5031 = vmatpush1.msra.mxu0 %v4814
    %5032 = vmatprep.subr.mxu0 0.0
    %5033 = vmatpush1.msra.mxu0 %v4815
    %5034 = vmatprep.mubr.f32.mxu0 %v4875
    %5035 = vmatmul.mubr.f32.gmra.mrb[0].mxu0 %v4873
    %v5036 = vpop.f32.mrb[0].mxu0
    %v5037 = vadd.f32 %v4967, %v5036
    %v5038 = vpop.f32.mrb[0].mxu0
    %5039 = vdwg.mxu0
    %5040 = vmatprep.subr.mxu0 0.0
    %5041 = vmatpush1.msra.mxu0 %v4816
    %5042 = vmatprep.subr.mxu0 0.0
    %5043 = vmatpush1.msra.mxu0 %v4817
    %5044 = vmatprep.subr.mxu0 0.0
    %5045 = vmatpush1.msra.mxu0 %v4818
    %5046 = vmatprep.subr.mxu0 0.0
    %5047 = vmatpush1.msra.mxu0 %v4819
    %5048 = vmatprep.subr.mxu0 0.0
    %5049 = vmatpush1.msra.mxu0 %v4820
    %5050 = vmatprep.subr.mxu0 0.0
    %5051 = vmatpush1.msra.mxu0 %v4821
    %5052 = vmatprep.subr.mxu0 0.0
    %5053 = vmatpush1.msra.mxu0 %v4822
    %5054 = vmatprep.subr.mxu0 0.0
    %5055 = vmatpush1.msra.mxu0 %v4823
    %5056 = vmatprep.subr.mxu0 0.0
    %5057 = vmatpush1.msra.mxu0 %v4824
    %5058 = vmatprep.subr.mxu0 0.0
    %5059 = vmatpush1.msra.mxu0 %v4825
    %5060 = vmatprep.subr.mxu0 0.0
    %5061 = vmatpush1.msra.mxu0 %v4826
    %5062 = vmatprep.subr.mxu0 0.0
    %5063 = vmatpush1.msra.mxu0 %v4827
    %5064 = vmatprep.subr.mxu0 0.0
    %5065 = vmatpush1.msra.mxu0 %v4828
    %5066 = vmatprep.subr.mxu0 0.0
    %5067 = vmatpush1.msra.mxu0 %v4829
    %5068 = vmatprep.subr.mxu0 0.0
    %5069 = vmatpush1.msra.mxu0 %v4830
    %5070 = vmatprep.subr.mxu0 0.0
    %5071 = vmatpush1.msra.mxu0 %v4831
    %5072 = vmatprep.subr.mxu0 0.0
    %5073 = vmatpush1.msra.mxu0 %v4832
    %5074 = vmatprep.subr.mxu0 0.0
    %5075 = vmatpush1.msra.mxu0 %v4833
    %5076 = vmatprep.subr.mxu0 0.0
    %5077 = vmatpush1.msra.mxu0 %v4834
    %5078 = vmatprep.subr.mxu0 0.0
    %5079 = vmatpush1.msra.mxu0 %v4835
    %5080 = vmatprep.subr.mxu0 0.0
    %5081 = vmatpush1.msra.mxu0 %v4836
    %5082 = vmatprep.subr.mxu0 0.0
    %5083 = vmatpush1.msra.mxu0 %v4837
    %5084 = vmatprep.subr.mxu0 0.0
    %5085 = vmatpush1.msra.mxu0 %v4838
    %5086 = vmatprep.subr.mxu0 0.0
    %5087 = vmatpush1.msra.mxu0 %v4839
    %5088 = vmatprep.subr.mxu0 0.0
    %5089 = vmatpush1.msra.mxu0 %v4840
    %5090 = vmatprep.subr.mxu0 0.0
    %5091 = vmatpush1.msra.mxu0 %v4841
    %5092 = vmatprep.subr.mxu0 0.0
    %5093 = vmatpush1.msra.mxu0 %v4842
    %5094 = vmatprep.subr.mxu0 0.0
    %5095 = vmatpush1.msra.mxu0 %v4843
    %5096 = vmatprep.subr.mxu0 0.0
    %5097 = vmatpush1.msra.mxu0 %v4844
    %5098 = vmatprep.subr.mxu0 0.0
    %5099 = vmatpush1.msra.mxu0 %v4845
    %5100 = vmatprep.subr.mxu0 0.0
    %5101 = vmatpush1.msra.mxu0 %v4846
    %5102 = vmatprep.subr.mxu0 0.0
    %5103 = vmatpush1.msra.mxu0 %v4847
    %5104 = vmatprep.mubr.f32.mxu0 %v4891
    %5105 = vmatmul.mubr.f32.gmra.mrb[0].mxu0 %v4883
    %v5106 = vpop.f32.mrb[0].mxu0
    %v5107 = vadd.f32 %v5037, %v5106
    %v5108 = vpop.f32.mrb[0].mxu0
    %5109 = vdwg.mxu0
    %5110 = vmatprep.subr.mxu0 0.0
    %5111 = vmatpush1.msra.mxu0 %v4848
    %5112 = vmatprep.subr.mxu0 0.0
    %5113 = vmatpush1.msra.mxu0 %v4849
    %5114 = vmatprep.subr.mxu0 0.0
    %5115 = vmatpush1.msra.mxu0 0.0
    %5116 = vmatprep.subr.mxu0 0.0
    %5117 = vmatpush1.msra.mxu0 0.0
    %5118 = vmatprep.subr.mxu0 0.0
    %5119 = vmatpush1.msra.mxu0 0.0
    %5120 = vmatprep.subr.mxu0 0.0
    %5121 = vmatpush1.msra.mxu0 0.0
    %5122 = vmatprep.subr.mxu0 0.0
    %5123 = vmatpush1.msra.mxu0 0.0
    %5124 = vmatprep.subr.mxu0 0.0
    %5125 = vmatpush1.msra.mxu0 0.0
    %5126 = vmatprep.subr.mxu0 0.0
    %5127 = vmatpush1.msra.mxu0 0.0
    %5128 = vmatprep.subr.mxu0 0.0
    %5129 = vmatpush1.msra.mxu0 0.0
    %5130 = vmatprep.subr.mxu0 0.0
    %5131 = vmatpush1.msra.mxu0 0.0
    %5132 = vmatprep.subr.mxu0 0.0
    %5133 = vmatpush1.msra.mxu0 0.0
    %5134 = vmatprep.subr.mxu0 0.0
    %5135 = vmatpush1.msra.mxu0 0.0
    %5136 = vmatprep.subr.mxu0 0.0
    %5137 = vmatpush1.msra.mxu0 0.0
    %5138 = vmatprep.subr.mxu0 0.0
    %5139 = vmatpush1.msra.mxu0 0.0
    %5140 = vmatprep.subr.mxu0 0.0
    %5141 = vmatpush1.msra.mxu0 0.0
    %5142 = vmatprep.subr.mxu0 0.0
    %5143 = vmatpush1.msra.mxu0 0.0
    %5144 = vmatprep.subr.mxu0 0.0
    %5145 = vmatpush1.msra.mxu0 0.0
    %5146 = vmatprep.subr.mxu0 0.0
    %5147 = vmatpush1.msra.mxu0 0.0
    %5148 = vmatprep.subr.mxu0 0.0
    %5149 = vmatpush1.msra.mxu0 0.0
    %5150 = vmatprep.subr.mxu0 0.0
    %5151 = vmatpush1.msra.mxu0 0.0
    %5152 = vmatprep.subr.mxu0 0.0
    %5153 = vmatpush1.msra.mxu0 0.0
    %5154 = vmatprep.subr.mxu0 0.0
    %5155 = vmatpush1.msra.mxu0 0.0
    %5156 = vmatprep.subr.mxu0 0.0
    %5157 = vmatpush1.msra.mxu0 0.0
    %5158 = vmatprep.subr.mxu0 0.0
    %5159 = vmatpush1.msra.mxu0 0.0
    %5160 = vmatprep.subr.mxu0 0.0
    %5161 = vmatpush1.msra.mxu0 0.0
    %5162 = vmatprep.subr.mxu0 0.0
    %5163 = vmatpush1.msra.mxu0 0.0
    %5164 = vmatprep.subr.mxu0 0.0
    %5165 = vmatpush1.msra.mxu0 0.0
    %5166 = vmatprep.subr.mxu0 0.0
    %5167 = vmatpush1.msra.mxu0 0.0
    %5168 = vmatprep.subr.mxu0 0.0
    %5169 = vmatpush1.msra.mxu0 0.0
    %5170 = vmatprep.subr.mxu0 0.0
    %5171 = vmatpush1.msra.mxu0 0.0
    %5172 = vmatprep.subr.mxu0 0.0
    %5173 = vmatpush1.msra.mxu0 0.0
    %5174 = vmatprep.mubr.f32.mxu0 0.0
    %5175 = vmatmul.mubr.f32.gmra.mrb[0].mxu0 %v4898
    %v5176 = vpop.f32.mrb[0].mxu0
    %v5177 = vadd.f32 %v5107, %v5176
    %v5178 = vpop.f32.mrb[0].mxu0
    %5179 = vdwg.mxu0
    %v5180 = vmax.f32 %v5177, 0.0
    %v5181 = vld [vmem:[%s13] sm:$0xff]
    %v5182 = vld [vmem:[%s13 + $0x8] sm:$0xff]
    %v5183 = vld [vmem:[%s13 + $0x10] sm:$0xff]
    %v5184 = vld [vmem:[%s13 + $0x18] sm:$0xff]
    %v5185 = vld [vmem:[%s13 + $0x20] sm:$0xff]
    %v5186 = vld [vmem:[%s13 + $0x28] sm:$0xff]
    %v5187 = vld [vmem:[%s13 + $0x30] sm:$0xff]
    %v5188 = vld [vmem:[%s13 + $0x38] sm:$0xff]
    %v5189 = vld [vmem:[%s14] sm:$0x1]
    %v5191 = vlaneseq
    %v5192 = vshrl.u32 %v5191, 7
    %v5193 = vsub.s32 0, %v5192
    %v5194 = vrot.slane %v5189, %v5193
    %vm5196 = vcmask 523264
    %v5198 = vsel %vm5196, %v5180, 0
    %5200 = vmatprep.subr.mxu0 0.0
    %5201 = vmatpush1.msra.mxu0 %v5181
    %5202 = vmatprep.subr.mxu0 0.0
    %5203 = vmatpush1.msra.mxu0 %v5182
    %5204 = vmatprep.subr.mxu0 0.0
    %5205 = vmatpush1.msra.mxu0 %v5183
    %5206 = vmatprep.subr.mxu0 0.0
    %5207 = vmatpush1.msra.mxu0 %v5184
    %5208 = vmatprep.subr.mxu0 0.0
    %5209 = vmatpush1.msra.mxu0 %v5185
    %5210 = vmatprep.subr.mxu0 0.0
    %5211 = vmatpush1.msra.mxu0 %v5186
    %5212 = vmatprep.subr.mxu0 0.0
    %5213 = vmatpush1.msra.mxu0 %v5187
    %5214 = vmatprep.subr.mxu0 0.0
    %5215 = vmatpush1.msra.mxu0 %v5188
    %5216 = vmatprep.subr.mxu0 0.0
    %5217 = vmatpush1.msra.mxu0 0.0
    %5218 = vmatprep.subr.mxu0 0.0
    %5219 = vmatpush1.msra.mxu0 0.0
    %5220 = vmatprep.subr.mxu0 0.0
    %5221 = vmatpush1.msra.mxu0 0.0
    %5222 = vmatprep.subr.mxu0 0.0
    %5223 = vmatpush1.msra.mxu0 0.0
    %5224 = vmatprep.subr.mxu0 0.0
    %5225 = vmatpush1.msra.mxu0 0.0
    %5226 = vmatprep.subr.mxu0 0.0
    %5227 = vmatpush1.msra.mxu0 0.0
    %5228 = vmatprep.subr.mxu0 0.0
    %5229 = vmatpush1.msra.mxu0 0.0
    %5230 = vmatprep.subr.mxu0 0.0
    %5231 = vmatpush1.msra.mxu0 0.0
    %5232 = vmatprep.subr.mxu0 0.0
    %5233 = vmatpush1.msra.mxu0 0.0
    %5234 = vmatprep.subr.mxu0 0.0
    %5235 = vmatpush1.msra.mxu0 0.0
    %5236 = vmatprep.subr.mxu0 0.0
    %5237 = vmatpush1.msra.mxu0 0.0
    %5238 = vmatprep.subr.mxu0 0.0
    %5239 = vmatpush1.msra.mxu0 0.0
    %5240 = vmatprep.subr.mxu0 0.0
    %5241 = vmatpush1.msra.mxu0 0.0
    %5242 = vmatprep.subr.mxu0 0.0
    %5243 = vmatpush1.msra.mxu0 0.0
    %5244 = vmatprep.subr.mxu0 0.0
    %5245 = vmatpush1.msra.mxu0 0.0
    %5246 = vmatprep.subr.mxu0 0.0
    %5247 = vmatpush1.msra.mxu0 0.0
    %5248 = vmatprep.subr.mxu0 0.0
    %5249 = vmatpush1.msra.mxu0 0.0
    %5250 = vmatprep.subr.mxu0 0.0
    %5251 = vmatpush1.msra.mxu0 0.0
    %5252 = vmatprep.subr.mxu0 0.0
    %5253 = vmatpush1.msra.mxu0 0.0
    %5254 = vmatprep.subr.mxu0 0.0
    %5255 = vmatpush1.msra.mxu0 0.0
    %5256 = vmatprep.subr.mxu0 0.0
    %5257 = vmatpush1.msra.mxu0 0.0
    %5258 = vmatprep.subr.mxu0 0.0
    %5259 = vmatpush1.msra.mxu0 0.0
    %5260 = vmatprep.subr.mxu0 0.0
    %5261 = vmatpush1.msra.mxu0 0.0
    %5262 = vmatprep.subr.mxu0 0.0
    %5263 = vmatpush1.msra.mxu0 0.0
    %5264 = vmatprep.mubr.f32.mxu0 0.0
    %5265 = vmatmul.mubr.f32.gmra.mrb[0].mxu0 %v5198
    %v5266 = vpop.f32.mrb[0].mxu0
    %v5267 = vadd.f32 %v5194, %v5266
    %v5268 = vpop.f32.mrb[0].mxu0
    %5269 = vdwg.mxu0
    %vm5270 = vcmask 74752
    %5271 = vst.msk [vmem:[#allocation10] sm:$0x3] %vm5270, %v5267
    // Predicated region
    $region78: #{_forward.1} parent=1 // pred_check
      _
    $region79: #{_forward.1} parent=1 // pred_check_branch
      %5273 = sbr.rel (0) target = $region81
    $region80: #{_forward.1} parent=1 // pred_region
      %s5275 = ssub.s32 32, 32
      %5276 = vsyncadd [#allocation11], %s5275
      %s5278 = sshll.u32 [#allocation10], 4
      %s5279 = int_to_ptr.vmem [resolvable:$true] %s5278
      %5281 = dma.vmem_to_hbm [thread:$0]  %s5279, 32, %s19, [#allocation11]
    $region81: #{_forward.1} parent=1 // pred_fallthru
      _
    // Predicated region
    $region82: #{_forward.1} parent=1 // pred_check
      _
    $region83: #{_forward.1} parent=1 // pred_check_branch
      %5283 = sbr.rel (0) target = $region85
    $region84: #{_forward.1} parent=1 // pred_region
      %5284 = dma.done [#allocation11], 32
    $region85: #{_forward.1} parent=1 // pred_fallthru
      _
    %5285 = vsyncpa [#allocation11], 1

</llo_original>
